<compile_context>
chip_gen: v6e
topology: v6e:2x2x1
jax: 0.10.0
libtpu: 0.0.40
codegen_flags: <defaults>
</compile_context>

<pallas_src>
import functools

import jax
import jax.numpy as jnp
from jax import lax
from jax.experimental import pallas as pl
from jax.experimental.pallas import tpu as pltpu


def _round_up(x, m):
    return ((x + m - 1) // m) * m


def _basis_transform_kernel(w_ref, x_ref, o_ref, *, C, Cp, Kp):
    f32 = jnp.float32
    Wp = w_ref[...].astype(f32)                      # (Cp, Cp), zero-padded beyond C

    # ---- Build the folded operator WW = W ⊗ W (Kp, Kp) on the fly ------------
    #   WW[k*C + l, i*C + j] = W[k, i] * W[l, j]
    #   A [r, c] = W[r // C, c // C]   (block expansion)
    #   Bm[r, c] = W[r %  C, c %  C]   (periodic tiling)
    # Masks come from 2-D iota + comparisons (div/mod unrolled over static C);
    # the selections are exact 0/1 matmuls, so WW is exact in f32.
    one, zero = jnp.float32(1.0), jnp.float32(0.0)

    rr = lax.broadcasted_iota(jnp.int32, (Kp, Cp), 0)
    kk = lax.broadcasted_iota(jnp.int32, (Kp, Cp), 1)
    kC = kk * C
    l_div = jnp.where(jnp.logical_and(rr >= kC, rr < kC + C), one, zero)   # [r//C == k]
    l_mod = jnp.where(
        functools.reduce(jnp.logical_or, [rr == kk + a * C for a in range(C)]),
        one, zero)                                                          # [r % C == k]

    ii = lax.broadcasted_iota(jnp.int32, (Cp, Kp), 0)
    cc = lax.broadcasted_iota(jnp.int32, (Cp, Kp), 1)
    iC = ii * C
    r_div = jnp.where(jnp.logical_and(cc >= iC, cc < iC + C), one, zero)   # [c//C == i]
    r_mod = jnp.where(
        functools.reduce(jnp.logical_or, [cc == ii + a * C for a in range(C)]),
        one, zero)                                                          # [c % C == i]

    A = jnp.dot(jnp.dot(l_div, Wp, preferred_element_type=f32), r_div,
                preferred_element_type=f32)          # A[r, c]  = W[r//C, c//C]
    Bm = jnp.dot(jnp.dot(l_mod, Wp, preferred_element_type=f32), r_mod,
                 preferred_element_type=f32)         # Bm[r, c] = W[r%C,  c%C]
    ww = (A * Bm).astype(x_ref.dtype)                # (Kp, Kp), zero in padding

    # ---- Main lane-dense GEMM: one (tb, Kp) @ (Kp, Kp) per grid step ----------
    o_ref[...] = jnp.dot(x_ref[...], ww,
                         preferred_element_type=f32).astype(o_ref.dtype)


def basis_transformation(W, X, *, batch_tile=None, compute_dtype=None):
    """Y[b] = W^T @ X[b] @ W for a batch of square matrices (exact, no symmetry
    assumption on X).  `compute_dtype=jnp.bfloat16` enables the bf16 MXU path
    (recommended on v5e); accumulation stays f32."""
    B, C, C2 = X.shape
    if C != C2 or W.shape != (C, C):
        raise ValueError("expected X (B, C, C) and W (C, C)")
    K = C * C
    Kp = max(128, _round_up(K, 128))     # lane-dense padded width
    Cp = 128                             # padded mask/contraction dim
    out_dtype = X.dtype

    # Tiny-batch fast path (MXU underfill + launch dominate) and large-C regime
    # guard (folded operator grows as C^4): let plain XLA handle those.
    if B * K < 4096 or Kp > 512:
        return jnp.einsum("ji,bjk,kl->bil", W, X, W).astype(out_dtype)

    comp_dtype = jnp.dtype(compute_dtype) if compute_dtype is not None else jnp.dtype(X.dtype)
    sub = 16 if comp_dtype.itemsize < 4 else 8          # sublane multiple

    X_flat = X.reshape(B, K).astype(comp_dtype)
    if Kp != K:
        X_flat = jnp.pad(X_flat, ((0, 0), (0, Kp - K)))
    # W zero-padded to (Cp, Cp); kept f32 so the in-kernel operator build is exact.
    Wp = jnp.zeros((Cp, Cp), jnp.float32).at[:C, :C].set(W.astype(jnp.float32))

    # Batch tile: VMEM-budgeted (double-buffered in+out blocks ~<= 8 MiB so it
    # fits every generation's scoped default), capped at 2048, sublane-aligned.
    row_bytes = 2 * Kp * (comp_dtype.itemsize + jnp.dtype(out_dtype).itemsize)
    cap = max(sub, min(2048, ((8 * 1024 * 1024) // row_bytes) // sub * sub))

    if batch_tile is not None:
        tb = int(batch_tile)
        tb = B if tb >= B else max(sub, (tb // sub) * sub)   # keep blocks aligned
    elif B <= sub:
        tb = B                                               # single full-dim block
    else:
        # >=2 grid steps so the 'parallel' batch axis can shard across v7x's 2 TCs.
        tb = min(cap, _round_up(pl.cdiv(B, 2), sub))
    grid = (pl.cdiv(B, tb),)

    cost = pl.CostEstimate(
        flops=int(2 * B * Kp * Kp + grid[0] * 4 * Kp * Cp * (Cp + Kp)),
        transcendentals=0,
        bytes_accessed=int(B * Kp * (comp_dtype.itemsize + jnp.dtype(out_dtype).itemsize)
                           + Cp * Cp * 4),
    )

    kernel = functools.partial(_basis_transform_kernel, C=C, Cp=Cp, Kp=Kp)
    y_flat = pl.pallas_call(
        kernel,
        out_shape=jax.ShapeDtypeStruct((B, Kp), out_dtype),
        grid_spec=pltpu.PrefetchScalarGridSpec(
            num_scalar_prefetch=0,
            grid=grid,
            in_specs=[
                pl.BlockSpec((Cp, Cp), lambda b: (0, 0)),   # padded W, VMEM-resident
                pl.BlockSpec((tb, Kp), lambda b: (b, 0)),   # lane-dense X tile
            ],
            out_specs=pl.BlockSpec((tb, Kp), lambda b: (b, 0)),
        ),
        compiler_params=pltpu.CompilerParams(
            dimension_semantics=("parallel",),
        ),
        cost_estimate=cost,
    )(Wp, X_flat)

    y = y_flat[:, :K] if Kp != K else y_flat
    return y.reshape(B, C, C)


def make_orthogonal(key, n):
    """Deterministic orthogonal matrix (stand-in for geotorch.orthogonal init)."""
    a = jax.random.normal(key, (n, n), dtype=jnp.float32)
    q, r = jnp.linalg.qr(a)
    q = q * jnp.sign(jnp.diag(r))[None, :]
    return q


if __name__ == "__main__":
    n_channels = 16
    batch = 64          # small, but large enough to exercise the Pallas path (2 grid steps)

    key = jax.random.PRNGKey(0)
    k_w, k_x = jax.random.split(key)

    W = make_orthogonal(k_w, n_channels)                       # orthogonal parameter (C, C)
    A = jax.random.normal(k_x, (batch, n_channels, n_channels), dtype=jnp.float32)
    X = jnp.einsum("bij,bkj->bik", A, A) / n_channels          # SPD batch (B, C, C)

    Y = basis_transformation(W, X)
    jax.block_until_ready(Y)

    Y_ref = jnp.einsum("ji,bjk,kl->bil", W, X, W)              # direct W^T X W reference
    assert Y.shape == (batch, n_channels, n_channels)
    assert jnp.allclose(Y, Y_ref, atol=1e-3, rtol=1e-3), "mismatch vs reference"

    print("KERNEL_OK")
</pallas_src>

<mosaic_0001>
module attributes {stable_mosaic.version = 11 : i64} {
  func.func @_basis_transform_kernel(%arg0: i32, %arg1: memref<128x128xf32, #tpu.memory_space<vmem>>, %arg2: memref<32x256xf32, #tpu.memory_space<vmem>>, %arg3: memref<32x256xf32, #tpu.memory_space<vmem>>) attributes {dimension_semantics = [#tpu.dimension_semantics<parallel>], iteration_bounds = array<i64: 2>, scalar_prefetch = 0 : i64, scratch_operands = 0 : i64, tpu.core_type = #tpu.core_type<tc>, window_params = [{pipeline_mode = #tpu.pipeline_mode<synchronous>, transform_indices = @transform_0, window_bounds = array<i64: 128, 128>}, {transform_indices = @transform_1, window_bounds = array<i64: 32, 256>}, {transform_indices = @transform_2, window_bounds = array<i64: 32, 256>}]} {
    %c0 = arith.constant 0 : index
    %c0_0 = arith.constant 0 : index
    %0 = vector.load %arg1[%c0, %c0_0] : memref<128x128xf32, #tpu.memory_space<vmem>>, vector<128x128xf32>
    %1 = tpu.iota {dimensions = array<i32: 0>} : vector<256x128xi32>
    %2 = tpu.iota {dimensions = array<i32: 1>} : vector<256x128xi32>
    %c16_i32 = arith.constant 16 : i32
    %3 = vector.broadcast %c16_i32 : i32 to vector<256x128xi32>
    %4 = arith.muli %2, %3 : vector<256x128xi32>
    %5 = arith.cmpi sge, %1, %4 : vector<256x128xi32>
    %c16_i32_1 = arith.constant 16 : i32
    %6 = vector.broadcast %c16_i32_1 : i32 to vector<256x128xi32>
    %7 = arith.addi %4, %6 : vector<256x128xi32>
    %8 = arith.cmpi slt, %1, %7 : vector<256x128xi32>
    %9 = arith.andi %5, %8 : vector<256x128xi1>
    %cst = arith.constant 1.000000e+00 : f32
    %cst_2 = arith.constant 0.000000e+00 : f32
    %10 = vector.broadcast %cst : f32 to vector<256x128xf32>
    %11 = vector.broadcast %cst_2 : f32 to vector<256x128xf32>
    %12 = arith.select %9, %10, %11 : vector<256x128xi1>, vector<256x128xf32>
    %c0_i32 = arith.constant 0 : i32
    %13 = vector.broadcast %c0_i32 : i32 to vector<256x128xi32>
    %14 = arith.addi %2, %13 : vector<256x128xi32>
    %15 = arith.cmpi eq, %1, %14 : vector<256x128xi32>
    %c16_i32_3 = arith.constant 16 : i32
    %16 = vector.broadcast %c16_i32_3 : i32 to vector<256x128xi32>
    %17 = arith.addi %2, %16 : vector<256x128xi32>
    %18 = arith.cmpi eq, %1, %17 : vector<256x128xi32>
    %c32_i32 = arith.constant 32 : i32
    %19 = vector.broadcast %c32_i32 : i32 to vector<256x128xi32>
    %20 = arith.addi %2, %19 : vector<256x128xi32>
    %21 = arith.cmpi eq, %1, %20 : vector<256x128xi32>
    %c48_i32 = arith.constant 48 : i32
    %22 = vector.broadcast %c48_i32 : i32 to vector<256x128xi32>
    %23 = arith.addi %2, %22 : vector<256x128xi32>
    %24 = arith.cmpi eq, %1, %23 : vector<256x128xi32>
    %c64_i32 = arith.constant 64 : i32
    %25 = vector.broadcast %c64_i32 : i32 to vector<256x128xi32>
    %26 = arith.addi %2, %25 : vector<256x128xi32>
    %27 = arith.cmpi eq, %1, %26 : vector<256x128xi32>
    %c80_i32 = arith.constant 80 : i32
    %28 = vector.broadcast %c80_i32 : i32 to vector<256x128xi32>
    %29 = arith.addi %2, %28 : vector<256x128xi32>
    %30 = arith.cmpi eq, %1, %29 : vector<256x128xi32>
    %c96_i32 = arith.constant 96 : i32
    %31 = vector.broadcast %c96_i32 : i32 to vector<256x128xi32>
    %32 = arith.addi %2, %31 : vector<256x128xi32>
    %33 = arith.cmpi eq, %1, %32 : vector<256x128xi32>
    %c112_i32 = arith.constant 112 : i32
    %34 = vector.broadcast %c112_i32 : i32 to vector<256x128xi32>
    %35 = arith.addi %2, %34 : vector<256x128xi32>
    %36 = arith.cmpi eq, %1, %35 : vector<256x128xi32>
    %c128_i32 = arith.constant 128 : i32
    %37 = vector.broadcast %c128_i32 : i32 to vector<256x128xi32>
    %38 = arith.addi %2, %37 : vector<256x128xi32>
    %39 = arith.cmpi eq, %1, %38 : vector<256x128xi32>
    %c144_i32 = arith.constant 144 : i32
    %40 = vector.broadcast %c144_i32 : i32 to vector<256x128xi32>
    %41 = arith.addi %2, %40 : vector<256x128xi32>
    %42 = arith.cmpi eq, %1, %41 : vector<256x128xi32>
    %c160_i32 = arith.constant 160 : i32
    %43 = vector.broadcast %c160_i32 : i32 to vector<256x128xi32>
    %44 = arith.addi %2, %43 : vector<256x128xi32>
    %45 = arith.cmpi eq, %1, %44 : vector<256x128xi32>
    %c176_i32 = arith.constant 176 : i32
    %46 = vector.broadcast %c176_i32 : i32 to vector<256x128xi32>
    %47 = arith.addi %2, %46 : vector<256x128xi32>
    %48 = arith.cmpi eq, %1, %47 : vector<256x128xi32>
    %c192_i32 = arith.constant 192 : i32
    %49 = vector.broadcast %c192_i32 : i32 to vector<256x128xi32>
    %50 = arith.addi %2, %49 : vector<256x128xi32>
    %51 = arith.cmpi eq, %1, %50 : vector<256x128xi32>
    %c208_i32 = arith.constant 208 : i32
    %52 = vector.broadcast %c208_i32 : i32 to vector<256x128xi32>
    %53 = arith.addi %2, %52 : vector<256x128xi32>
    %54 = arith.cmpi eq, %1, %53 : vector<256x128xi32>
    %c224_i32 = arith.constant 224 : i32
    %55 = vector.broadcast %c224_i32 : i32 to vector<256x128xi32>
    %56 = arith.addi %2, %55 : vector<256x128xi32>
    %57 = arith.cmpi eq, %1, %56 : vector<256x128xi32>
    %c240_i32 = arith.constant 240 : i32
    %58 = vector.broadcast %c240_i32 : i32 to vector<256x128xi32>
    %59 = arith.addi %2, %58 : vector<256x128xi32>
    %60 = arith.cmpi eq, %1, %59 : vector<256x128xi32>
    %61 = arith.ori %15, %18 : vector<256x128xi1>
    %62 = arith.ori %61, %21 : vector<256x128xi1>
    %63 = arith.ori %62, %24 : vector<256x128xi1>
    %64 = arith.ori %63, %27 : vector<256x128xi1>
    %65 = arith.ori %64, %30 : vector<256x128xi1>
    %66 = arith.ori %65, %33 : vector<256x128xi1>
    %67 = arith.ori %66, %36 : vector<256x128xi1>
    %68 = arith.ori %67, %39 : vector<256x128xi1>
    %69 = arith.ori %68, %42 : vector<256x128xi1>
    %70 = arith.ori %69, %45 : vector<256x128xi1>
    %71 = arith.ori %70, %48 : vector<256x128xi1>
    %72 = arith.ori %71, %51 : vector<256x128xi1>
    %73 = arith.ori %72, %54 : vector<256x128xi1>
    %74 = arith.ori %73, %57 : vector<256x128xi1>
    %75 = arith.ori %74, %60 : vector<256x128xi1>
    %cst_4 = arith.constant 1.000000e+00 : f32
    %cst_5 = arith.constant 0.000000e+00 : f32
    %76 = vector.broadcast %cst_4 : f32 to vector<256x128xf32>
    %77 = vector.broadcast %cst_5 : f32 to vector<256x128xf32>
    %78 = arith.select %75, %76, %77 : vector<256x128xi1>, vector<256x128xf32>
    %79 = tpu.iota {dimensions = array<i32: 0>} : vector<128x256xi32>
    %80 = tpu.iota {dimensions = array<i32: 1>} : vector<128x256xi32>
    %c16_i32_6 = arith.constant 16 : i32
    %81 = vector.broadcast %c16_i32_6 : i32 to vector<128x256xi32>
    %82 = arith.muli %79, %81 : vector<128x256xi32>
    %83 = arith.cmpi sge, %80, %82 : vector<128x256xi32>
    %c16_i32_7 = arith.constant 16 : i32
    %84 = vector.broadcast %c16_i32_7 : i32 to vector<128x256xi32>
    %85 = arith.addi %82, %84 : vector<128x256xi32>
    %86 = arith.cmpi slt, %80, %85 : vector<128x256xi32>
    %87 = arith.andi %83, %86 : vector<128x256xi1>
    %cst_8 = arith.constant 1.000000e+00 : f32
    %cst_9 = arith.constant 0.000000e+00 : f32
    %88 = vector.broadcast %cst_8 : f32 to vector<128x256xf32>
    %89 = vector.broadcast %cst_9 : f32 to vector<128x256xf32>
    %90 = arith.select %87, %88, %89 : vector<128x256xi1>, vector<128x256xf32>
    %c0_i32_10 = arith.constant 0 : i32
    %91 = vector.broadcast %c0_i32_10 : i32 to vector<128x256xi32>
    %92 = arith.addi %79, %91 : vector<128x256xi32>
    %93 = arith.cmpi eq, %80, %92 : vector<128x256xi32>
    %c16_i32_11 = arith.constant 16 : i32
    %94 = vector.broadcast %c16_i32_11 : i32 to vector<128x256xi32>
    %95 = arith.addi %79, %94 : vector<128x256xi32>
    %96 = arith.cmpi eq, %80, %95 : vector<128x256xi32>
    %c32_i32_12 = arith.constant 32 : i32
    %97 = vector.broadcast %c32_i32_12 : i32 to vector<128x256xi32>
    %98 = arith.addi %79, %97 : vector<128x256xi32>
    %99 = arith.cmpi eq, %80, %98 : vector<128x256xi32>
    %c48_i32_13 = arith.constant 48 : i32
    %100 = vector.broadcast %c48_i32_13 : i32 to vector<128x256xi32>
    %101 = arith.addi %79, %100 : vector<128x256xi32>
    %102 = arith.cmpi eq, %80, %101 : vector<128x256xi32>
    %c64_i32_14 = arith.constant 64 : i32
    %103 = vector.broadcast %c64_i32_14 : i32 to vector<128x256xi32>
    %104 = arith.addi %79, %103 : vector<128x256xi32>
    %105 = arith.cmpi eq, %80, %104 : vector<128x256xi32>
    %c80_i32_15 = arith.constant 80 : i32
    %106 = vector.broadcast %c80_i32_15 : i32 to vector<128x256xi32>
    %107 = arith.addi %79, %106 : vector<128x256xi32>
    %108 = arith.cmpi eq, %80, %107 : vector<128x256xi32>
    %c96_i32_16 = arith.constant 96 : i32
    %109 = vector.broadcast %c96_i32_16 : i32 to vector<128x256xi32>
    %110 = arith.addi %79, %109 : vector<128x256xi32>
    %111 = arith.cmpi eq, %80, %110 : vector<128x256xi32>
    %c112_i32_17 = arith.constant 112 : i32
    %112 = vector.broadcast %c112_i32_17 : i32 to vector<128x256xi32>
    %113 = arith.addi %79, %112 : vector<128x256xi32>
    %114 = arith.cmpi eq, %80, %113 : vector<128x256xi32>
    %c128_i32_18 = arith.constant 128 : i32
    %115 = vector.broadcast %c128_i32_18 : i32 to vector<128x256xi32>
    %116 = arith.addi %79, %115 : vector<128x256xi32>
    %117 = arith.cmpi eq, %80, %116 : vector<128x256xi32>
    %c144_i32_19 = arith.constant 144 : i32
    %118 = vector.broadcast %c144_i32_19 : i32 to vector<128x256xi32>
    %119 = arith.addi %79, %118 : vector<128x256xi32>
    %120 = arith.cmpi eq, %80, %119 : vector<128x256xi32>
    %c160_i32_20 = arith.constant 160 : i32
    %121 = vector.broadcast %c160_i32_20 : i32 to vector<128x256xi32>
    %122 = arith.addi %79, %121 : vector<128x256xi32>
    %123 = arith.cmpi eq, %80, %122 : vector<128x256xi32>
    %c176_i32_21 = arith.constant 176 : i32
    %124 = vector.broadcast %c176_i32_21 : i32 to vector<128x256xi32>
    %125 = arith.addi %79, %124 : vector<128x256xi32>
    %126 = arith.cmpi eq, %80, %125 : vector<128x256xi32>
    %c192_i32_22 = arith.constant 192 : i32
    %127 = vector.broadcast %c192_i32_22 : i32 to vector<128x256xi32>
    %128 = arith.addi %79, %127 : vector<128x256xi32>
    %129 = arith.cmpi eq, %80, %128 : vector<128x256xi32>
    %c208_i32_23 = arith.constant 208 : i32
    %130 = vector.broadcast %c208_i32_23 : i32 to vector<128x256xi32>
    %131 = arith.addi %79, %130 : vector<128x256xi32>
    %132 = arith.cmpi eq, %80, %131 : vector<128x256xi32>
    %c224_i32_24 = arith.constant 224 : i32
    %133 = vector.broadcast %c224_i32_24 : i32 to vector<128x256xi32>
    %134 = arith.addi %79, %133 : vector<128x256xi32>
    %135 = arith.cmpi eq, %80, %134 : vector<128x256xi32>
    %c240_i32_25 = arith.constant 240 : i32
    %136 = vector.broadcast %c240_i32_25 : i32 to vector<128x256xi32>
    %137 = arith.addi %79, %136 : vector<128x256xi32>
    %138 = arith.cmpi eq, %80, %137 : vector<128x256xi32>
    %139 = arith.ori %93, %96 : vector<128x256xi1>
    %140 = arith.ori %139, %99 : vector<128x256xi1>
    %141 = arith.ori %140, %102 : vector<128x256xi1>
    %142 = arith.ori %141, %105 : vector<128x256xi1>
    %143 = arith.ori %142, %108 : vector<128x256xi1>
    %144 = arith.ori %143, %111 : vector<128x256xi1>
    %145 = arith.ori %144, %114 : vector<128x256xi1>
    %146 = arith.ori %145, %117 : vector<128x256xi1>
    %147 = arith.ori %146, %120 : vector<128x256xi1>
    %148 = arith.ori %147, %123 : vector<128x256xi1>
    %149 = arith.ori %148, %126 : vector<128x256xi1>
    %150 = arith.ori %149, %129 : vector<128x256xi1>
    %151 = arith.ori %150, %132 : vector<128x256xi1>
    %152 = arith.ori %151, %135 : vector<128x256xi1>
    %153 = arith.ori %152, %138 : vector<128x256xi1>
    %cst_26 = arith.constant 1.000000e+00 : f32
    %cst_27 = arith.constant 0.000000e+00 : f32
    %154 = vector.broadcast %cst_26 : f32 to vector<128x256xf32>
    %155 = vector.broadcast %cst_27 : f32 to vector<128x256xf32>
    %156 = arith.select %153, %154, %155 : vector<128x256xi1>, vector<128x256xf32>
    %cst_28 = arith.constant dense<0.000000e+00> : vector<256x128xf32>
    %157 = tpu.matmul %12, %0, %cst_28 {dimension_numbers = #tpu.dot_dimension_numbers<[1], [0], [0], [1], [0, 0, 1, 1], [], []>} : vector<256x128xf32>, vector<128x128xf32>, vector<256x128xf32> -> vector<256x128xf32>
    %cst_29 = arith.constant dense<0.000000e+00> : vector<256x256xf32>
    %158 = tpu.matmul %157, %90, %cst_29 {dimension_numbers = #tpu.dot_dimension_numbers<[1], [0], [0], [1], [0, 0, 1, 1], [], []>} : vector<256x128xf32>, vector<128x256xf32>, vector<256x256xf32> -> vector<256x256xf32>
    %cst_30 = arith.constant dense<0.000000e+00> : vector<256x128xf32>
    %159 = tpu.matmul %78, %0, %cst_30 {dimension_numbers = #tpu.dot_dimension_numbers<[1], [0], [0], [1], [0, 0, 1, 1], [], []>} : vector<256x128xf32>, vector<128x128xf32>, vector<256x128xf32> -> vector<256x128xf32>
    %cst_31 = arith.constant dense<0.000000e+00> : vector<256x256xf32>
    %160 = tpu.matmul %159, %156, %cst_31 {dimension_numbers = #tpu.dot_dimension_numbers<[1], [0], [0], [1], [0, 0, 1, 1], [], []>} : vector<256x128xf32>, vector<128x256xf32>, vector<256x256xf32> -> vector<256x256xf32>
    %161 = arith.mulf %158, %160 : vector<256x256xf32>
    %c0_32 = arith.constant 0 : index
    %c0_33 = arith.constant 0 : index
    %162 = vector.load %arg2[%c0_32, %c0_33] : memref<32x256xf32, #tpu.memory_space<vmem>>, vector<32x256xf32>
    %cst_34 = arith.constant dense<0.000000e+00> : vector<32x256xf32>
    %163 = tpu.matmul %162, %161, %cst_34 {dimension_numbers = #tpu.dot_dimension_numbers<[1], [0], [0], [1], [0, 0, 1, 1], [], []>} : vector<32x256xf32>, vector<256x256xf32>, vector<32x256xf32> -> vector<32x256xf32>
    %c0_35 = arith.constant 0 : index
    %c0_36 = arith.constant 0 : index
    %164 = vector.load %arg3[%c0_35, %c0_36] : memref<32x256xf32, #tpu.memory_space<vmem>>, vector<32x256xf32>
    tpu.vector_store %arg3[%c0_35, %c0_36], %163 {strides = array<i32>} : memref<32x256xf32, #tpu.memory_space<vmem>>, vector<32x256xf32>,
    return
  }
  func.func @transform_0(%arg0: i32) -> (i32, i32) {
    %c0_i32 = arith.constant 0 : i32
    %c0_i32_0 = arith.constant 0 : i32
    %c0_i32_1 = arith.constant 0 : i32
    return %c0_i32, %c0_i32_0 : i32, i32
  }
  func.func @transform_1(%arg0: i32) -> (i32, i32) {
    %c0_i32 = arith.constant 0 : i32
    %c0_i32_0 = arith.constant 0 : i32
    return %arg0, %c0_i32 : i32, i32
  }
  func.func @transform_2(%arg0: i32) -> (i32, i32) {
    %c0_i32 = arith.constant 0 : i32
    %c0_i32_0 = arith.constant 0 : i32
    return %arg0, %c0_i32 : i32, i32
  }
}

</mosaic_0001>

<llo_original>
// kernel: tpu_custom_call.1
$region0: #{tpu_custom_call.1}
  #allocation0 [shape = 'u32[]', space=smem, size = 0x4, offset = 0x4, fixed_abs, tag = 'smem constant byte address 0x4 - core index']
  #allocation1 [shape = 'u32[144,128]{1,0:T(1,128)}', space=vmem, size = 0x12000, scoped, tag = 'internal scratch']
  %s0 = inlined_call_operand.hbm [shape: f32[128,128], index: 0, kind: input, shape index: {}]
  %s1 = inlined_call_operand.hbm [shape: f32[64,256], index: 1, kind: input, shape index: {}]
  %s2 = inlined_call_operand.hbm [shape: f32[64,256], index: 2, kind: output, shape index: {}]
  %s3 = sld [smem:[#allocation0]]
  $region49: #{tpu_custom_call.1} parent=0
    _
  %s5 = ssub.s32 1, %s3
  %s6 = scalar_select 0, %s5, %s3
  $region1: #{tpu_custom_call.1} parent=0
    #allocation2 [shape = 'u8[65536]{0}', space=vmem, size = 0x10000, scoped, tag = 'input window, operand 0, single buffered']
    #allocation3 [shape = 's32[2]{0}', space=sflag, size = 0x8, scoped, tag = 'scoped memory for tpu_custom_call.1']
    #allocation4 [shape = 's32[2]{0}', space=sflag, size = 0x8, scoped, tag = 'scoped memory for tpu_custom_call.1']
    #allocation5 [shape = 'u8[65536]{0}', space=vmem, size = 0x10000, scoped, tag = 'input window, operand 1']
    #allocation6 [shape = 's32[2]{0}', space=sflag, size = 0x8, scoped, tag = 'scoped memory for tpu_custom_call.1']
    #allocation7 [shape = 'u8[65536]{0}', space=vmem, size = 0x10000, scoped, tag = 'output window, operand 0']
    %7 = vsyncpa [#allocation3], 0
    %8 = vsyncpa [#allocation6], 0
    %s9 = scalar_lea.sflag [#allocation6], 1
    %10 = vsyncpa %s9, 0
    %11 = vsyncpa [#allocation4], 0
    %s12 = scalar_lea.sflag [#allocation4], 1
    %13 = vsyncpa %s12, 0
    loop: start=0, step=1, limit=4
    $region2: #{tpu_custom_call.1} parent=1 // loop_pre_header
      _
    $region3: #{tpu_custom_call.1} parent=1 // loop_header
      %s15 = sphi 0, %s19
      %p16 = scmp.ge.s32.totalorder %s15, 4
      %s23 = sphi 0, %s23
      %s25 = sphi 0, %s23
      %s26 = sphi 0, %s25
      %s40 = sphi 0, %s26
      %s46 = sphi 0, %s48
      %s49 = sphi 0, %s46
      %s50 = sphi 0, %s49
      %s66 = sphi 0, %s50
      %s72 = sphi 0, %s74
      %s75 = sphi 0, %s72
      %s76 = sphi 0, %s75
      %s92 = sphi 0, %s76
    $region4: #{tpu_custom_call.1} parent=1 // loop_header_branch
      %18 = sbr.rel (%p16) target = $region8
    $region5: #{tpu_custom_call.1} parent=1 // loop_body
      %s20 = ssub.s32 %s15, 1
      %s21 = ssub.s32 %s15, 2
      %s22 = sadd.s32 %s15, 1
      %s24 = sadd.s32 %s23, 1
      %p27 = scmp.eq.s32.totalorder %s15, 1
      %p28 = scmp.ne.s32.totalorder %s23, %s25
      %p29 = scmp.eq.s32.totalorder %s15, 0
      %p30 = por %p28, %p29
      %p31 = scmp.ne.s32.totalorder %s23, %s25
      %p32 = scmp.eq.s32.totalorder %s20, 1
      %p33 = por %p31, %p32
      %p34 = scmp.ne.s32.totalorder %s25, %s26
      %p35 = scmp.eq.s32.totalorder %s20, 0
      %p36 = por %p34, %p35
      %p37 = scmp.ne.s32.totalorder %s25, %s26
      %p38 = scmp.eq.s32.totalorder %s21, 1
      %p39 = por %p37, %p38
      %p41 = scmp.ne.s32.totalorder %s26, %s40
      %p42 = scmp.eq.s32.totalorder %s21, 0
      %p43 = por %p41, %p42
      %s44 = ssub.s32 %s15, %s22
      %p45 = scmp.eq.s32.totalorder %s44, 0
      %s47 = sadd.s32 %s46, 1
      %s48 = scalar_select %p45, %s46, %s47
      %p51 = pneg %p45
      %p52 = scmp.eq.s32.totalorder %s15, 1
      %p53 = por %p51, %p52
      %p54 = scmp.ne.s32.totalorder %s46, %s49
      %p55 = scmp.eq.s32.totalorder %s15, 0
      %p56 = por %p54, %p55
      %p57 = scmp.ne.s32.totalorder %s46, %s49
      %p58 = scmp.eq.s32.totalorder %s20, 1
      %p59 = por %p57, %p58
      %p60 = scmp.ne.s32.totalorder %s49, %s50
      %p61 = scmp.eq.s32.totalorder %s20, 0
      %p62 = por %p60, %p61
      %p63 = scmp.ne.s32.totalorder %s49, %s50
      %p64 = scmp.eq.s32.totalorder %s21, 1
      %p65 = por %p63, %p64
      %p67 = scmp.ne.s32.totalorder %s50, %s66
      %p68 = scmp.eq.s32.totalorder %s21, 0
      %p69 = por %p67, %p68
      %s70 = ssub.s32 %s15, %s22
      %p71 = scmp.eq.s32.totalorder %s70, 0
      %s73 = sadd.s32 %s72, 1
      %s74 = scalar_select %p71, %s72, %s73
      %p77 = pneg %p71
      %p78 = scmp.eq.s32.totalorder %s15, 1
      %p79 = por %p77, %p78
      %p80 = scmp.ne.s32.totalorder %s72, %s75
      %p81 = scmp.eq.s32.totalorder %s15, 0
      %p82 = por %p80, %p81
      %p83 = scmp.ne.s32.totalorder %s72, %s75
      %p84 = scmp.eq.s32.totalorder %s20, 1
      %p85 = por %p83, %p84
      %p86 = scmp.ne.s32.totalorder %s75, %s76
      %p87 = scmp.eq.s32.totalorder %s20, 0
      %p88 = por %p86, %p87
      %p89 = scmp.ne.s32.totalorder %s75, %s76
      %p90 = scmp.eq.s32.totalorder %s21, 1
      %p91 = por %p89, %p90
      %p93 = scmp.ne.s32.totalorder %s76, %s92
      %p94 = scmp.eq.s32.totalorder %s21, 0
      %p95 = por %p93, %p94
      %p96 = scmp.le.s32.totalorder 1, %s15
      %p97 = scmp.lt.s32.totalorder %s15, 3
      %p98 = pnand %p96, %p97
      %p99 = pneg %p98
      // Predicated region
      $region9: #{tpu_custom_call.1} parent=5 // pred_check
        _
      $region10: #{tpu_custom_call.1} parent=5 // pred_check_branch
        %101 = sbr.rel (%p98) target = $region12
      $region11: #{tpu_custom_call.1} parent=5 // pred_region
        %s102 = ssub.s32 %s15, 1
        // Predicated region
        $region13: #{tpu_custom_call.1} parent=11 // pred_check
          %p103 = pneg %p36
        $region14: #{tpu_custom_call.1} parent=11 // pred_check_branch
          %105 = sbr.rel (%p103) target = $region16
        $region15: #{tpu_custom_call.1} parent=11 // pred_region
          %s107 = ssub.s32 2048, 2048
          %108 = vsyncadd [#allocation3], %s107
          %s109 = sshll.u32 [#allocation2], 4
          %s110 = int_to_ptr.vmem [resolvable:$true] %s109
          %115 = dma.hbm_to_vmem [thread:$0]  %s0, 2048, %s110, [#allocation3], 128, 128, 8
        $region16: #{tpu_custom_call.1} parent=11 // pred_fallthru
          _
      $region12: #{tpu_custom_call.1} parent=5 // pred_fallthru
        _
      %p116 = scmp.lt.s32.totalorder %s15, 2
      // Predicated region
      $region17: #{tpu_custom_call.1} parent=5 // pred_check
        %p117 = pneg %p116
      $region18: #{tpu_custom_call.1} parent=5 // pred_check_branch
        %119 = sbr.rel (%p117) target = $region20
      $region19: #{tpu_custom_call.1} parent=5 // pred_region
        // Predicated region
        $region21: #{tpu_custom_call.1} parent=19 // pred_check
          %p120 = pneg %p56
        $region22: #{tpu_custom_call.1} parent=19 // pred_check_branch
          %122 = sbr.rel (%p120) target = $region24
        $region23: #{tpu_custom_call.1} parent=19 // pred_region
          %s123 = sand.u32 %s46, 1
          %s124 = scalar_lea.sflag [#allocation6], %s123
          %s125 = sand.u32 %s46, 1
          %s126 = smul.addr %s125, 64
          %s127 = scalar_lea.vmem [#allocation5], %s126
          %s128 = smul.u32 4, %s15
          %s130 = ssub.s32 1024, 1024
          %131 = vsyncadd %s124, %s130
          %s132 = smul.addr %s128, 2
          %s133 = smul.addr %s132, 128
          %s134 = scalar_lea.hbm %s1, %s133
          %s135 = sshll.u32 %s127, 4
          %s136 = int_to_ptr.vmem [resolvable:$true] %s135
          %141 = dma.hbm_to_vmem [thread:$0]  %s134, 1024, %s136, %s124, 256, 256, 16
        $region24: #{tpu_custom_call.1} parent=19 // pred_fallthru
          _
      $region20: #{tpu_custom_call.1} parent=5 // pred_fallthru
        _
      %p142 = scmp.le.s32.totalorder 1, %s15
      %p143 = scmp.lt.s32.totalorder %s15, 3
      %p144 = pnand %p142, %p143
      %p145 = pneg %p144
      // Predicated region
      $region25: #{tpu_custom_call.1} parent=5 // pred_check
        _
      $region26: #{tpu_custom_call.1} parent=5 // pred_check_branch
        %147 = sbr.rel (%p144) target = $region28
      $region27: #{tpu_custom_call.1} parent=5 // pred_region
        %s148 = ssub.s32 %s15, 1
        // Predicated region
        $region29: #{tpu_custom_call.1} parent=27 // pred_check
          %p149 = pneg %p36
        $region30: #{tpu_custom_call.1} parent=27 // pred_check_branch
          %151 = sbr.rel (%p149) target = $region32
        $region31: #{tpu_custom_call.1} parent=27 // pred_region
          %152 = dma.done [#allocation3], 2048
        $region32: #{tpu_custom_call.1} parent=27 // pred_fallthru
          _
        %s153 = sand.u32 %s49, 1
        %s154 = scalar_lea.sflag [#allocation6], %s153
        %s155 = sand.u32 %s49, 1
        %s156 = smul.addr %s155, 64
        %s157 = scalar_lea.vmem [#allocation5], %s156
        // Predicated region
        $region33: #{tpu_custom_call.1} parent=27 // pred_check
          %p158 = pneg %p62
        $region34: #{tpu_custom_call.1} parent=27 // pred_check_branch
          %160 = sbr.rel (%p158) target = $region36
        $region35: #{tpu_custom_call.1} parent=27 // pred_region
          %161 = dma.done %s154, 1024
        $region36: #{tpu_custom_call.1} parent=27 // pred_fallthru
          _
        %p162 = pneg %p36
        %p163 = pneg %p33
        %s164 = sand.u32 %s49, 1
        %s165 = scalar_lea.sflag [#allocation6], %s164
        %s166 = sand.u32 %s49, 1
        %s167 = smul.addr %s166, 64
        %s168 = scalar_lea.vmem [#allocation5], %s167
        %p169 = pneg %p62
        %p170 = pneg %p59
        %p171 = pneg %p88
        %p172 = pneg %p85
        %s173 = sand.u32 %s75, 1
        %s174 = scalar_lea.sflag [#allocation4], %s173
        %s175 = sand.u32 %s75, 1
        %s176 = smul.addr %s175, 64
        %s177 = scalar_lea.vmem [#allocation7], %s176
        %s178 = smul.u32 4, %s20
        %s179 = smul.u32 4, %s20
        %v180 = vld [vmem:[#allocation2] sm:$0xff]
        %v181 = vld [vmem:[#allocation2 + $0x8] sm:$0xff]
        %v182 = vld [vmem:[#allocation2 + $0x10] sm:$0xff]
        %v183 = vld [vmem:[#allocation2 + $0x18] sm:$0xff]
        %v184 = vld [vmem:[#allocation2 + $0x20] sm:$0xff]
        %v185 = vld [vmem:[#allocation2 + $0x28] sm:$0xff]
        %v186 = vld [vmem:[#allocation2 + $0x30] sm:$0xff]
        %v187 = vld [vmem:[#allocation2 + $0x38] sm:$0xff]
        %v188 = vld [vmem:[#allocation2 + $0x40] sm:$0xff]
        %v189 = vld [vmem:[#allocation2 + $0x48] sm:$0xff]
        %v190 = vld [vmem:[#allocation2 + $0x50] sm:$0xff]
        %v191 = vld [vmem:[#allocation2 + $0x58] sm:$0xff]
        %v192 = vld [vmem:[#allocation2 + $0x60] sm:$0xff]
        %v193 = vld [vmem:[#allocation2 + $0x68] sm:$0xff]
        %v194 = vld [vmem:[#allocation2 + $0x70] sm:$0xff]
        %v195 = vld [vmem:[#allocation2 + $0x78] sm:$0xff]
        %v196 = vlaneseq
        %v197 = vshrl.u32 %v196, 7
        %v198 = vadd.s32 %v197, 8
        %v199 = vadd.s32 %v197, 16
        %v200 = vadd.s32 %v197, 24
        %v201 = vadd.s32 %v197, 32
        %v202 = vadd.s32 %v197, 40
        %v203 = vadd.s32 %v197, 48
        %v204 = vadd.s32 %v197, 56
        %v205 = vadd.s32 %v197, 64
        %v206 = vadd.s32 %v197, 72
        %v207 = vadd.s32 %v197, 80
        %v208 = vadd.s32 %v197, 88
        %v209 = vadd.s32 %v197, 96
        %v210 = vadd.s32 %v197, 104
        %v211 = vadd.s32 %v197, 112
        %v212 = vadd.s32 %v197, 120
        %v213 = vadd.s32 %v197, 128
        %v214 = vadd.s32 %v197, 136
        %v215 = vadd.s32 %v197, 144
        %v216 = vadd.s32 %v197, 152
        %v217 = vadd.s32 %v197, 160
        %v218 = vadd.s32 %v197, 168
        %v219 = vadd.s32 %v197, 176
        %v220 = vadd.s32 %v197, 184
        %v221 = vadd.s32 %v197, 192
        %v222 = vadd.s32 %v197, 200
        %v223 = vadd.s32 %v197, 208
        %v224 = vadd.s32 %v197, 216
        %v225 = vadd.s32 %v197, 224
        %v226 = vadd.s32 %v197, 232
        %v227 = vadd.s32 %v197, 240
        %v228 = vadd.s32 %v197, 248
        %v229 = vlaneseq
        %v230 = vand.u32 %v229, 127
        %v231 = vmul.u32 %v230, 16
        %vm232 = vcmp.ge.s32.totalorder %v197, %v231
        %vm233 = vcmp.ge.s32.totalorder %v198, %v231
        %vm234 = vcmp.ge.s32.totalorder %v199, %v231
        %vm235 = vcmp.ge.s32.totalorder %v200, %v231
        %vm236 = vcmp.ge.s32.totalorder %v201, %v231
        %vm237 = vcmp.ge.s32.totalorder %v202, %v231
        %vm238 = vcmp.ge.s32.totalorder %v203, %v231
        %vm239 = vcmp.ge.s32.totalorder %v204, %v231
        %vm240 = vcmp.ge.s32.totalorder %v205, %v231
        %vm241 = vcmp.ge.s32.totalorder %v206, %v231
        %vm242 = vcmp.ge.s32.totalorder %v207, %v231
        %vm243 = vcmp.ge.s32.totalorder %v208, %v231
        %vm244 = vcmp.ge.s32.totalorder %v209, %v231
        %vm245 = vcmp.ge.s32.totalorder %v210, %v231
        %vm246 = vcmp.ge.s32.totalorder %v211, %v231
        %vm247 = vcmp.ge.s32.totalorder %v212, %v231
        %vm248 = vcmp.ge.s32.totalorder %v213, %v231
        %vm249 = vcmp.ge.s32.totalorder %v214, %v231
        %vm250 = vcmp.ge.s32.totalorder %v215, %v231
        %vm251 = vcmp.ge.s32.totalorder %v216, %v231
        %vm252 = vcmp.ge.s32.totalorder %v217, %v231
        %vm253 = vcmp.ge.s32.totalorder %v218, %v231
        %vm254 = vcmp.ge.s32.totalorder %v219, %v231
        %vm255 = vcmp.ge.s32.totalorder %v220, %v231
        %vm256 = vcmp.ge.s32.totalorder %v221, %v231
        %vm257 = vcmp.ge.s32.totalorder %v222, %v231
        %vm258 = vcmp.ge.s32.totalorder %v223, %v231
        %vm259 = vcmp.ge.s32.totalorder %v224, %v231
        %vm260 = vcmp.ge.s32.totalorder %v225, %v231
        %vm261 = vcmp.ge.s32.totalorder %v226, %v231
        %vm262 = vcmp.ge.s32.totalorder %v227, %v231
        %vm263 = vcmp.ge.s32.totalorder %v228, %v231
        %v264 = vadd.s32 %v231, 16
        %vm265 = vcmp.lt.s32.totalorder %v197, %v264
        %vm266 = vcmp.lt.s32.totalorder %v198, %v264
        %vm267 = vcmp.lt.s32.totalorder %v199, %v264
        %vm268 = vcmp.lt.s32.totalorder %v200, %v264
        %vm269 = vcmp.lt.s32.totalorder %v201, %v264
        %vm270 = vcmp.lt.s32.totalorder %v202, %v264
        %vm271 = vcmp.lt.s32.totalorder %v203, %v264
        %vm272 = vcmp.lt.s32.totalorder %v204, %v264
        %vm273 = vcmp.lt.s32.totalorder %v205, %v264
        %vm274 = vcmp.lt.s32.totalorder %v206, %v264
        %vm275 = vcmp.lt.s32.totalorder %v207, %v264
        %vm276 = vcmp.lt.s32.totalorder %v208, %v264
        %vm277 = vcmp.lt.s32.totalorder %v209, %v264
        %vm278 = vcmp.lt.s32.totalorder %v210, %v264
        %vm279 = vcmp.lt.s32.totalorder %v211, %v264
        %vm280 = vcmp.lt.s32.totalorder %v212, %v264
        %vm281 = vcmp.lt.s32.totalorder %v213, %v264
        %vm282 = vcmp.lt.s32.totalorder %v214, %v264
        %vm283 = vcmp.lt.s32.totalorder %v215, %v264
        %vm284 = vcmp.lt.s32.totalorder %v216, %v264
        %vm285 = vcmp.lt.s32.totalorder %v217, %v264
        %vm286 = vcmp.lt.s32.totalorder %v218, %v264
        %vm287 = vcmp.lt.s32.totalorder %v219, %v264
        %vm288 = vcmp.lt.s32.totalorder %v220, %v264
        %vm289 = vcmp.lt.s32.totalorder %v221, %v264
        %vm290 = vcmp.lt.s32.totalorder %v222, %v264
        %vm291 = vcmp.lt.s32.totalorder %v223, %v264
        %vm292 = vcmp.lt.s32.totalorder %v224, %v264
        %vm293 = vcmp.lt.s32.totalorder %v225, %v264
        %vm294 = vcmp.lt.s32.totalorder %v226, %v264
        %vm295 = vcmp.lt.s32.totalorder %v227, %v264
        %vm296 = vcmp.lt.s32.totalorder %v228, %v264
        %vm297 = vmand %vm232, %vm265
        %vm298 = vmand %vm233, %vm266
        %vm299 = vmand %vm234, %vm267
        %vm300 = vmand %vm235, %vm268
        %vm301 = vmand %vm236, %vm269
        %vm302 = vmand %vm237, %vm270
        %vm303 = vmand %vm238, %vm271
        %vm304 = vmand %vm239, %vm272
        %vm305 = vmand %vm240, %vm273
        %vm306 = vmand %vm241, %vm274
        %vm307 = vmand %vm242, %vm275
        %vm308 = vmand %vm243, %vm276
        %vm309 = vmand %vm244, %vm277
        %vm310 = vmand %vm245, %vm278
        %vm311 = vmand %vm246, %vm279
        %vm312 = vmand %vm247, %vm280
        %vm313 = vmand %vm248, %vm281
        %vm314 = vmand %vm249, %vm282
        %vm315 = vmand %vm250, %vm283
        %vm316 = vmand %vm251, %vm284
        %vm317 = vmand %vm252, %vm285
        %vm318 = vmand %vm253, %vm286
        %vm319 = vmand %vm254, %vm287
        %vm320 = vmand %vm255, %vm288
        %vm321 = vmand %vm256, %vm289
        %vm322 = vmand %vm257, %vm290
        %vm323 = vmand %vm258, %vm291
        %vm324 = vmand %vm259, %vm292
        %vm325 = vmand %vm260, %vm293
        %vm326 = vmand %vm261, %vm294
        %vm327 = vmand %vm262, %vm295
        %vm328 = vmand %vm263, %vm296
        %v329 = vsel %vm297, 1.0, 0.0
        %v330 = vsel %vm298, 1.0, 0.0
        %v331 = vsel %vm299, 1.0, 0.0
        %v332 = vsel %vm300, 1.0, 0.0
        %v333 = vsel %vm301, 1.0, 0.0
        %v334 = vsel %vm302, 1.0, 0.0
        %v335 = vsel %vm303, 1.0, 0.0
        %v336 = vsel %vm304, 1.0, 0.0
        %v337 = vsel %vm305, 1.0, 0.0
        %v338 = vsel %vm306, 1.0, 0.0
        %v339 = vsel %vm307, 1.0, 0.0
        %v340 = vsel %vm308, 1.0, 0.0
        %v341 = vsel %vm309, 1.0, 0.0
        %v342 = vsel %vm310, 1.0, 0.0
        %v343 = vsel %vm311, 1.0, 0.0
        %v344 = vsel %vm312, 1.0, 0.0
        %v345 = vsel %vm313, 1.0, 0.0
        %v346 = vsel %vm314, 1.0, 0.0
        %v347 = vsel %vm315, 1.0, 0.0
        %v348 = vsel %vm316, 1.0, 0.0
        %v349 = vsel %vm317, 1.0, 0.0
        %v350 = vsel %vm318, 1.0, 0.0
        %v351 = vsel %vm319, 1.0, 0.0
        %v352 = vsel %vm320, 1.0, 0.0
        %v353 = vsel %vm321, 1.0, 0.0
        %v354 = vsel %vm322, 1.0, 0.0
        %v355 = vsel %vm323, 1.0, 0.0
        %v356 = vsel %vm324, 1.0, 0.0
        %v357 = vsel %vm325, 1.0, 0.0
        %v358 = vsel %vm326, 1.0, 0.0
        %v359 = vsel %vm327, 1.0, 0.0
        %v360 = vsel %vm328, 1.0, 0.0
        %vm361 = vcmp.eq.s32.totalorder %v197, %v230
        %vm362 = vcmp.eq.s32.totalorder %v198, %v230
        %vm363 = vcmp.eq.s32.totalorder %v199, %v230
        %vm364 = vcmp.eq.s32.totalorder %v200, %v230
        %vm365 = vcmp.eq.s32.totalorder %v201, %v230
        %vm366 = vcmp.eq.s32.totalorder %v202, %v230
        %vm367 = vcmp.eq.s32.totalorder %v203, %v230
        %vm368 = vcmp.eq.s32.totalorder %v204, %v230
        %vm369 = vcmp.eq.s32.totalorder %v205, %v230
        %vm370 = vcmp.eq.s32.totalorder %v206, %v230
        %vm371 = vcmp.eq.s32.totalorder %v207, %v230
        %vm372 = vcmp.eq.s32.totalorder %v208, %v230
        %vm373 = vcmp.eq.s32.totalorder %v209, %v230
        %vm374 = vcmp.eq.s32.totalorder %v210, %v230
        %vm375 = vcmp.eq.s32.totalorder %v211, %v230
        %vm376 = vcmp.eq.s32.totalorder %v212, %v230
        %vm377 = vcmp.eq.s32.totalorder %v213, %v230
        %vm378 = vcmp.eq.s32.totalorder %v214, %v230
        %vm379 = vcmp.eq.s32.totalorder %v215, %v230
        %vm380 = vcmp.eq.s32.totalorder %v216, %v230
        %vm381 = vcmp.eq.s32.totalorder %v217, %v230
        %vm382 = vcmp.eq.s32.totalorder %v218, %v230
        %vm383 = vcmp.eq.s32.totalorder %v219, %v230
        %vm384 = vcmp.eq.s32.totalorder %v220, %v230
        %vm385 = vcmp.eq.s32.totalorder %v221, %v230
        %vm386 = vcmp.eq.s32.totalorder %v222, %v230
        %vm387 = vcmp.eq.s32.totalorder %v223, %v230
        %vm388 = vcmp.eq.s32.totalorder %v224, %v230
        %vm389 = vcmp.eq.s32.totalorder %v225, %v230
        %vm390 = vcmp.eq.s32.totalorder %v226, %v230
        %vm391 = vcmp.eq.s32.totalorder %v227, %v230
        %vm392 = vcmp.eq.s32.totalorder %v228, %v230
        %v393 = vadd.s32 %v230, 16
        %vm394 = vcmp.eq.s32.totalorder %v197, %v393
        %vm395 = vcmp.eq.s32.totalorder %v198, %v393
        %vm396 = vcmp.eq.s32.totalorder %v199, %v393
        %vm397 = vcmp.eq.s32.totalorder %v200, %v393
        %vm398 = vcmp.eq.s32.totalorder %v201, %v393
        %vm399 = vcmp.eq.s32.totalorder %v202, %v393
        %vm400 = vcmp.eq.s32.totalorder %v203, %v393
        %vm401 = vcmp.eq.s32.totalorder %v204, %v393
        %vm402 = vcmp.eq.s32.totalorder %v205, %v393
        %vm403 = vcmp.eq.s32.totalorder %v206, %v393
        %vm404 = vcmp.eq.s32.totalorder %v207, %v393
        %vm405 = vcmp.eq.s32.totalorder %v208, %v393
        %vm406 = vcmp.eq.s32.totalorder %v209, %v393
        %vm407 = vcmp.eq.s32.totalorder %v210, %v393
        %vm408 = vcmp.eq.s32.totalorder %v211, %v393
        %vm409 = vcmp.eq.s32.totalorder %v212, %v393
        %vm410 = vcmp.eq.s32.totalorder %v213, %v393
        %vm411 = vcmp.eq.s32.totalorder %v214, %v393
        %vm412 = vcmp.eq.s32.totalorder %v215, %v393
        %vm413 = vcmp.eq.s32.totalorder %v216, %v393
        %vm414 = vcmp.eq.s32.totalorder %v217, %v393
        %vm415 = vcmp.eq.s32.totalorder %v218, %v393
        %vm416 = vcmp.eq.s32.totalorder %v219, %v393
        %vm417 = vcmp.eq.s32.totalorder %v220, %v393
        %vm418 = vcmp.eq.s32.totalorder %v221, %v393
        %vm419 = vcmp.eq.s32.totalorder %v222, %v393
        %vm420 = vcmp.eq.s32.totalorder %v223, %v393
        %vm421 = vcmp.eq.s32.totalorder %v224, %v393
        %vm422 = vcmp.eq.s32.totalorder %v225, %v393
        %vm423 = vcmp.eq.s32.totalorder %v226, %v393
        %vm424 = vcmp.eq.s32.totalorder %v227, %v393
        %vm425 = vcmp.eq.s32.totalorder %v228, %v393
        %v426 = vadd.s32 %v230, 32
        %vm427 = vcmp.eq.s32.totalorder %v197, %v426
        %vm428 = vcmp.eq.s32.totalorder %v198, %v426
        %vm429 = vcmp.eq.s32.totalorder %v199, %v426
        %vm430 = vcmp.eq.s32.totalorder %v200, %v426
        %vm431 = vcmp.eq.s32.totalorder %v201, %v426
        %vm432 = vcmp.eq.s32.totalorder %v202, %v426
        %vm433 = vcmp.eq.s32.totalorder %v203, %v426
        %vm434 = vcmp.eq.s32.totalorder %v204, %v426
        %vm435 = vcmp.eq.s32.totalorder %v205, %v426
        %vm436 = vcmp.eq.s32.totalorder %v206, %v426
        %vm437 = vcmp.eq.s32.totalorder %v207, %v426
        %vm438 = vcmp.eq.s32.totalorder %v208, %v426
        %vm439 = vcmp.eq.s32.totalorder %v209, %v426
        %vm440 = vcmp.eq.s32.totalorder %v210, %v426
        %vm441 = vcmp.eq.s32.totalorder %v211, %v426
        %vm442 = vcmp.eq.s32.totalorder %v212, %v426
        %vm443 = vcmp.eq.s32.totalorder %v213, %v426
        %vm444 = vcmp.eq.s32.totalorder %v214, %v426
        %vm445 = vcmp.eq.s32.totalorder %v215, %v426
        %vm446 = vcmp.eq.s32.totalorder %v216, %v426
        %vm447 = vcmp.eq.s32.totalorder %v217, %v426
        %vm448 = vcmp.eq.s32.totalorder %v218, %v426
        %vm449 = vcmp.eq.s32.totalorder %v219, %v426
        %vm450 = vcmp.eq.s32.totalorder %v220, %v426
        %vm451 = vcmp.eq.s32.totalorder %v221, %v426
        %vm452 = vcmp.eq.s32.totalorder %v222, %v426
        %vm453 = vcmp.eq.s32.totalorder %v223, %v426
        %vm454 = vcmp.eq.s32.totalorder %v224, %v426
        %vm455 = vcmp.eq.s32.totalorder %v225, %v426
        %vm456 = vcmp.eq.s32.totalorder %v226, %v426
        %vm457 = vcmp.eq.s32.totalorder %v227, %v426
        %vm458 = vcmp.eq.s32.totalorder %v228, %v426
        %v459 = vadd.s32 %v230, 48
        %vm460 = vcmp.eq.s32.totalorder %v197, %v459
        %vm461 = vcmp.eq.s32.totalorder %v198, %v459
        %vm462 = vcmp.eq.s32.totalorder %v199, %v459
        %vm463 = vcmp.eq.s32.totalorder %v200, %v459
        %vm464 = vcmp.eq.s32.totalorder %v201, %v459
        %vm465 = vcmp.eq.s32.totalorder %v202, %v459
        %vm466 = vcmp.eq.s32.totalorder %v203, %v459
        %vm467 = vcmp.eq.s32.totalorder %v204, %v459
        %vm468 = vcmp.eq.s32.totalorder %v205, %v459
        %vm469 = vcmp.eq.s32.totalorder %v206, %v459
        %vm470 = vcmp.eq.s32.totalorder %v207, %v459
        %vm471 = vcmp.eq.s32.totalorder %v208, %v459
        %vm472 = vcmp.eq.s32.totalorder %v209, %v459
        %vm473 = vcmp.eq.s32.totalorder %v210, %v459
        %vm474 = vcmp.eq.s32.totalorder %v211, %v459
        %vm475 = vcmp.eq.s32.totalorder %v212, %v459
        %vm476 = vcmp.eq.s32.totalorder %v213, %v459
        %vm477 = vcmp.eq.s32.totalorder %v214, %v459
        %vm478 = vcmp.eq.s32.totalorder %v215, %v459
        %vm479 = vcmp.eq.s32.totalorder %v216, %v459
        %vm480 = vcmp.eq.s32.totalorder %v217, %v459
        %vm481 = vcmp.eq.s32.totalorder %v218, %v459
        %vm482 = vcmp.eq.s32.totalorder %v219, %v459
        %vm483 = vcmp.eq.s32.totalorder %v220, %v459
        %vm484 = vcmp.eq.s32.totalorder %v221, %v459
        %vm485 = vcmp.eq.s32.totalorder %v222, %v459
        %vm486 = vcmp.eq.s32.totalorder %v223, %v459
        %vm487 = vcmp.eq.s32.totalorder %v224, %v459
        %vm488 = vcmp.eq.s32.totalorder %v225, %v459
        %vm489 = vcmp.eq.s32.totalorder %v226, %v459
        %vm490 = vcmp.eq.s32.totalorder %v227, %v459
        %vm491 = vcmp.eq.s32.totalorder %v228, %v459
        %v492 = vadd.s32 %v230, 64
        %vm493 = vcmp.eq.s32.totalorder %v197, %v492
        %vm494 = vcmp.eq.s32.totalorder %v198, %v492
        %vm495 = vcmp.eq.s32.totalorder %v199, %v492
        %vm496 = vcmp.eq.s32.totalorder %v200, %v492
        %vm497 = vcmp.eq.s32.totalorder %v201, %v492
        %vm498 = vcmp.eq.s32.totalorder %v202, %v492
        %vm499 = vcmp.eq.s32.totalorder %v203, %v492
        %vm500 = vcmp.eq.s32.totalorder %v204, %v492
        %vm501 = vcmp.eq.s32.totalorder %v205, %v492
        %vm502 = vcmp.eq.s32.totalorder %v206, %v492
        %vm503 = vcmp.eq.s32.totalorder %v207, %v492
        %vm504 = vcmp.eq.s32.totalorder %v208, %v492
        %vm505 = vcmp.eq.s32.totalorder %v209, %v492
        %vm506 = vcmp.eq.s32.totalorder %v210, %v492
        %vm507 = vcmp.eq.s32.totalorder %v211, %v492
        %vm508 = vcmp.eq.s32.totalorder %v212, %v492
        %vm509 = vcmp.eq.s32.totalorder %v213, %v492
        %vm510 = vcmp.eq.s32.totalorder %v214, %v492
        %vm511 = vcmp.eq.s32.totalorder %v215, %v492
        %vm512 = vcmp.eq.s32.totalorder %v216, %v492
        %vm513 = vcmp.eq.s32.totalorder %v217, %v492
        %vm514 = vcmp.eq.s32.totalorder %v218, %v492
        %vm515 = vcmp.eq.s32.totalorder %v219, %v492
        %vm516 = vcmp.eq.s32.totalorder %v220, %v492
        %vm517 = vcmp.eq.s32.totalorder %v221, %v492
        %vm518 = vcmp.eq.s32.totalorder %v222, %v492
        %vm519 = vcmp.eq.s32.totalorder %v223, %v492
        %vm520 = vcmp.eq.s32.totalorder %v224, %v492
        %vm521 = vcmp.eq.s32.totalorder %v225, %v492
        %vm522 = vcmp.eq.s32.totalorder %v226, %v492
        %vm523 = vcmp.eq.s32.totalorder %v227, %v492
        %vm524 = vcmp.eq.s32.totalorder %v228, %v492
        %v525 = vadd.s32 %v230, 80
        %vm526 = vcmp.eq.s32.totalorder %v197, %v525
        %vm527 = vcmp.eq.s32.totalorder %v198, %v525
        %vm528 = vcmp.eq.s32.totalorder %v199, %v525
        %vm529 = vcmp.eq.s32.totalorder %v200, %v525
        %vm530 = vcmp.eq.s32.totalorder %v201, %v525
        %vm531 = vcmp.eq.s32.totalorder %v202, %v525
        %vm532 = vcmp.eq.s32.totalorder %v203, %v525
        %vm533 = vcmp.eq.s32.totalorder %v204, %v525
        %vm534 = vcmp.eq.s32.totalorder %v205, %v525
        %vm535 = vcmp.eq.s32.totalorder %v206, %v525
        %vm536 = vcmp.eq.s32.totalorder %v207, %v525
        %vm537 = vcmp.eq.s32.totalorder %v208, %v525
        %vm538 = vcmp.eq.s32.totalorder %v209, %v525
        %vm539 = vcmp.eq.s32.totalorder %v210, %v525
        %vm540 = vcmp.eq.s32.totalorder %v211, %v525
        %vm541 = vcmp.eq.s32.totalorder %v212, %v525
        %vm542 = vcmp.eq.s32.totalorder %v213, %v525
        %vm543 = vcmp.eq.s32.totalorder %v214, %v525
        %vm544 = vcmp.eq.s32.totalorder %v215, %v525
        %vm545 = vcmp.eq.s32.totalorder %v216, %v525
        %vm546 = vcmp.eq.s32.totalorder %v217, %v525
        %vm547 = vcmp.eq.s32.totalorder %v218, %v525
        %vm548 = vcmp.eq.s32.totalorder %v219, %v525
        %vm549 = vcmp.eq.s32.totalorder %v220, %v525
        %vm550 = vcmp.eq.s32.totalorder %v221, %v525
        %vm551 = vcmp.eq.s32.totalorder %v222, %v525
        %vm552 = vcmp.eq.s32.totalorder %v223, %v525
        %vm553 = vcmp.eq.s32.totalorder %v224, %v525
        %vm554 = vcmp.eq.s32.totalorder %v225, %v525
        %vm555 = vcmp.eq.s32.totalorder %v226, %v525
        %vm556 = vcmp.eq.s32.totalorder %v227, %v525
        %vm557 = vcmp.eq.s32.totalorder %v228, %v525
        %v558 = vadd.s32 %v230, 96
        %vm559 = vcmp.eq.s32.totalorder %v197, %v558
        %vm560 = vcmp.eq.s32.totalorder %v198, %v558
        %vm561 = vcmp.eq.s32.totalorder %v199, %v558
        %vm562 = vcmp.eq.s32.totalorder %v200, %v558
        %vm563 = vcmp.eq.s32.totalorder %v201, %v558
        %vm564 = vcmp.eq.s32.totalorder %v202, %v558
        %vm565 = vcmp.eq.s32.totalorder %v203, %v558
        %vm566 = vcmp.eq.s32.totalorder %v204, %v558
        %vm567 = vcmp.eq.s32.totalorder %v205, %v558
        %vm568 = vcmp.eq.s32.totalorder %v206, %v558
        %vm569 = vcmp.eq.s32.totalorder %v207, %v558
        %vm570 = vcmp.eq.s32.totalorder %v208, %v558
        %vm571 = vcmp.eq.s32.totalorder %v209, %v558
        %vm572 = vcmp.eq.s32.totalorder %v210, %v558
        %vm573 = vcmp.eq.s32.totalorder %v211, %v558
        %vm574 = vcmp.eq.s32.totalorder %v212, %v558
        %vm575 = vcmp.eq.s32.totalorder %v213, %v558
        %vm576 = vcmp.eq.s32.totalorder %v214, %v558
        %vm577 = vcmp.eq.s32.totalorder %v215, %v558
        %vm578 = vcmp.eq.s32.totalorder %v216, %v558
        %vm579 = vcmp.eq.s32.totalorder %v217, %v558
        %vm580 = vcmp.eq.s32.totalorder %v218, %v558
        %vm581 = vcmp.eq.s32.totalorder %v219, %v558
        %vm582 = vcmp.eq.s32.totalorder %v220, %v558
        %vm583 = vcmp.eq.s32.totalorder %v221, %v558
        %vm584 = vcmp.eq.s32.totalorder %v222, %v558
        %vm585 = vcmp.eq.s32.totalorder %v223, %v558
        %vm586 = vcmp.eq.s32.totalorder %v224, %v558
        %vm587 = vcmp.eq.s32.totalorder %v225, %v558
        %vm588 = vcmp.eq.s32.totalorder %v226, %v558
        %vm589 = vcmp.eq.s32.totalorder %v227, %v558
        %vm590 = vcmp.eq.s32.totalorder %v228, %v558
        %v591 = vadd.s32 %v230, 112
        %vm592 = vcmp.eq.s32.totalorder %v197, %v591
        %vm593 = vcmp.eq.s32.totalorder %v198, %v591
        %vm594 = vcmp.eq.s32.totalorder %v199, %v591
        %vm595 = vcmp.eq.s32.totalorder %v200, %v591
        %vm596 = vcmp.eq.s32.totalorder %v201, %v591
        %vm597 = vcmp.eq.s32.totalorder %v202, %v591
        %vm598 = vcmp.eq.s32.totalorder %v203, %v591
        %vm599 = vcmp.eq.s32.totalorder %v204, %v591
        %vm600 = vcmp.eq.s32.totalorder %v205, %v591
        %vm601 = vcmp.eq.s32.totalorder %v206, %v591
        %vm602 = vcmp.eq.s32.totalorder %v207, %v591
        %vm603 = vcmp.eq.s32.totalorder %v208, %v591
        %vm604 = vcmp.eq.s32.totalorder %v209, %v591
        %vm605 = vcmp.eq.s32.totalorder %v210, %v591
        %vm606 = vcmp.eq.s32.totalorder %v211, %v591
        %vm607 = vcmp.eq.s32.totalorder %v212, %v591
        %vm608 = vcmp.eq.s32.totalorder %v213, %v591
        %vm609 = vcmp.eq.s32.totalorder %v214, %v591
        %vm610 = vcmp.eq.s32.totalorder %v215, %v591
        %vm611 = vcmp.eq.s32.totalorder %v216, %v591
        %vm612 = vcmp.eq.s32.totalorder %v217, %v591
        %vm613 = vcmp.eq.s32.totalorder %v218, %v591
        %vm614 = vcmp.eq.s32.totalorder %v219, %v591
        %vm615 = vcmp.eq.s32.totalorder %v220, %v591
        %vm616 = vcmp.eq.s32.totalorder %v221, %v591
        %vm617 = vcmp.eq.s32.totalorder %v222, %v591
        %vm618 = vcmp.eq.s32.totalorder %v223, %v591
        %vm619 = vcmp.eq.s32.totalorder %v224, %v591
        %vm620 = vcmp.eq.s32.totalorder %v225, %v591
        %vm621 = vcmp.eq.s32.totalorder %v226, %v591
        %vm622 = vcmp.eq.s32.totalorder %v227, %v591
        %vm623 = vcmp.eq.s32.totalorder %v228, %v591
        %v624 = vadd.s32 %v230, 128
        %vm625 = vcmp.eq.s32.totalorder %v197, %v624
        %vm626 = vcmp.eq.s32.totalorder %v198, %v624
        %vm627 = vcmp.eq.s32.totalorder %v199, %v624
        %vm628 = vcmp.eq.s32.totalorder %v200, %v624
        %vm629 = vcmp.eq.s32.totalorder %v201, %v624
        %vm630 = vcmp.eq.s32.totalorder %v202, %v624
        %vm631 = vcmp.eq.s32.totalorder %v203, %v624
        %vm632 = vcmp.eq.s32.totalorder %v204, %v624
        %vm633 = vcmp.eq.s32.totalorder %v205, %v624
        %vm634 = vcmp.eq.s32.totalorder %v206, %v624
        %vm635 = vcmp.eq.s32.totalorder %v207, %v624
        %vm636 = vcmp.eq.s32.totalorder %v208, %v624
        %vm637 = vcmp.eq.s32.totalorder %v209, %v624
        %vm638 = vcmp.eq.s32.totalorder %v210, %v624
        %vm639 = vcmp.eq.s32.totalorder %v211, %v624
        %vm640 = vcmp.eq.s32.totalorder %v212, %v624
        %vm641 = vcmp.eq.s32.totalorder %v213, %v624
        %vm642 = vcmp.eq.s32.totalorder %v214, %v624
        %vm643 = vcmp.eq.s32.totalorder %v215, %v624
        %vm644 = vcmp.eq.s32.totalorder %v216, %v624
        %vm645 = vcmp.eq.s32.totalorder %v217, %v624
        %vm646 = vcmp.eq.s32.totalorder %v218, %v624
        %vm647 = vcmp.eq.s32.totalorder %v219, %v624
        %vm648 = vcmp.eq.s32.totalorder %v220, %v624
        %vm649 = vcmp.eq.s32.totalorder %v221, %v624
        %vm650 = vcmp.eq.s32.totalorder %v222, %v624
        %vm651 = vcmp.eq.s32.totalorder %v223, %v624
        %vm652 = vcmp.eq.s32.totalorder %v224, %v624
        %vm653 = vcmp.eq.s32.totalorder %v225, %v624
        %vm654 = vcmp.eq.s32.totalorder %v226, %v624
        %vm655 = vcmp.eq.s32.totalorder %v227, %v624
        %vm656 = vcmp.eq.s32.totalorder %v228, %v624
        %v657 = vadd.s32 %v230, 144
        %vm658 = vcmp.eq.s32.totalorder %v197, %v657
        %vm659 = vcmp.eq.s32.totalorder %v198, %v657
        %vm660 = vcmp.eq.s32.totalorder %v199, %v657
        %vm661 = vcmp.eq.s32.totalorder %v200, %v657
        %vm662 = vcmp.eq.s32.totalorder %v201, %v657
        %vm663 = vcmp.eq.s32.totalorder %v202, %v657
        %vm664 = vcmp.eq.s32.totalorder %v203, %v657
        %vm665 = vcmp.eq.s32.totalorder %v204, %v657
        %vm666 = vcmp.eq.s32.totalorder %v205, %v657
        %vm667 = vcmp.eq.s32.totalorder %v206, %v657
        %vm668 = vcmp.eq.s32.totalorder %v207, %v657
        %vm669 = vcmp.eq.s32.totalorder %v208, %v657
        %vm670 = vcmp.eq.s32.totalorder %v209, %v657
        %vm671 = vcmp.eq.s32.totalorder %v210, %v657
        %vm672 = vcmp.eq.s32.totalorder %v211, %v657
        %vm673 = vcmp.eq.s32.totalorder %v212, %v657
        %vm674 = vcmp.eq.s32.totalorder %v213, %v657
        %vm675 = vcmp.eq.s32.totalorder %v214, %v657
        %vm676 = vcmp.eq.s32.totalorder %v215, %v657
        %vm677 = vcmp.eq.s32.totalorder %v216, %v657
        %vm678 = vcmp.eq.s32.totalorder %v217, %v657
        %vm679 = vcmp.eq.s32.totalorder %v218, %v657
        %vm680 = vcmp.eq.s32.totalorder %v219, %v657
        %vm681 = vcmp.eq.s32.totalorder %v220, %v657
        %vm682 = vcmp.eq.s32.totalorder %v221, %v657
        %vm683 = vcmp.eq.s32.totalorder %v222, %v657
        %vm684 = vcmp.eq.s32.totalorder %v223, %v657
        %vm685 = vcmp.eq.s32.totalorder %v224, %v657
        %vm686 = vcmp.eq.s32.totalorder %v225, %v657
        %vm687 = vcmp.eq.s32.totalorder %v226, %v657
        %vm688 = vcmp.eq.s32.totalorder %v227, %v657
        %vm689 = vcmp.eq.s32.totalorder %v228, %v657
        %v690 = vadd.s32 %v230, 160
        %vm691 = vcmp.eq.s32.totalorder %v197, %v690
        %vm692 = vcmp.eq.s32.totalorder %v198, %v690
        %vm693 = vcmp.eq.s32.totalorder %v199, %v690
        %vm694 = vcmp.eq.s32.totalorder %v200, %v690
        %vm695 = vcmp.eq.s32.totalorder %v201, %v690
        %vm696 = vcmp.eq.s32.totalorder %v202, %v690
        %vm697 = vcmp.eq.s32.totalorder %v203, %v690
        %vm698 = vcmp.eq.s32.totalorder %v204, %v690
        %vm699 = vcmp.eq.s32.totalorder %v205, %v690
        %vm700 = vcmp.eq.s32.totalorder %v206, %v690
        %vm701 = vcmp.eq.s32.totalorder %v207, %v690
        %vm702 = vcmp.eq.s32.totalorder %v208, %v690
        %vm703 = vcmp.eq.s32.totalorder %v209, %v690
        %vm704 = vcmp.eq.s32.totalorder %v210, %v690
        %vm705 = vcmp.eq.s32.totalorder %v211, %v690
        %vm706 = vcmp.eq.s32.totalorder %v212, %v690
        %vm707 = vcmp.eq.s32.totalorder %v213, %v690
        %vm708 = vcmp.eq.s32.totalorder %v214, %v690
        %vm709 = vcmp.eq.s32.totalorder %v215, %v690
        %vm710 = vcmp.eq.s32.totalorder %v216, %v690
        %vm711 = vcmp.eq.s32.totalorder %v217, %v690
        %vm712 = vcmp.eq.s32.totalorder %v218, %v690
        %vm713 = vcmp.eq.s32.totalorder %v219, %v690
        %vm714 = vcmp.eq.s32.totalorder %v220, %v690
        %vm715 = vcmp.eq.s32.totalorder %v221, %v690
        %vm716 = vcmp.eq.s32.totalorder %v222, %v690
        %vm717 = vcmp.eq.s32.totalorder %v223, %v690
        %vm718 = vcmp.eq.s32.totalorder %v224, %v690
        %vm719 = vcmp.eq.s32.totalorder %v225, %v690
        %vm720 = vcmp.eq.s32.totalorder %v226, %v690
        %vm721 = vcmp.eq.s32.totalorder %v227, %v690
        %vm722 = vcmp.eq.s32.totalorder %v228, %v690
        %v723 = vadd.s32 %v230, 176
        %vm724 = vcmp.eq.s32.totalorder %v197, %v723
        %vm725 = vcmp.eq.s32.totalorder %v198, %v723
        %vm726 = vcmp.eq.s32.totalorder %v199, %v723
        %vm727 = vcmp.eq.s32.totalorder %v200, %v723
        %vm728 = vcmp.eq.s32.totalorder %v201, %v723
        %vm729 = vcmp.eq.s32.totalorder %v202, %v723
        %vm730 = vcmp.eq.s32.totalorder %v203, %v723
        %vm731 = vcmp.eq.s32.totalorder %v204, %v723
        %vm732 = vcmp.eq.s32.totalorder %v205, %v723
        %vm733 = vcmp.eq.s32.totalorder %v206, %v723
        %vm734 = vcmp.eq.s32.totalorder %v207, %v723
        %vm735 = vcmp.eq.s32.totalorder %v208, %v723
        %vm736 = vcmp.eq.s32.totalorder %v209, %v723
        %vm737 = vcmp.eq.s32.totalorder %v210, %v723
        %vm738 = vcmp.eq.s32.totalorder %v211, %v723
        %vm739 = vcmp.eq.s32.totalorder %v212, %v723
        %vm740 = vcmp.eq.s32.totalorder %v213, %v723
        %vm741 = vcmp.eq.s32.totalorder %v214, %v723
        %vm742 = vcmp.eq.s32.totalorder %v215, %v723
        %vm743 = vcmp.eq.s32.totalorder %v216, %v723
        %vm744 = vcmp.eq.s32.totalorder %v217, %v723
        %vm745 = vcmp.eq.s32.totalorder %v218, %v723
        %vm746 = vcmp.eq.s32.totalorder %v219, %v723
        %vm747 = vcmp.eq.s32.totalorder %v220, %v723
        %vm748 = vcmp.eq.s32.totalorder %v221, %v723
        %vm749 = vcmp.eq.s32.totalorder %v222, %v723
        %vm750 = vcmp.eq.s32.totalorder %v223, %v723
        %vm751 = vcmp.eq.s32.totalorder %v224, %v723
        %vm752 = vcmp.eq.s32.totalorder %v225, %v723
        %vm753 = vcmp.eq.s32.totalorder %v226, %v723
        %vm754 = vcmp.eq.s32.totalorder %v227, %v723
        %vm755 = vcmp.eq.s32.totalorder %v228, %v723
        %v756 = vadd.s32 %v230, 192
        %vm757 = vcmp.eq.s32.totalorder %v197, %v756
        %vm758 = vcmp.eq.s32.totalorder %v198, %v756
        %vm759 = vcmp.eq.s32.totalorder %v199, %v756
        %vm760 = vcmp.eq.s32.totalorder %v200, %v756
        %vm761 = vcmp.eq.s32.totalorder %v201, %v756
        %vm762 = vcmp.eq.s32.totalorder %v202, %v756
        %vm763 = vcmp.eq.s32.totalorder %v203, %v756
        %vm764 = vcmp.eq.s32.totalorder %v204, %v756
        %vm765 = vcmp.eq.s32.totalorder %v205, %v756
        %vm766 = vcmp.eq.s32.totalorder %v206, %v756
        %vm767 = vcmp.eq.s32.totalorder %v207, %v756
        %vm768 = vcmp.eq.s32.totalorder %v208, %v756
        %vm769 = vcmp.eq.s32.totalorder %v209, %v756
        %vm770 = vcmp.eq.s32.totalorder %v210, %v756
        %vm771 = vcmp.eq.s32.totalorder %v211, %v756
        %vm772 = vcmp.eq.s32.totalorder %v212, %v756
        %vm773 = vcmp.eq.s32.totalorder %v213, %v756
        %vm774 = vcmp.eq.s32.totalorder %v214, %v756
        %vm775 = vcmp.eq.s32.totalorder %v215, %v756
        %vm776 = vcmp.eq.s32.totalorder %v216, %v756
        %vm777 = vcmp.eq.s32.totalorder %v217, %v756
        %vm778 = vcmp.eq.s32.totalorder %v218, %v756
        %vm779 = vcmp.eq.s32.totalorder %v219, %v756
        %vm780 = vcmp.eq.s32.totalorder %v220, %v756
        %vm781 = vcmp.eq.s32.totalorder %v221, %v756
        %vm782 = vcmp.eq.s32.totalorder %v222, %v756
        %vm783 = vcmp.eq.s32.totalorder %v223, %v756
        %vm784 = vcmp.eq.s32.totalorder %v224, %v756
        %vm785 = vcmp.eq.s32.totalorder %v225, %v756
        %vm786 = vcmp.eq.s32.totalorder %v226, %v756
        %vm787 = vcmp.eq.s32.totalorder %v227, %v756
        %vm788 = vcmp.eq.s32.totalorder %v228, %v756
        %v789 = vadd.s32 %v230, 208
        %vm790 = vcmp.eq.s32.totalorder %v197, %v789
        %vm791 = vcmp.eq.s32.totalorder %v198, %v789
        %vm792 = vcmp.eq.s32.totalorder %v199, %v789
        %vm793 = vcmp.eq.s32.totalorder %v200, %v789
        %vm794 = vcmp.eq.s32.totalorder %v201, %v789
        %vm795 = vcmp.eq.s32.totalorder %v202, %v789
        %vm796 = vcmp.eq.s32.totalorder %v203, %v789
        %vm797 = vcmp.eq.s32.totalorder %v204, %v789
        %vm798 = vcmp.eq.s32.totalorder %v205, %v789
        %vm799 = vcmp.eq.s32.totalorder %v206, %v789
        %vm800 = vcmp.eq.s32.totalorder %v207, %v789
        %vm801 = vcmp.eq.s32.totalorder %v208, %v789
        %vm802 = vcmp.eq.s32.totalorder %v209, %v789
        %vm803 = vcmp.eq.s32.totalorder %v210, %v789
        %vm804 = vcmp.eq.s32.totalorder %v211, %v789
        %vm805 = vcmp.eq.s32.totalorder %v212, %v789
        %vm806 = vcmp.eq.s32.totalorder %v213, %v789
        %vm807 = vcmp.eq.s32.totalorder %v214, %v789
        %vm808 = vcmp.eq.s32.totalorder %v215, %v789
        %vm809 = vcmp.eq.s32.totalorder %v216, %v789
        %vm810 = vcmp.eq.s32.totalorder %v217, %v789
        %vm811 = vcmp.eq.s32.totalorder %v218, %v789
        %vm812 = vcmp.eq.s32.totalorder %v219, %v789
        %vm813 = vcmp.eq.s32.totalorder %v220, %v789
        %vm814 = vcmp.eq.s32.totalorder %v221, %v789
        %vm815 = vcmp.eq.s32.totalorder %v222, %v789
        %vm816 = vcmp.eq.s32.totalorder %v223, %v789
        %vm817 = vcmp.eq.s32.totalorder %v224, %v789
        %vm818 = vcmp.eq.s32.totalorder %v225, %v789
        %vm819 = vcmp.eq.s32.totalorder %v226, %v789
        %vm820 = vcmp.eq.s32.totalorder %v227, %v789
        %vm821 = vcmp.eq.s32.totalorder %v228, %v789
        %v822 = vadd.s32 %v230, 224
        %vm823 = vcmp.eq.s32.totalorder %v197, %v822
        %vm824 = vcmp.eq.s32.totalorder %v198, %v822
        %vm825 = vcmp.eq.s32.totalorder %v199, %v822
        %vm826 = vcmp.eq.s32.totalorder %v200, %v822
        %vm827 = vcmp.eq.s32.totalorder %v201, %v822
        %vm828 = vcmp.eq.s32.totalorder %v202, %v822
        %vm829 = vcmp.eq.s32.totalorder %v203, %v822
        %vm830 = vcmp.eq.s32.totalorder %v204, %v822
        %vm831 = vcmp.eq.s32.totalorder %v205, %v822
        %vm832 = vcmp.eq.s32.totalorder %v206, %v822
        %vm833 = vcmp.eq.s32.totalorder %v207, %v822
        %vm834 = vcmp.eq.s32.totalorder %v208, %v822
        %vm835 = vcmp.eq.s32.totalorder %v209, %v822
        %vm836 = vcmp.eq.s32.totalorder %v210, %v822
        %vm837 = vcmp.eq.s32.totalorder %v211, %v822
        %vm838 = vcmp.eq.s32.totalorder %v212, %v822
        %vm839 = vcmp.eq.s32.totalorder %v213, %v822
        %vm840 = vcmp.eq.s32.totalorder %v214, %v822
        %vm841 = vcmp.eq.s32.totalorder %v215, %v822
        %vm842 = vcmp.eq.s32.totalorder %v216, %v822
        %vm843 = vcmp.eq.s32.totalorder %v217, %v822
        %vm844 = vcmp.eq.s32.totalorder %v218, %v822
        %vm845 = vcmp.eq.s32.totalorder %v219, %v822
        %vm846 = vcmp.eq.s32.totalorder %v220, %v822
        %vm847 = vcmp.eq.s32.totalorder %v221, %v822
        %vm848 = vcmp.eq.s32.totalorder %v222, %v822
        %vm849 = vcmp.eq.s32.totalorder %v223, %v822
        %vm850 = vcmp.eq.s32.totalorder %v224, %v822
        %vm851 = vcmp.eq.s32.totalorder %v225, %v822
        %vm852 = vcmp.eq.s32.totalorder %v226, %v822
        %vm853 = vcmp.eq.s32.totalorder %v227, %v822
        %vm854 = vcmp.eq.s32.totalorder %v228, %v822
        %v855 = vadd.s32 %v230, 240
        %vm856 = vcmp.eq.s32.totalorder %v197, %v855
        %vm857 = vcmp.eq.s32.totalorder %v198, %v855
        %vm858 = vcmp.eq.s32.totalorder %v199, %v855
        %vm859 = vcmp.eq.s32.totalorder %v200, %v855
        %vm860 = vcmp.eq.s32.totalorder %v201, %v855
        %vm861 = vcmp.eq.s32.totalorder %v202, %v855
        %vm862 = vcmp.eq.s32.totalorder %v203, %v855
        %vm863 = vcmp.eq.s32.totalorder %v204, %v855
        %vm864 = vcmp.eq.s32.totalorder %v205, %v855
        %vm865 = vcmp.eq.s32.totalorder %v206, %v855
        %vm866 = vcmp.eq.s32.totalorder %v207, %v855
        %vm867 = vcmp.eq.s32.totalorder %v208, %v855
        %vm868 = vcmp.eq.s32.totalorder %v209, %v855
        %vm869 = vcmp.eq.s32.totalorder %v210, %v855
        %vm870 = vcmp.eq.s32.totalorder %v211, %v855
        %vm871 = vcmp.eq.s32.totalorder %v212, %v855
        %vm872 = vcmp.eq.s32.totalorder %v213, %v855
        %vm873 = vcmp.eq.s32.totalorder %v214, %v855
        %vm874 = vcmp.eq.s32.totalorder %v215, %v855
        %vm875 = vcmp.eq.s32.totalorder %v216, %v855
        %vm876 = vcmp.eq.s32.totalorder %v217, %v855
        %vm877 = vcmp.eq.s32.totalorder %v218, %v855
        %vm878 = vcmp.eq.s32.totalorder %v219, %v855
        %vm879 = vcmp.eq.s32.totalorder %v220, %v855
        %vm880 = vcmp.eq.s32.totalorder %v221, %v855
        %vm881 = vcmp.eq.s32.totalorder %v222, %v855
        %vm882 = vcmp.eq.s32.totalorder %v223, %v855
        %vm883 = vcmp.eq.s32.totalorder %v224, %v855
        %vm884 = vcmp.eq.s32.totalorder %v225, %v855
        %vm885 = vcmp.eq.s32.totalorder %v226, %v855
        %vm886 = vcmp.eq.s32.totalorder %v227, %v855
        %vm887 = vcmp.eq.s32.totalorder %v228, %v855
        %vm888 = vmor %vm361, %vm394
        %vm889 = vmor %vm362, %vm395
        %vm890 = vmor %vm363, %vm396
        %vm891 = vmor %vm364, %vm397
        %vm892 = vmor %vm365, %vm398
        %vm893 = vmor %vm366, %vm399
        %vm894 = vmor %vm367, %vm400
        %vm895 = vmor %vm368, %vm401
        %vm896 = vmor %vm369, %vm402
        %vm897 = vmor %vm370, %vm403
        %vm898 = vmor %vm371, %vm404
        %vm899 = vmor %vm372, %vm405
        %vm900 = vmor %vm373, %vm406
        %vm901 = vmor %vm374, %vm407
        %vm902 = vmor %vm375, %vm408
        %vm903 = vmor %vm376, %vm409
        %vm904 = vmor %vm377, %vm410
        %vm905 = vmor %vm378, %vm411
        %vm906 = vmor %vm379, %vm412
        %vm907 = vmor %vm380, %vm413
        %vm908 = vmor %vm381, %vm414
        %vm909 = vmor %vm382, %vm415
        %vm910 = vmor %vm383, %vm416
        %vm911 = vmor %vm384, %vm417
        %vm912 = vmor %vm385, %vm418
        %vm913 = vmor %vm386, %vm419
        %vm914 = vmor %vm387, %vm420
        %vm915 = vmor %vm388, %vm421
        %vm916 = vmor %vm389, %vm422
        %vm917 = vmor %vm390, %vm423
        %vm918 = vmor %vm391, %vm424
        %vm919 = vmor %vm392, %vm425
        %vm920 = vmor %vm888, %vm427
        %vm921 = vmor %vm889, %vm428
        %vm922 = vmor %vm890, %vm429
        %vm923 = vmor %vm891, %vm430
        %vm924 = vmor %vm892, %vm431
        %vm925 = vmor %vm893, %vm432
        %vm926 = vmor %vm894, %vm433
        %vm927 = vmor %vm895, %vm434
        %vm928 = vmor %vm896, %vm435
        %vm929 = vmor %vm897, %vm436
        %vm930 = vmor %vm898, %vm437
        %vm931 = vmor %vm899, %vm438
        %vm932 = vmor %vm900, %vm439
        %vm933 = vmor %vm901, %vm440
        %vm934 = vmor %vm902, %vm441
        %vm935 = vmor %vm903, %vm442
        %vm936 = vmor %vm904, %vm443
        %vm937 = vmor %vm905, %vm444
        %vm938 = vmor %vm906, %vm445
        %vm939 = vmor %vm907, %vm446
        %vm940 = vmor %vm908, %vm447
        %vm941 = vmor %vm909, %vm448
        %vm942 = vmor %vm910, %vm449
        %vm943 = vmor %vm911, %vm450
        %vm944 = vmor %vm912, %vm451
        %vm945 = vmor %vm913, %vm452
        %vm946 = vmor %vm914, %vm453
        %vm947 = vmor %vm915, %vm454
        %vm948 = vmor %vm916, %vm455
        %vm949 = vmor %vm917, %vm456
        %vm950 = vmor %vm918, %vm457
        %vm951 = vmor %vm919, %vm458
        %vm952 = vmor %vm920, %vm460
        %vm953 = vmor %vm921, %vm461
        %vm954 = vmor %vm922, %vm462
        %vm955 = vmor %vm923, %vm463
        %vm956 = vmor %vm924, %vm464
        %vm957 = vmor %vm925, %vm465
        %vm958 = vmor %vm926, %vm466
        %vm959 = vmor %vm927, %vm467
        %vm960 = vmor %vm928, %vm468
        %vm961 = vmor %vm929, %vm469
        %vm962 = vmor %vm930, %vm470
        %vm963 = vmor %vm931, %vm471
        %vm964 = vmor %vm932, %vm472
        %vm965 = vmor %vm933, %vm473
        %vm966 = vmor %vm934, %vm474
        %vm967 = vmor %vm935, %vm475
        %vm968 = vmor %vm936, %vm476
        %vm969 = vmor %vm937, %vm477
        %vm970 = vmor %vm938, %vm478
        %vm971 = vmor %vm939, %vm479
        %vm972 = vmor %vm940, %vm480
        %vm973 = vmor %vm941, %vm481
        %vm974 = vmor %vm942, %vm482
        %vm975 = vmor %vm943, %vm483
        %vm976 = vmor %vm944, %vm484
        %vm977 = vmor %vm945, %vm485
        %vm978 = vmor %vm946, %vm486
        %vm979 = vmor %vm947, %vm487
        %vm980 = vmor %vm948, %vm488
        %vm981 = vmor %vm949, %vm489
        %vm982 = vmor %vm950, %vm490
        %vm983 = vmor %vm951, %vm491
        %vm984 = vmor %vm952, %vm493
        %vm985 = vmor %vm953, %vm494
        %vm986 = vmor %vm954, %vm495
        %vm987 = vmor %vm955, %vm496
        %vm988 = vmor %vm956, %vm497
        %vm989 = vmor %vm957, %vm498
        %vm990 = vmor %vm958, %vm499
        %vm991 = vmor %vm959, %vm500
        %vm992 = vmor %vm960, %vm501
        %vm993 = vmor %vm961, %vm502
        %vm994 = vmor %vm962, %vm503
        %vm995 = vmor %vm963, %vm504
        %vm996 = vmor %vm964, %vm505
        %vm997 = vmor %vm965, %vm506
        %vm998 = vmor %vm966, %vm507
        %vm999 = vmor %vm967, %vm508
        %vm1000 = vmor %vm968, %vm509
        %vm1001 = vmor %vm969, %vm510
        %vm1002 = vmor %vm970, %vm511
        %vm1003 = vmor %vm971, %vm512
        %vm1004 = vmor %vm972, %vm513
        %vm1005 = vmor %vm973, %vm514
        %vm1006 = vmor %vm974, %vm515
        %vm1007 = vmor %vm975, %vm516
        %vm1008 = vmor %vm976, %vm517
        %vm1009 = vmor %vm977, %vm518
        %vm1010 = vmor %vm978, %vm519
        %vm1011 = vmor %vm979, %vm520
        %vm1012 = vmor %vm980, %vm521
        %vm1013 = vmor %vm981, %vm522
        %vm1014 = vmor %vm982, %vm523
        %vm1015 = vmor %vm983, %vm524
        %vm1016 = vmor %vm984, %vm526
        %vm1017 = vmor %vm985, %vm527
        %vm1018 = vmor %vm986, %vm528
        %vm1019 = vmor %vm987, %vm529
        %vm1020 = vmor %vm988, %vm530
        %vm1021 = vmor %vm989, %vm531
        %vm1022 = vmor %vm990, %vm532
        %vm1023 = vmor %vm991, %vm533
        %vm1024 = vmor %vm992, %vm534
        %vm1025 = vmor %vm993, %vm535
        %vm1026 = vmor %vm994, %vm536
        %vm1027 = vmor %vm995, %vm537
        %vm1028 = vmor %vm996, %vm538
        %vm1029 = vmor %vm997, %vm539
        %vm1030 = vmor %vm998, %vm540
        %vm1031 = vmor %vm999, %vm541
        %vm1032 = vmor %vm1000, %vm542
        %vm1033 = vmor %vm1001, %vm543
        %vm1034 = vmor %vm1002, %vm544
        %vm1035 = vmor %vm1003, %vm545
        %vm1036 = vmor %vm1004, %vm546
        %vm1037 = vmor %vm1005, %vm547
        %vm1038 = vmor %vm1006, %vm548
        %vm1039 = vmor %vm1007, %vm549
        %vm1040 = vmor %vm1008, %vm550
        %vm1041 = vmor %vm1009, %vm551
        %vm1042 = vmor %vm1010, %vm552
        %vm1043 = vmor %vm1011, %vm553
        %vm1044 = vmor %vm1012, %vm554
        %vm1045 = vmor %vm1013, %vm555
        %vm1046 = vmor %vm1014, %vm556
        %vm1047 = vmor %vm1015, %vm557
        %vm1048 = vmor %vm1016, %vm559
        %vm1049 = vmor %vm1017, %vm560
        %vm1050 = vmor %vm1018, %vm561
        %vm1051 = vmor %vm1019, %vm562
        %vm1052 = vmor %vm1020, %vm563
        %vm1053 = vmor %vm1021, %vm564
        %vm1054 = vmor %vm1022, %vm565
        %vm1055 = vmor %vm1023, %vm566
        %vm1056 = vmor %vm1024, %vm567
        %vm1057 = vmor %vm1025, %vm568
        %vm1058 = vmor %vm1026, %vm569
        %vm1059 = vmor %vm1027, %vm570
        %vm1060 = vmor %vm1028, %vm571
        %vm1061 = vmor %vm1029, %vm572
        %vm1062 = vmor %vm1030, %vm573
        %vm1063 = vmor %vm1031, %vm574
        %vm1064 = vmor %vm1032, %vm575
        %vm1065 = vmor %vm1033, %vm576
        %vm1066 = vmor %vm1034, %vm577
        %vm1067 = vmor %vm1035, %vm578
        %vm1068 = vmor %vm1036, %vm579
        %vm1069 = vmor %vm1037, %vm580
        %vm1070 = vmor %vm1038, %vm581
        %vm1071 = vmor %vm1039, %vm582
        %vm1072 = vmor %vm1040, %vm583
        %vm1073 = vmor %vm1041, %vm584
        %vm1074 = vmor %vm1042, %vm585
        %vm1075 = vmor %vm1043, %vm586
        %vm1076 = vmor %vm1044, %vm587
        %vm1077 = vmor %vm1045, %vm588
        %vm1078 = vmor %vm1046, %vm589
        %vm1079 = vmor %vm1047, %vm590
        %vm1080 = vmor %vm1048, %vm592
        %vm1081 = vmor %vm1049, %vm593
        %vm1082 = vmor %vm1050, %vm594
        %vm1083 = vmor %vm1051, %vm595
        %vm1084 = vmor %vm1052, %vm596
        %vm1085 = vmor %vm1053, %vm597
        %vm1086 = vmor %vm1054, %vm598
        %vm1087 = vmor %vm1055, %vm599
        %vm1088 = vmor %vm1056, %vm600
        %vm1089 = vmor %vm1057, %vm601
        %vm1090 = vmor %vm1058, %vm602
        %vm1091 = vmor %vm1059, %vm603
        %vm1092 = vmor %vm1060, %vm604
        %vm1093 = vmor %vm1061, %vm605
        %vm1094 = vmor %vm1062, %vm606
        %vm1095 = vmor %vm1063, %vm607
        %vm1096 = vmor %vm1064, %vm608
        %vm1097 = vmor %vm1065, %vm609
        %vm1098 = vmor %vm1066, %vm610
        %vm1099 = vmor %vm1067, %vm611
        %vm1100 = vmor %vm1068, %vm612
        %vm1101 = vmor %vm1069, %vm613
        %vm1102 = vmor %vm1070, %vm614
        %vm1103 = vmor %vm1071, %vm615
        %vm1104 = vmor %vm1072, %vm616
        %vm1105 = vmor %vm1073, %vm617
        %vm1106 = vmor %vm1074, %vm618
        %vm1107 = vmor %vm1075, %vm619
        %vm1108 = vmor %vm1076, %vm620
        %vm1109 = vmor %vm1077, %vm621
        %vm1110 = vmor %vm1078, %vm622
        %vm1111 = vmor %vm1079, %vm623
        %vm1112 = vmor %vm1080, %vm625
        %vm1113 = vmor %vm1081, %vm626
        %vm1114 = vmor %vm1082, %vm627
        %vm1115 = vmor %vm1083, %vm628
        %vm1116 = vmor %vm1084, %vm629
        %vm1117 = vmor %vm1085, %vm630
        %vm1118 = vmor %vm1086, %vm631
        %vm1119 = vmor %vm1087, %vm632
        %vm1120 = vmor %vm1088, %vm633
        %vm1121 = vmor %vm1089, %vm634
        %vm1122 = vmor %vm1090, %vm635
        %vm1123 = vmor %vm1091, %vm636
        %vm1124 = vmor %vm1092, %vm637
        %vm1125 = vmor %vm1093, %vm638
        %vm1126 = vmor %vm1094, %vm639
        %vm1127 = vmor %vm1095, %vm640
        %vm1128 = vmor %vm1096, %vm641
        %vm1129 = vmor %vm1097, %vm642
        %vm1130 = vmor %vm1098, %vm643
        %vm1131 = vmor %vm1099, %vm644
        %vm1132 = vmor %vm1100, %vm645
        %vm1133 = vmor %vm1101, %vm646
        %vm1134 = vmor %vm1102, %vm647
        %vm1135 = vmor %vm1103, %vm648
        %vm1136 = vmor %vm1104, %vm649
        %vm1137 = vmor %vm1105, %vm650
        %vm1138 = vmor %vm1106, %vm651
        %vm1139 = vmor %vm1107, %vm652
        %vm1140 = vmor %vm1108, %vm653
        %vm1141 = vmor %vm1109, %vm654
        %vm1142 = vmor %vm1110, %vm655
        %vm1143 = vmor %vm1111, %vm656
        %vm1144 = vmor %vm1112, %vm658
        %vm1145 = vmor %vm1113, %vm659
        %vm1146 = vmor %vm1114, %vm660
        %vm1147 = vmor %vm1115, %vm661
        %vm1148 = vmor %vm1116, %vm662
        %vm1149 = vmor %vm1117, %vm663
        %vm1150 = vmor %vm1118, %vm664
        %vm1151 = vmor %vm1119, %vm665
        %vm1152 = vmor %vm1120, %vm666
        %vm1153 = vmor %vm1121, %vm667
        %vm1154 = vmor %vm1122, %vm668
        %vm1155 = vmor %vm1123, %vm669
        %vm1156 = vmor %vm1124, %vm670
        %vm1157 = vmor %vm1125, %vm671
        %vm1158 = vmor %vm1126, %vm672
        %vm1159 = vmor %vm1127, %vm673
        %vm1160 = vmor %vm1128, %vm674
        %vm1161 = vmor %vm1129, %vm675
        %vm1162 = vmor %vm1130, %vm676
        %vm1163 = vmor %vm1131, %vm677
        %vm1164 = vmor %vm1132, %vm678
        %vm1165 = vmor %vm1133, %vm679
        %vm1166 = vmor %vm1134, %vm680
        %vm1167 = vmor %vm1135, %vm681
        %vm1168 = vmor %vm1136, %vm682
        %vm1169 = vmor %vm1137, %vm683
        %vm1170 = vmor %vm1138, %vm684
        %vm1171 = vmor %vm1139, %vm685
        %vm1172 = vmor %vm1140, %vm686
        %vm1173 = vmor %vm1141, %vm687
        %vm1174 = vmor %vm1142, %vm688
        %vm1175 = vmor %vm1143, %vm689
        %vm1176 = vmor %vm1144, %vm691
        %vm1177 = vmor %vm1145, %vm692
        %vm1178 = vmor %vm1146, %vm693
        %vm1179 = vmor %vm1147, %vm694
        %vm1180 = vmor %vm1148, %vm695
        %vm1181 = vmor %vm1149, %vm696
        %vm1182 = vmor %vm1150, %vm697
        %vm1183 = vmor %vm1151, %vm698
        %vm1184 = vmor %vm1152, %vm699
        %vm1185 = vmor %vm1153, %vm700
        %vm1186 = vmor %vm1154, %vm701
        %vm1187 = vmor %vm1155, %vm702
        %vm1188 = vmor %vm1156, %vm703
        %vm1189 = vmor %vm1157, %vm704
        %vm1190 = vmor %vm1158, %vm705
        %vm1191 = vmor %vm1159, %vm706
        %vm1192 = vmor %vm1160, %vm707
        %vm1193 = vmor %vm1161, %vm708
        %vm1194 = vmor %vm1162, %vm709
        %vm1195 = vmor %vm1163, %vm710
        %vm1196 = vmor %vm1164, %vm711
        %vm1197 = vmor %vm1165, %vm712
        %vm1198 = vmor %vm1166, %vm713
        %vm1199 = vmor %vm1167, %vm714
        %vm1200 = vmor %vm1168, %vm715
        %vm1201 = vmor %vm1169, %vm716
        %vm1202 = vmor %vm1170, %vm717
        %vm1203 = vmor %vm1171, %vm718
        %vm1204 = vmor %vm1172, %vm719
        %vm1205 = vmor %vm1173, %vm720
        %vm1206 = vmor %vm1174, %vm721
        %vm1207 = vmor %vm1175, %vm722
        %vm1208 = vmor %vm1176, %vm724
        %vm1209 = vmor %vm1177, %vm725
        %vm1210 = vmor %vm1178, %vm726
        %vm1211 = vmor %vm1179, %vm727
        %vm1212 = vmor %vm1180, %vm728
        %vm1213 = vmor %vm1181, %vm729
        %vm1214 = vmor %vm1182, %vm730
        %vm1215 = vmor %vm1183, %vm731
        %vm1216 = vmor %vm1184, %vm732
        %vm1217 = vmor %vm1185, %vm733
        %vm1218 = vmor %vm1186, %vm734
        %vm1219 = vmor %vm1187, %vm735
        %vm1220 = vmor %vm1188, %vm736
        %vm1221 = vmor %vm1189, %vm737
        %vm1222 = vmor %vm1190, %vm738
        %vm1223 = vmor %vm1191, %vm739
        %vm1224 = vmor %vm1192, %vm740
        %vm1225 = vmor %vm1193, %vm741
        %vm1226 = vmor %vm1194, %vm742
        %vm1227 = vmor %vm1195, %vm743
        %vm1228 = vmor %vm1196, %vm744
        %vm1229 = vmor %vm1197, %vm745
        %vm1230 = vmor %vm1198, %vm746
        %vm1231 = vmor %vm1199, %vm747
        %vm1232 = vmor %vm1200, %vm748
        %vm1233 = vmor %vm1201, %vm749
        %vm1234 = vmor %vm1202, %vm750
        %vm1235 = vmor %vm1203, %vm751
        %vm1236 = vmor %vm1204, %vm752
        %vm1237 = vmor %vm1205, %vm753
        %vm1238 = vmor %vm1206, %vm754
        %vm1239 = vmor %vm1207, %vm755
        %vm1240 = vmor %vm1208, %vm757
        %vm1241 = vmor %vm1209, %vm758
        %vm1242 = vmor %vm1210, %vm759
        %vm1243 = vmor %vm1211, %vm760
        %vm1244 = vmor %vm1212, %vm761
        %vm1245 = vmor %vm1213, %vm762
        %vm1246 = vmor %vm1214, %vm763
        %vm1247 = vmor %vm1215, %vm764
        %vm1248 = vmor %vm1216, %vm765
        %vm1249 = vmor %vm1217, %vm766
        %vm1250 = vmor %vm1218, %vm767
        %vm1251 = vmor %vm1219, %vm768
        %vm1252 = vmor %vm1220, %vm769
        %vm1253 = vmor %vm1221, %vm770
        %vm1254 = vmor %vm1222, %vm771
        %vm1255 = vmor %vm1223, %vm772
        %vm1256 = vmor %vm1224, %vm773
        %vm1257 = vmor %vm1225, %vm774
        %vm1258 = vmor %vm1226, %vm775
        %vm1259 = vmor %vm1227, %vm776
        %vm1260 = vmor %vm1228, %vm777
        %vm1261 = vmor %vm1229, %vm778
        %vm1262 = vmor %vm1230, %vm779
        %vm1263 = vmor %vm1231, %vm780
        %vm1264 = vmor %vm1232, %vm781
        %vm1265 = vmor %vm1233, %vm782
        %vm1266 = vmor %vm1234, %vm783
        %vm1267 = vmor %vm1235, %vm784
        %vm1268 = vmor %vm1236, %vm785
        %vm1269 = vmor %vm1237, %vm786
        %vm1270 = vmor %vm1238, %vm787
        %vm1271 = vmor %vm1239, %vm788
        %vm1272 = vmor %vm1240, %vm790
        %vm1273 = vmor %vm1241, %vm791
        %vm1274 = vmor %vm1242, %vm792
        %vm1275 = vmor %vm1243, %vm793
        %vm1276 = vmor %vm1244, %vm794
        %vm1277 = vmor %vm1245, %vm795
        %vm1278 = vmor %vm1246, %vm796
        %vm1279 = vmor %vm1247, %vm797
        %vm1280 = vmor %vm1248, %vm798
        %vm1281 = vmor %vm1249, %vm799
        %vm1282 = vmor %vm1250, %vm800
        %vm1283 = vmor %vm1251, %vm801
        %vm1284 = vmor %vm1252, %vm802
        %vm1285 = vmor %vm1253, %vm803
        %vm1286 = vmor %vm1254, %vm804
        %vm1287 = vmor %vm1255, %vm805
        %vm1288 = vmor %vm1256, %vm806
        %vm1289 = vmor %vm1257, %vm807
        %vm1290 = vmor %vm1258, %vm808
        %vm1291 = vmor %vm1259, %vm809
        %vm1292 = vmor %vm1260, %vm810
        %vm1293 = vmor %vm1261, %vm811
        %vm1294 = vmor %vm1262, %vm812
        %vm1295 = vmor %vm1263, %vm813
        %vm1296 = vmor %vm1264, %vm814
        %vm1297 = vmor %vm1265, %vm815
        %vm1298 = vmor %vm1266, %vm816
        %vm1299 = vmor %vm1267, %vm817
        %vm1300 = vmor %vm1268, %vm818
        %vm1301 = vmor %vm1269, %vm819
        %vm1302 = vmor %vm1270, %vm820
        %vm1303 = vmor %vm1271, %vm821
        %vm1304 = vmor %vm1272, %vm823
        %vm1305 = vmor %vm1273, %vm824
        %vm1306 = vmor %vm1274, %vm825
        %vm1307 = vmor %vm1275, %vm826
        %vm1308 = vmor %vm1276, %vm827
        %vm1309 = vmor %vm1277, %vm828
        %vm1310 = vmor %vm1278, %vm829
        %vm1311 = vmor %vm1279, %vm830
        %vm1312 = vmor %vm1280, %vm831
        %vm1313 = vmor %vm1281, %vm832
        %vm1314 = vmor %vm1282, %vm833
        %vm1315 = vmor %vm1283, %vm834
        %vm1316 = vmor %vm1284, %vm835
        %vm1317 = vmor %vm1285, %vm836
        %vm1318 = vmor %vm1286, %vm837
        %vm1319 = vmor %vm1287, %vm838
        %vm1320 = vmor %vm1288, %vm839
        %vm1321 = vmor %vm1289, %vm840
        %vm1322 = vmor %vm1290, %vm841
        %vm1323 = vmor %vm1291, %vm842
        %vm1324 = vmor %vm1292, %vm843
        %vm1325 = vmor %vm1293, %vm844
        %vm1326 = vmor %vm1294, %vm845
        %vm1327 = vmor %vm1295, %vm846
        %vm1328 = vmor %vm1296, %vm847
        %vm1329 = vmor %vm1297, %vm848
        %vm1330 = vmor %vm1298, %vm849
        %vm1331 = vmor %vm1299, %vm850
        %vm1332 = vmor %vm1300, %vm851
        %vm1333 = vmor %vm1301, %vm852
        %vm1334 = vmor %vm1302, %vm853
        %vm1335 = vmor %vm1303, %vm854
        %vm1336 = vmor %vm1304, %vm856
        %vm1337 = vmor %vm1305, %vm857
        %vm1338 = vmor %vm1306, %vm858
        %vm1339 = vmor %vm1307, %vm859
        %vm1340 = vmor %vm1308, %vm860
        %vm1341 = vmor %vm1309, %vm861
        %vm1342 = vmor %vm1310, %vm862
        %vm1343 = vmor %vm1311, %vm863
        %vm1344 = vmor %vm1312, %vm864
        %vm1345 = vmor %vm1313, %vm865
        %vm1346 = vmor %vm1314, %vm866
        %vm1347 = vmor %vm1315, %vm867
        %vm1348 = vmor %vm1316, %vm868
        %vm1349 = vmor %vm1317, %vm869
        %vm1350 = vmor %vm1318, %vm870
        %vm1351 = vmor %vm1319, %vm871
        %vm1352 = vmor %vm1320, %vm872
        %vm1353 = vmor %vm1321, %vm873
        %vm1354 = vmor %vm1322, %vm874
        %vm1355 = vmor %vm1323, %vm875
        %vm1356 = vmor %vm1324, %vm876
        %vm1357 = vmor %vm1325, %vm877
        %vm1358 = vmor %vm1326, %vm878
        %vm1359 = vmor %vm1327, %vm879
        %vm1360 = vmor %vm1328, %vm880
        %vm1361 = vmor %vm1329, %vm881
        %vm1362 = vmor %vm1330, %vm882
        %vm1363 = vmor %vm1331, %vm883
        %vm1364 = vmor %vm1332, %vm884
        %vm1365 = vmor %vm1333, %vm885
        %vm1366 = vmor %vm1334, %vm886
        %vm1367 = vmor %vm1335, %vm887
        %v1368 = vsel %vm1336, 1.0, 0.0
        %v1369 = vsel %vm1337, 1.0, 0.0
        %v1370 = vsel %vm1338, 1.0, 0.0
        %v1371 = vsel %vm1339, 1.0, 0.0
        %v1372 = vsel %vm1340, 1.0, 0.0
        %v1373 = vsel %vm1341, 1.0, 0.0
        %v1374 = vsel %vm1342, 1.0, 0.0
        %v1375 = vsel %vm1343, 1.0, 0.0
        %v1376 = vsel %vm1344, 1.0, 0.0
        %v1377 = vsel %vm1345, 1.0, 0.0
        %v1378 = vsel %vm1346, 1.0, 0.0
        %v1379 = vsel %vm1347, 1.0, 0.0
        %v1380 = vsel %vm1348, 1.0, 0.0
        %v1381 = vsel %vm1349, 1.0, 0.0
        %v1382 = vsel %vm1350, 1.0, 0.0
        %v1383 = vsel %vm1351, 1.0, 0.0
        %v1384 = vsel %vm1352, 1.0, 0.0
        %v1385 = vsel %vm1353, 1.0, 0.0
        %v1386 = vsel %vm1354, 1.0, 0.0
        %v1387 = vsel %vm1355, 1.0, 0.0
        %v1388 = vsel %vm1356, 1.0, 0.0
        %v1389 = vsel %vm1357, 1.0, 0.0
        %v1390 = vsel %vm1358, 1.0, 0.0
        %v1391 = vsel %vm1359, 1.0, 0.0
        %v1392 = vsel %vm1360, 1.0, 0.0
        %v1393 = vsel %vm1361, 1.0, 0.0
        %v1394 = vsel %vm1362, 1.0, 0.0
        %v1395 = vsel %vm1363, 1.0, 0.0
        %v1396 = vsel %vm1364, 1.0, 0.0
        %v1397 = vsel %vm1365, 1.0, 0.0
        %v1398 = vsel %vm1366, 1.0, 0.0
        %v1399 = vsel %vm1367, 1.0, 0.0
        %v1400 = vmul.u32 %v197, 16
        %v1401 = vmul.u32 %v198, 16
        %v1402 = vmul.u32 %v199, 16
        %v1403 = vmul.u32 %v200, 16
        %v1404 = vmul.u32 %v201, 16
        %v1405 = vmul.u32 %v202, 16
        %v1406 = vmul.u32 %v203, 16
        %v1407 = vmul.u32 %v204, 16
        %v1408 = vmul.u32 %v205, 16
        %v1409 = vmul.u32 %v206, 16
        %v1410 = vmul.u32 %v207, 16
        %v1411 = vmul.u32 %v208, 16
        %v1412 = vmul.u32 %v209, 16
        %v1413 = vmul.u32 %v210, 16
        %v1414 = vmul.u32 %v211, 16
        %v1415 = vmul.u32 %v212, 16
        %vm1416 = vcmp.ge.s32.totalorder %v230, %v1400
        %vm1417 = vcmp.ge.s32.totalorder %v624, %v1400
        %vm1418 = vcmp.ge.s32.totalorder %v230, %v1401
        %vm1419 = vcmp.ge.s32.totalorder %v624, %v1401
        %vm1420 = vcmp.ge.s32.totalorder %v230, %v1402
        %vm1421 = vcmp.ge.s32.totalorder %v624, %v1402
        %vm1422 = vcmp.ge.s32.totalorder %v230, %v1403
        %vm1423 = vcmp.ge.s32.totalorder %v624, %v1403
        %vm1424 = vcmp.ge.s32.totalorder %v230, %v1404
        %vm1425 = vcmp.ge.s32.totalorder %v624, %v1404
        %vm1426 = vcmp.ge.s32.totalorder %v230, %v1405
        %vm1427 = vcmp.ge.s32.totalorder %v624, %v1405
        %vm1428 = vcmp.ge.s32.totalorder %v230, %v1406
        %vm1429 = vcmp.ge.s32.totalorder %v624, %v1406
        %vm1430 = vcmp.ge.s32.totalorder %v230, %v1407
        %vm1431 = vcmp.ge.s32.totalorder %v624, %v1407
        %vm1432 = vcmp.ge.s32.totalorder %v230, %v1408
        %vm1433 = vcmp.ge.s32.totalorder %v624, %v1408
        %vm1434 = vcmp.ge.s32.totalorder %v230, %v1409
        %vm1435 = vcmp.ge.s32.totalorder %v624, %v1409
        %vm1436 = vcmp.ge.s32.totalorder %v230, %v1410
        %vm1437 = vcmp.ge.s32.totalorder %v624, %v1410
        %vm1438 = vcmp.ge.s32.totalorder %v230, %v1411
        %vm1439 = vcmp.ge.s32.totalorder %v624, %v1411
        %vm1440 = vcmp.ge.s32.totalorder %v230, %v1412
        %vm1441 = vcmp.ge.s32.totalorder %v624, %v1412
        %vm1442 = vcmp.ge.s32.totalorder %v230, %v1413
        %vm1443 = vcmp.ge.s32.totalorder %v624, %v1413
        %vm1444 = vcmp.ge.s32.totalorder %v230, %v1414
        %vm1445 = vcmp.ge.s32.totalorder %v624, %v1414
        %vm1446 = vcmp.ge.s32.totalorder %v230, %v1415
        %vm1447 = vcmp.ge.s32.totalorder %v624, %v1415
        %v1448 = vadd.s32 %v1400, 16
        %v1449 = vadd.s32 %v1401, 16
        %v1450 = vadd.s32 %v1402, 16
        %v1451 = vadd.s32 %v1403, 16
        %v1452 = vadd.s32 %v1404, 16
        %v1453 = vadd.s32 %v1405, 16
        %v1454 = vadd.s32 %v1406, 16
        %v1455 = vadd.s32 %v1407, 16
        %v1456 = vadd.s32 %v1408, 16
        %v1457 = vadd.s32 %v1409, 16
        %v1458 = vadd.s32 %v1410, 16
        %v1459 = vadd.s32 %v1411, 16
        %v1460 = vadd.s32 %v1412, 16
        %v1461 = vadd.s32 %v1413, 16
        %v1462 = vadd.s32 %v1414, 16
        %v1463 = vadd.s32 %v1415, 16
        %vm1464 = vcmp.lt.s32.totalorder %v230, %v1448
        %vm1465 = vcmp.lt.s32.totalorder %v624, %v1448
        %vm1466 = vcmp.lt.s32.totalorder %v230, %v1449
        %vm1467 = vcmp.lt.s32.totalorder %v624, %v1449
        %vm1468 = vcmp.lt.s32.totalorder %v230, %v1450
        %vm1469 = vcmp.lt.s32.totalorder %v624, %v1450
        %vm1470 = vcmp.lt.s32.totalorder %v230, %v1451
        %vm1471 = vcmp.lt.s32.totalorder %v624, %v1451
        %vm1472 = vcmp.lt.s32.totalorder %v230, %v1452
        %vm1473 = vcmp.lt.s32.totalorder %v624, %v1452
        %vm1474 = vcmp.lt.s32.totalorder %v230, %v1453
        %vm1475 = vcmp.lt.s32.totalorder %v624, %v1453
        %vm1476 = vcmp.lt.s32.totalorder %v230, %v1454
        %vm1477 = vcmp.lt.s32.totalorder %v624, %v1454
        %vm1478 = vcmp.lt.s32.totalorder %v230, %v1455
        %vm1479 = vcmp.lt.s32.totalorder %v624, %v1455
        %vm1480 = vcmp.lt.s32.totalorder %v230, %v1456
        %vm1481 = vcmp.lt.s32.totalorder %v624, %v1456
        %vm1482 = vcmp.lt.s32.totalorder %v230, %v1457
        %vm1483 = vcmp.lt.s32.totalorder %v624, %v1457
        %vm1484 = vcmp.lt.s32.totalorder %v230, %v1458
        %vm1485 = vcmp.lt.s32.totalorder %v624, %v1458
        %vm1486 = vcmp.lt.s32.totalorder %v230, %v1459
        %vm1487 = vcmp.lt.s32.totalorder %v624, %v1459
        %vm1488 = vcmp.lt.s32.totalorder %v230, %v1460
        %vm1489 = vcmp.lt.s32.totalorder %v624, %v1460
        %vm1490 = vcmp.lt.s32.totalorder %v230, %v1461
        %vm1491 = vcmp.lt.s32.totalorder %v624, %v1461
        %vm1492 = vcmp.lt.s32.totalorder %v230, %v1462
        %vm1493 = vcmp.lt.s32.totalorder %v624, %v1462
        %vm1494 = vcmp.lt.s32.totalorder %v230, %v1463
        %vm1495 = vcmp.lt.s32.totalorder %v624, %v1463
        %vm1496 = vmand %vm1416, %vm1464
        %vm1497 = vmand %vm1417, %vm1465
        %vm1498 = vmand %vm1418, %vm1466
        %vm1499 = vmand %vm1419, %vm1467
        %vm1500 = vmand %vm1420, %vm1468
        %vm1501 = vmand %vm1421, %vm1469
        %vm1502 = vmand %vm1422, %vm1470
        %vm1503 = vmand %vm1423, %vm1471
        %vm1504 = vmand %vm1424, %vm1472
        %vm1505 = vmand %vm1425, %vm1473
        %vm1506 = vmand %vm1426, %vm1474
        %vm1507 = vmand %vm1427, %vm1475
        %vm1508 = vmand %vm1428, %vm1476
        %vm1509 = vmand %vm1429, %vm1477
        %vm1510 = vmand %vm1430, %vm1478
        %vm1511 = vmand %vm1431, %vm1479
        %vm1512 = vmand %vm1432, %vm1480
        %vm1513 = vmand %vm1433, %vm1481
        %vm1514 = vmand %vm1434, %vm1482
        %vm1515 = vmand %vm1435, %vm1483
        %vm1516 = vmand %vm1436, %vm1484
        %vm1517 = vmand %vm1437, %vm1485
        %vm1518 = vmand %vm1438, %vm1486
        %vm1519 = vmand %vm1439, %vm1487
        %vm1520 = vmand %vm1440, %vm1488
        %vm1521 = vmand %vm1441, %vm1489
        %vm1522 = vmand %vm1442, %vm1490
        %vm1523 = vmand %vm1443, %vm1491
        %vm1524 = vmand %vm1444, %vm1492
        %vm1525 = vmand %vm1445, %vm1493
        %vm1526 = vmand %vm1446, %vm1494
        %vm1527 = vmand %vm1447, %vm1495
        %v1528 = vsel %vm1496, 1.0, 0.0
        %v1529 = vsel %vm1497, 1.0, 0.0
        %v1530 = vsel %vm1498, 1.0, 0.0
        %v1531 = vsel %vm1499, 1.0, 0.0
        %v1532 = vsel %vm1500, 1.0, 0.0
        %v1533 = vsel %vm1501, 1.0, 0.0
        %v1534 = vsel %vm1502, 1.0, 0.0
        %v1535 = vsel %vm1503, 1.0, 0.0
        %v1536 = vsel %vm1504, 1.0, 0.0
        %v1537 = vsel %vm1505, 1.0, 0.0
        %v1538 = vsel %vm1506, 1.0, 0.0
        %v1539 = vsel %vm1507, 1.0, 0.0
        %v1540 = vsel %vm1508, 1.0, 0.0
        %v1541 = vsel %vm1509, 1.0, 0.0
        %v1542 = vsel %vm1510, 1.0, 0.0
        %v1543 = vsel %vm1511, 1.0, 0.0
        %v1544 = vsel %vm1512, 1.0, 0.0
        %v1545 = vsel %vm1513, 1.0, 0.0
        %v1546 = vsel %vm1514, 1.0, 0.0
        %v1547 = vsel %vm1515, 1.0, 0.0
        %v1548 = vsel %vm1516, 1.0, 0.0
        %v1549 = vsel %vm1517, 1.0, 0.0
        %v1550 = vsel %vm1518, 1.0, 0.0
        %v1551 = vsel %vm1519, 1.0, 0.0
        %v1552 = vsel %vm1520, 1.0, 0.0
        %v1553 = vsel %vm1521, 1.0, 0.0
        %v1554 = vsel %vm1522, 1.0, 0.0
        %v1555 = vsel %vm1523, 1.0, 0.0
        %v1556 = vsel %vm1524, 1.0, 0.0
        %v1557 = vsel %vm1525, 1.0, 0.0
        %v1558 = vsel %vm1526, 1.0, 0.0
        %v1559 = vsel %vm1527, 1.0, 0.0
        %vm1560 = vcmp.eq.s32.totalorder %v230, %v197
        %vm1561 = vcmp.eq.s32.totalorder %v624, %v197
        %vm1562 = vcmp.eq.s32.totalorder %v230, %v198
        %vm1563 = vcmp.eq.s32.totalorder %v624, %v198
        %vm1564 = vcmp.eq.s32.totalorder %v230, %v199
        %vm1565 = vcmp.eq.s32.totalorder %v624, %v199
        %vm1566 = vcmp.eq.s32.totalorder %v230, %v200
        %vm1567 = vcmp.eq.s32.totalorder %v624, %v200
        %vm1568 = vcmp.eq.s32.totalorder %v230, %v201
        %vm1569 = vcmp.eq.s32.totalorder %v624, %v201
        %vm1570 = vcmp.eq.s32.totalorder %v230, %v202
        %vm1571 = vcmp.eq.s32.totalorder %v624, %v202
        %vm1572 = vcmp.eq.s32.totalorder %v230, %v203
        %vm1573 = vcmp.eq.s32.totalorder %v624, %v203
        %vm1574 = vcmp.eq.s32.totalorder %v230, %v204
        %vm1575 = vcmp.eq.s32.totalorder %v624, %v204
        %vm1576 = vcmp.eq.s32.totalorder %v230, %v205
        %vm1577 = vcmp.eq.s32.totalorder %v624, %v205
        %vm1578 = vcmp.eq.s32.totalorder %v230, %v206
        %vm1579 = vcmp.eq.s32.totalorder %v624, %v206
        %vm1580 = vcmp.eq.s32.totalorder %v230, %v207
        %vm1581 = vcmp.eq.s32.totalorder %v624, %v207
        %vm1582 = vcmp.eq.s32.totalorder %v230, %v208
        %vm1583 = vcmp.eq.s32.totalorder %v624, %v208
        %vm1584 = vcmp.eq.s32.totalorder %v230, %v209
        %vm1585 = vcmp.eq.s32.totalorder %v624, %v209
        %vm1586 = vcmp.eq.s32.totalorder %v230, %v210
        %vm1587 = vcmp.eq.s32.totalorder %v624, %v210
        %vm1588 = vcmp.eq.s32.totalorder %v230, %v211
        %vm1589 = vcmp.eq.s32.totalorder %v624, %v211
        %vm1590 = vcmp.eq.s32.totalorder %v230, %v212
        %vm1591 = vcmp.eq.s32.totalorder %v624, %v212
        %v1592 = vadd.s32 %v198, 16
        %v1593 = vadd.s32 %v199, 16
        %v1594 = vadd.s32 %v200, 16
        %v1595 = vadd.s32 %v201, 16
        %v1596 = vadd.s32 %v202, 16
        %v1597 = vadd.s32 %v203, 16
        %v1598 = vadd.s32 %v204, 16
        %v1599 = vadd.s32 %v205, 16
        %v1600 = vadd.s32 %v206, 16
        %v1601 = vadd.s32 %v207, 16
        %v1602 = vadd.s32 %v208, 16
        %v1603 = vadd.s32 %v209, 16
        %v1604 = vadd.s32 %v210, 16
        %v1605 = vadd.s32 %v211, 16
        %v1606 = vadd.s32 %v212, 16
        %vm1607 = vcmp.eq.s32.totalorder %v230, %v1592
        %vm1608 = vcmp.eq.s32.totalorder %v624, %v1592
        %vm1609 = vcmp.eq.s32.totalorder %v230, %v1593
        %vm1610 = vcmp.eq.s32.totalorder %v624, %v1593
        %vm1611 = vcmp.eq.s32.totalorder %v230, %v1594
        %vm1612 = vcmp.eq.s32.totalorder %v624, %v1594
        %vm1613 = vcmp.eq.s32.totalorder %v230, %v1595
        %vm1614 = vcmp.eq.s32.totalorder %v624, %v1595
        %vm1615 = vcmp.eq.s32.totalorder %v230, %v1596
        %vm1616 = vcmp.eq.s32.totalorder %v624, %v1596
        %vm1617 = vcmp.eq.s32.totalorder %v230, %v1597
        %vm1618 = vcmp.eq.s32.totalorder %v624, %v1597
        %vm1619 = vcmp.eq.s32.totalorder %v230, %v1598
        %vm1620 = vcmp.eq.s32.totalorder %v624, %v1598
        %vm1621 = vcmp.eq.s32.totalorder %v230, %v1599
        %vm1622 = vcmp.eq.s32.totalorder %v624, %v1599
        %vm1623 = vcmp.eq.s32.totalorder %v230, %v1600
        %vm1624 = vcmp.eq.s32.totalorder %v624, %v1600
        %vm1625 = vcmp.eq.s32.totalorder %v230, %v1601
        %vm1626 = vcmp.eq.s32.totalorder %v624, %v1601
        %vm1627 = vcmp.eq.s32.totalorder %v230, %v1602
        %vm1628 = vcmp.eq.s32.totalorder %v624, %v1602
        %vm1629 = vcmp.eq.s32.totalorder %v230, %v1603
        %vm1630 = vcmp.eq.s32.totalorder %v624, %v1603
        %vm1631 = vcmp.eq.s32.totalorder %v230, %v1604
        %vm1632 = vcmp.eq.s32.totalorder %v624, %v1604
        %vm1633 = vcmp.eq.s32.totalorder %v230, %v1605
        %vm1634 = vcmp.eq.s32.totalorder %v624, %v1605
        %vm1635 = vcmp.eq.s32.totalorder %v230, %v1606
        %vm1636 = vcmp.eq.s32.totalorder %v624, %v1606
        %v1637 = vadd.s32 %v198, 32
        %v1638 = vadd.s32 %v199, 32
        %v1639 = vadd.s32 %v200, 32
        %v1640 = vadd.s32 %v201, 32
        %v1641 = vadd.s32 %v202, 32
        %v1642 = vadd.s32 %v203, 32
        %v1643 = vadd.s32 %v204, 32
        %v1644 = vadd.s32 %v205, 32
        %v1645 = vadd.s32 %v206, 32
        %v1646 = vadd.s32 %v207, 32
        %v1647 = vadd.s32 %v208, 32
        %v1648 = vadd.s32 %v209, 32
        %v1649 = vadd.s32 %v210, 32
        %v1650 = vadd.s32 %v211, 32
        %v1651 = vadd.s32 %v212, 32
        %vm1652 = vcmp.eq.s32.totalorder %v230, %v1637
        %vm1653 = vcmp.eq.s32.totalorder %v624, %v1637
        %vm1654 = vcmp.eq.s32.totalorder %v230, %v1638
        %vm1655 = vcmp.eq.s32.totalorder %v624, %v1638
        %vm1656 = vcmp.eq.s32.totalorder %v230, %v1639
        %vm1657 = vcmp.eq.s32.totalorder %v624, %v1639
        %vm1658 = vcmp.eq.s32.totalorder %v230, %v1640
        %vm1659 = vcmp.eq.s32.totalorder %v624, %v1640
        %vm1660 = vcmp.eq.s32.totalorder %v230, %v1641
        %vm1661 = vcmp.eq.s32.totalorder %v624, %v1641
        %vm1662 = vcmp.eq.s32.totalorder %v230, %v1642
        %vm1663 = vcmp.eq.s32.totalorder %v624, %v1642
        %vm1664 = vcmp.eq.s32.totalorder %v230, %v1643
        %vm1665 = vcmp.eq.s32.totalorder %v624, %v1643
        %vm1666 = vcmp.eq.s32.totalorder %v230, %v1644
        %vm1667 = vcmp.eq.s32.totalorder %v624, %v1644
        %vm1668 = vcmp.eq.s32.totalorder %v230, %v1645
        %vm1669 = vcmp.eq.s32.totalorder %v624, %v1645
        %vm1670 = vcmp.eq.s32.totalorder %v230, %v1646
        %vm1671 = vcmp.eq.s32.totalorder %v624, %v1646
        %vm1672 = vcmp.eq.s32.totalorder %v230, %v1647
        %vm1673 = vcmp.eq.s32.totalorder %v624, %v1647
        %vm1674 = vcmp.eq.s32.totalorder %v230, %v1648
        %vm1675 = vcmp.eq.s32.totalorder %v624, %v1648
        %vm1676 = vcmp.eq.s32.totalorder %v230, %v1649
        %vm1677 = vcmp.eq.s32.totalorder %v624, %v1649
        %vm1678 = vcmp.eq.s32.totalorder %v230, %v1650
        %vm1679 = vcmp.eq.s32.totalorder %v624, %v1650
        %vm1680 = vcmp.eq.s32.totalorder %v230, %v1651
        %vm1681 = vcmp.eq.s32.totalorder %v624, %v1651
        %v1682 = vadd.s32 %v198, 48
        %v1683 = vadd.s32 %v199, 48
        %v1684 = vadd.s32 %v200, 48
        %v1685 = vadd.s32 %v201, 48
        %v1686 = vadd.s32 %v202, 48
        %v1687 = vadd.s32 %v203, 48
        %v1688 = vadd.s32 %v204, 48
        %v1689 = vadd.s32 %v205, 48
        %v1690 = vadd.s32 %v206, 48
        %v1691 = vadd.s32 %v207, 48
        %v1692 = vadd.s32 %v208, 48
        %v1693 = vadd.s32 %v209, 48
        %v1694 = vadd.s32 %v210, 48
        %v1695 = vadd.s32 %v211, 48
        %v1696 = vadd.s32 %v212, 48
        %vm1697 = vcmp.eq.s32.totalorder %v230, %v1682
        %vm1698 = vcmp.eq.s32.totalorder %v624, %v1682
        %vm1699 = vcmp.eq.s32.totalorder %v230, %v1683
        %vm1700 = vcmp.eq.s32.totalorder %v624, %v1683
        %vm1701 = vcmp.eq.s32.totalorder %v230, %v1684
        %vm1702 = vcmp.eq.s32.totalorder %v624, %v1684
        %vm1703 = vcmp.eq.s32.totalorder %v230, %v1685
        %vm1704 = vcmp.eq.s32.totalorder %v624, %v1685
        %vm1705 = vcmp.eq.s32.totalorder %v230, %v1686
        %vm1706 = vcmp.eq.s32.totalorder %v624, %v1686
        %vm1707 = vcmp.eq.s32.totalorder %v230, %v1687
        %vm1708 = vcmp.eq.s32.totalorder %v624, %v1687
        %vm1709 = vcmp.eq.s32.totalorder %v230, %v1688
        %vm1710 = vcmp.eq.s32.totalorder %v624, %v1688
        %vm1711 = vcmp.eq.s32.totalorder %v230, %v1689
        %vm1712 = vcmp.eq.s32.totalorder %v624, %v1689
        %vm1713 = vcmp.eq.s32.totalorder %v230, %v1690
        %vm1714 = vcmp.eq.s32.totalorder %v624, %v1690
        %vm1715 = vcmp.eq.s32.totalorder %v230, %v1691
        %vm1716 = vcmp.eq.s32.totalorder %v624, %v1691
        %vm1717 = vcmp.eq.s32.totalorder %v230, %v1692
        %vm1718 = vcmp.eq.s32.totalorder %v624, %v1692
        %vm1719 = vcmp.eq.s32.totalorder %v230, %v1693
        %vm1720 = vcmp.eq.s32.totalorder %v624, %v1693
        %vm1721 = vcmp.eq.s32.totalorder %v230, %v1694
        %vm1722 = vcmp.eq.s32.totalorder %v624, %v1694
        %vm1723 = vcmp.eq.s32.totalorder %v230, %v1695
        %vm1724 = vcmp.eq.s32.totalorder %v624, %v1695
        %vm1725 = vcmp.eq.s32.totalorder %v230, %v1696
        %vm1726 = vcmp.eq.s32.totalorder %v624, %v1696
        %v1727 = vadd.s32 %v198, 64
        %v1728 = vadd.s32 %v199, 64
        %v1729 = vadd.s32 %v200, 64
        %v1730 = vadd.s32 %v201, 64
        %v1731 = vadd.s32 %v202, 64
        %v1732 = vadd.s32 %v203, 64
        %v1733 = vadd.s32 %v204, 64
        %v1734 = vadd.s32 %v205, 64
        %v1735 = vadd.s32 %v206, 64
        %v1736 = vadd.s32 %v207, 64
        %v1737 = vadd.s32 %v208, 64
        %v1738 = vadd.s32 %v209, 64
        %v1739 = vadd.s32 %v210, 64
        %v1740 = vadd.s32 %v211, 64
        %v1741 = vadd.s32 %v212, 64
        %vm1742 = vcmp.eq.s32.totalorder %v230, %v1727
        %vm1743 = vcmp.eq.s32.totalorder %v624, %v1727
        %vm1744 = vcmp.eq.s32.totalorder %v230, %v1728
        %vm1745 = vcmp.eq.s32.totalorder %v624, %v1728
        %vm1746 = vcmp.eq.s32.totalorder %v230, %v1729
        %vm1747 = vcmp.eq.s32.totalorder %v624, %v1729
        %vm1748 = vcmp.eq.s32.totalorder %v230, %v1730
        %vm1749 = vcmp.eq.s32.totalorder %v624, %v1730
        %vm1750 = vcmp.eq.s32.totalorder %v230, %v1731
        %vm1751 = vcmp.eq.s32.totalorder %v624, %v1731
        %vm1752 = vcmp.eq.s32.totalorder %v230, %v1732
        %vm1753 = vcmp.eq.s32.totalorder %v624, %v1732
        %vm1754 = vcmp.eq.s32.totalorder %v230, %v1733
        %vm1755 = vcmp.eq.s32.totalorder %v624, %v1733
        %vm1756 = vcmp.eq.s32.totalorder %v230, %v1734
        %vm1757 = vcmp.eq.s32.totalorder %v624, %v1734
        %vm1758 = vcmp.eq.s32.totalorder %v230, %v1735
        %vm1759 = vcmp.eq.s32.totalorder %v624, %v1735
        %vm1760 = vcmp.eq.s32.totalorder %v230, %v1736
        %vm1761 = vcmp.eq.s32.totalorder %v624, %v1736
        %vm1762 = vcmp.eq.s32.totalorder %v230, %v1737
        %vm1763 = vcmp.eq.s32.totalorder %v624, %v1737
        %vm1764 = vcmp.eq.s32.totalorder %v230, %v1738
        %vm1765 = vcmp.eq.s32.totalorder %v624, %v1738
        %vm1766 = vcmp.eq.s32.totalorder %v230, %v1739
        %vm1767 = vcmp.eq.s32.totalorder %v624, %v1739
        %vm1768 = vcmp.eq.s32.totalorder %v230, %v1740
        %vm1769 = vcmp.eq.s32.totalorder %v624, %v1740
        %vm1770 = vcmp.eq.s32.totalorder %v230, %v1741
        %vm1771 = vcmp.eq.s32.totalorder %v624, %v1741
        %v1772 = vadd.s32 %v198, 80
        %v1773 = vadd.s32 %v199, 80
        %v1774 = vadd.s32 %v200, 80
        %v1775 = vadd.s32 %v201, 80
        %v1776 = vadd.s32 %v202, 80
        %v1777 = vadd.s32 %v203, 80
        %v1778 = vadd.s32 %v204, 80
        %v1779 = vadd.s32 %v205, 80
        %v1780 = vadd.s32 %v206, 80
        %v1781 = vadd.s32 %v207, 80
        %v1782 = vadd.s32 %v208, 80
        %v1783 = vadd.s32 %v209, 80
        %v1784 = vadd.s32 %v210, 80
        %v1785 = vadd.s32 %v211, 80
        %v1786 = vadd.s32 %v212, 80
        %vm1787 = vcmp.eq.s32.totalorder %v230, %v1772
        %vm1788 = vcmp.eq.s32.totalorder %v624, %v1772
        %vm1789 = vcmp.eq.s32.totalorder %v230, %v1773
        %vm1790 = vcmp.eq.s32.totalorder %v624, %v1773
        %vm1791 = vcmp.eq.s32.totalorder %v230, %v1774
        %vm1792 = vcmp.eq.s32.totalorder %v624, %v1774
        %vm1793 = vcmp.eq.s32.totalorder %v230, %v1775
        %vm1794 = vcmp.eq.s32.totalorder %v624, %v1775
        %vm1795 = vcmp.eq.s32.totalorder %v230, %v1776
        %vm1796 = vcmp.eq.s32.totalorder %v624, %v1776
        %vm1797 = vcmp.eq.s32.totalorder %v230, %v1777
        %vm1798 = vcmp.eq.s32.totalorder %v624, %v1777
        %vm1799 = vcmp.eq.s32.totalorder %v230, %v1778
        %vm1800 = vcmp.eq.s32.totalorder %v624, %v1778
        %vm1801 = vcmp.eq.s32.totalorder %v230, %v1779
        %vm1802 = vcmp.eq.s32.totalorder %v624, %v1779
        %vm1803 = vcmp.eq.s32.totalorder %v230, %v1780
        %vm1804 = vcmp.eq.s32.totalorder %v624, %v1780
        %vm1805 = vcmp.eq.s32.totalorder %v230, %v1781
        %vm1806 = vcmp.eq.s32.totalorder %v624, %v1781
        %vm1807 = vcmp.eq.s32.totalorder %v230, %v1782
        %vm1808 = vcmp.eq.s32.totalorder %v624, %v1782
        %vm1809 = vcmp.eq.s32.totalorder %v230, %v1783
        %vm1810 = vcmp.eq.s32.totalorder %v624, %v1783
        %vm1811 = vcmp.eq.s32.totalorder %v230, %v1784
        %vm1812 = vcmp.eq.s32.totalorder %v624, %v1784
        %vm1813 = vcmp.eq.s32.totalorder %v230, %v1785
        %vm1814 = vcmp.eq.s32.totalorder %v624, %v1785
        %vm1815 = vcmp.eq.s32.totalorder %v230, %v1786
        %vm1816 = vcmp.eq.s32.totalorder %v624, %v1786
        %v1817 = vadd.s32 %v198, 96
        %v1818 = vadd.s32 %v199, 96
        %v1819 = vadd.s32 %v200, 96
        %v1820 = vadd.s32 %v201, 96
        %v1821 = vadd.s32 %v202, 96
        %v1822 = vadd.s32 %v203, 96
        %v1823 = vadd.s32 %v204, 96
        %v1824 = vadd.s32 %v205, 96
        %v1825 = vadd.s32 %v206, 96
        %v1826 = vadd.s32 %v207, 96
        %v1827 = vadd.s32 %v208, 96
        %v1828 = vadd.s32 %v209, 96
        %v1829 = vadd.s32 %v210, 96
        %v1830 = vadd.s32 %v211, 96
        %v1831 = vadd.s32 %v212, 96
        %vm1832 = vcmp.eq.s32.totalorder %v230, %v1817
        %vm1833 = vcmp.eq.s32.totalorder %v624, %v1817
        %vm1834 = vcmp.eq.s32.totalorder %v230, %v1818
        %vm1835 = vcmp.eq.s32.totalorder %v624, %v1818
        %vm1836 = vcmp.eq.s32.totalorder %v230, %v1819
        %vm1837 = vcmp.eq.s32.totalorder %v624, %v1819
        %vm1838 = vcmp.eq.s32.totalorder %v230, %v1820
        %vm1839 = vcmp.eq.s32.totalorder %v624, %v1820
        %vm1840 = vcmp.eq.s32.totalorder %v230, %v1821
        %vm1841 = vcmp.eq.s32.totalorder %v624, %v1821
        %vm1842 = vcmp.eq.s32.totalorder %v230, %v1822
        %vm1843 = vcmp.eq.s32.totalorder %v624, %v1822
        %vm1844 = vcmp.eq.s32.totalorder %v230, %v1823
        %vm1845 = vcmp.eq.s32.totalorder %v624, %v1823
        %vm1846 = vcmp.eq.s32.totalorder %v230, %v1824
        %vm1847 = vcmp.eq.s32.totalorder %v624, %v1824
        %vm1848 = vcmp.eq.s32.totalorder %v230, %v1825
        %vm1849 = vcmp.eq.s32.totalorder %v624, %v1825
        %vm1850 = vcmp.eq.s32.totalorder %v230, %v1826
        %vm1851 = vcmp.eq.s32.totalorder %v624, %v1826
        %vm1852 = vcmp.eq.s32.totalorder %v230, %v1827
        %vm1853 = vcmp.eq.s32.totalorder %v624, %v1827
        %vm1854 = vcmp.eq.s32.totalorder %v230, %v1828
        %vm1855 = vcmp.eq.s32.totalorder %v624, %v1828
        %vm1856 = vcmp.eq.s32.totalorder %v230, %v1829
        %vm1857 = vcmp.eq.s32.totalorder %v624, %v1829
        %vm1858 = vcmp.eq.s32.totalorder %v230, %v1830
        %vm1859 = vcmp.eq.s32.totalorder %v624, %v1830
        %vm1860 = vcmp.eq.s32.totalorder %v230, %v1831
        %vm1861 = vcmp.eq.s32.totalorder %v624, %v1831
        %v1862 = vadd.s32 %v198, 112
        %v1863 = vadd.s32 %v199, 112
        %v1864 = vadd.s32 %v200, 112
        %v1865 = vadd.s32 %v201, 112
        %v1866 = vadd.s32 %v202, 112
        %v1867 = vadd.s32 %v203, 112
        %v1868 = vadd.s32 %v204, 112
        %v1869 = vadd.s32 %v205, 112
        %v1870 = vadd.s32 %v206, 112
        %v1871 = vadd.s32 %v207, 112
        %v1872 = vadd.s32 %v208, 112
        %v1873 = vadd.s32 %v209, 112
        %v1874 = vadd.s32 %v210, 112
        %v1875 = vadd.s32 %v211, 112
        %v1876 = vadd.s32 %v212, 112
        %vm1877 = vcmp.eq.s32.totalorder %v230, %v1862
        %vm1878 = vcmp.eq.s32.totalorder %v624, %v1862
        %vm1879 = vcmp.eq.s32.totalorder %v230, %v1863
        %vm1880 = vcmp.eq.s32.totalorder %v624, %v1863
        %vm1881 = vcmp.eq.s32.totalorder %v230, %v1864
        %vm1882 = vcmp.eq.s32.totalorder %v624, %v1864
        %vm1883 = vcmp.eq.s32.totalorder %v230, %v1865
        %vm1884 = vcmp.eq.s32.totalorder %v624, %v1865
        %vm1885 = vcmp.eq.s32.totalorder %v230, %v1866
        %vm1886 = vcmp.eq.s32.totalorder %v624, %v1866
        %vm1887 = vcmp.eq.s32.totalorder %v230, %v1867
        %vm1888 = vcmp.eq.s32.totalorder %v624, %v1867
        %vm1889 = vcmp.eq.s32.totalorder %v230, %v1868
        %vm1890 = vcmp.eq.s32.totalorder %v624, %v1868
        %vm1891 = vcmp.eq.s32.totalorder %v230, %v1869
        %vm1892 = vcmp.eq.s32.totalorder %v624, %v1869
        %vm1893 = vcmp.eq.s32.totalorder %v230, %v1870
        %vm1894 = vcmp.eq.s32.totalorder %v624, %v1870
        %vm1895 = vcmp.eq.s32.totalorder %v230, %v1871
        %vm1896 = vcmp.eq.s32.totalorder %v624, %v1871
        %vm1897 = vcmp.eq.s32.totalorder %v230, %v1872
        %vm1898 = vcmp.eq.s32.totalorder %v624, %v1872
        %vm1899 = vcmp.eq.s32.totalorder %v230, %v1873
        %vm1900 = vcmp.eq.s32.totalorder %v624, %v1873
        %vm1901 = vcmp.eq.s32.totalorder %v230, %v1874
        %vm1902 = vcmp.eq.s32.totalorder %v624, %v1874
        %vm1903 = vcmp.eq.s32.totalorder %v230, %v1875
        %vm1904 = vcmp.eq.s32.totalorder %v624, %v1875
        %vm1905 = vcmp.eq.s32.totalorder %v230, %v1876
        %vm1906 = vcmp.eq.s32.totalorder %v624, %v1876
        %v1907 = vadd.s32 %v198, 128
        %v1908 = vadd.s32 %v199, 128
        %v1909 = vadd.s32 %v200, 128
        %v1910 = vadd.s32 %v201, 128
        %v1911 = vadd.s32 %v202, 128
        %v1912 = vadd.s32 %v203, 128
        %v1913 = vadd.s32 %v204, 128
        %v1914 = vadd.s32 %v205, 128
        %v1915 = vadd.s32 %v206, 128
        %v1916 = vadd.s32 %v207, 128
        %v1917 = vadd.s32 %v208, 128
        %v1918 = vadd.s32 %v209, 128
        %v1919 = vadd.s32 %v210, 128
        %v1920 = vadd.s32 %v211, 128
        %v1921 = vadd.s32 %v212, 128
        %vm1922 = vcmp.eq.s32.totalorder %v230, %v213
        %vm1923 = vcmp.eq.s32.totalorder %v624, %v213
        %vm1924 = vcmp.eq.s32.totalorder %v230, %v1907
        %vm1925 = vcmp.eq.s32.totalorder %v624, %v1907
        %vm1926 = vcmp.eq.s32.totalorder %v230, %v1908
        %vm1927 = vcmp.eq.s32.totalorder %v624, %v1908
        %vm1928 = vcmp.eq.s32.totalorder %v230, %v1909
        %vm1929 = vcmp.eq.s32.totalorder %v624, %v1909
        %vm1930 = vcmp.eq.s32.totalorder %v230, %v1910
        %vm1931 = vcmp.eq.s32.totalorder %v624, %v1910
        %vm1932 = vcmp.eq.s32.totalorder %v230, %v1911
        %vm1933 = vcmp.eq.s32.totalorder %v624, %v1911
        %vm1934 = vcmp.eq.s32.totalorder %v230, %v1912
        %vm1935 = vcmp.eq.s32.totalorder %v624, %v1912
        %vm1936 = vcmp.eq.s32.totalorder %v230, %v1913
        %vm1937 = vcmp.eq.s32.totalorder %v624, %v1913
        %vm1938 = vcmp.eq.s32.totalorder %v230, %v1914
        %vm1939 = vcmp.eq.s32.totalorder %v624, %v1914
        %vm1940 = vcmp.eq.s32.totalorder %v230, %v1915
        %vm1941 = vcmp.eq.s32.totalorder %v624, %v1915
        %vm1942 = vcmp.eq.s32.totalorder %v230, %v1916
        %vm1943 = vcmp.eq.s32.totalorder %v624, %v1916
        %vm1944 = vcmp.eq.s32.totalorder %v230, %v1917
        %vm1945 = vcmp.eq.s32.totalorder %v624, %v1917
        %vm1946 = vcmp.eq.s32.totalorder %v230, %v1918
        %vm1947 = vcmp.eq.s32.totalorder %v624, %v1918
        %vm1948 = vcmp.eq.s32.totalorder %v230, %v1919
        %vm1949 = vcmp.eq.s32.totalorder %v624, %v1919
        %vm1950 = vcmp.eq.s32.totalorder %v230, %v1920
        %vm1951 = vcmp.eq.s32.totalorder %v624, %v1920
        %vm1952 = vcmp.eq.s32.totalorder %v230, %v1921
        %vm1953 = vcmp.eq.s32.totalorder %v624, %v1921
        %v1954 = vadd.s32 %v198, 144
        %v1955 = vadd.s32 %v199, 144
        %v1956 = vadd.s32 %v200, 144
        %v1957 = vadd.s32 %v201, 144
        %v1958 = vadd.s32 %v202, 144
        %v1959 = vadd.s32 %v203, 144
        %v1960 = vadd.s32 %v204, 144
        %v1961 = vadd.s32 %v205, 144
        %v1962 = vadd.s32 %v206, 144
        %v1963 = vadd.s32 %v207, 144
        %v1964 = vadd.s32 %v208, 144
        %v1965 = vadd.s32 %v209, 144
        %v1966 = vadd.s32 %v210, 144
        %v1967 = vadd.s32 %v211, 144
        %v1968 = vadd.s32 %v212, 144
        %vm1969 = vcmp.eq.s32.totalorder %v230, %v215
        %vm1970 = vcmp.eq.s32.totalorder %v624, %v215
        %vm1971 = vcmp.eq.s32.totalorder %v230, %v1954
        %vm1972 = vcmp.eq.s32.totalorder %v624, %v1954
        %vm1973 = vcmp.eq.s32.totalorder %v230, %v1955
        %vm1974 = vcmp.eq.s32.totalorder %v624, %v1955
        %vm1975 = vcmp.eq.s32.totalorder %v230, %v1956
        %vm1976 = vcmp.eq.s32.totalorder %v624, %v1956
        %vm1977 = vcmp.eq.s32.totalorder %v230, %v1957
        %vm1978 = vcmp.eq.s32.totalorder %v624, %v1957
        %vm1979 = vcmp.eq.s32.totalorder %v230, %v1958
        %vm1980 = vcmp.eq.s32.totalorder %v624, %v1958
        %vm1981 = vcmp.eq.s32.totalorder %v230, %v1959
        %vm1982 = vcmp.eq.s32.totalorder %v624, %v1959
        %vm1983 = vcmp.eq.s32.totalorder %v230, %v1960
        %vm1984 = vcmp.eq.s32.totalorder %v624, %v1960
        %vm1985 = vcmp.eq.s32.totalorder %v230, %v1961
        %vm1986 = vcmp.eq.s32.totalorder %v624, %v1961
        %vm1987 = vcmp.eq.s32.totalorder %v230, %v1962
        %vm1988 = vcmp.eq.s32.totalorder %v624, %v1962
        %vm1989 = vcmp.eq.s32.totalorder %v230, %v1963
        %vm1990 = vcmp.eq.s32.totalorder %v624, %v1963
        %vm1991 = vcmp.eq.s32.totalorder %v230, %v1964
        %vm1992 = vcmp.eq.s32.totalorder %v624, %v1964
        %vm1993 = vcmp.eq.s32.totalorder %v230, %v1965
        %vm1994 = vcmp.eq.s32.totalorder %v624, %v1965
        %vm1995 = vcmp.eq.s32.totalorder %v230, %v1966
        %vm1996 = vcmp.eq.s32.totalorder %v624, %v1966
        %vm1997 = vcmp.eq.s32.totalorder %v230, %v1967
        %vm1998 = vcmp.eq.s32.totalorder %v624, %v1967
        %vm1999 = vcmp.eq.s32.totalorder %v230, %v1968
        %vm2000 = vcmp.eq.s32.totalorder %v624, %v1968
        %v2001 = vadd.s32 %v198, 160
        %v2002 = vadd.s32 %v199, 160
        %v2003 = vadd.s32 %v200, 160
        %v2004 = vadd.s32 %v201, 160
        %v2005 = vadd.s32 %v202, 160
        %v2006 = vadd.s32 %v203, 160
        %v2007 = vadd.s32 %v204, 160
        %v2008 = vadd.s32 %v205, 160
        %v2009 = vadd.s32 %v206, 160
        %v2010 = vadd.s32 %v207, 160
        %v2011 = vadd.s32 %v208, 160
        %v2012 = vadd.s32 %v209, 160
        %v2013 = vadd.s32 %v210, 160
        %v2014 = vadd.s32 %v211, 160
        %v2015 = vadd.s32 %v212, 160
        %vm2016 = vcmp.eq.s32.totalorder %v230, %v217
        %vm2017 = vcmp.eq.s32.totalorder %v624, %v217
        %vm2018 = vcmp.eq.s32.totalorder %v230, %v2001
        %vm2019 = vcmp.eq.s32.totalorder %v624, %v2001
        %vm2020 = vcmp.eq.s32.totalorder %v230, %v2002
        %vm2021 = vcmp.eq.s32.totalorder %v624, %v2002
        %vm2022 = vcmp.eq.s32.totalorder %v230, %v2003
        %vm2023 = vcmp.eq.s32.totalorder %v624, %v2003
        %vm2024 = vcmp.eq.s32.totalorder %v230, %v2004
        %vm2025 = vcmp.eq.s32.totalorder %v624, %v2004
        %vm2026 = vcmp.eq.s32.totalorder %v230, %v2005
        %vm2027 = vcmp.eq.s32.totalorder %v624, %v2005
        %vm2028 = vcmp.eq.s32.totalorder %v230, %v2006
        %vm2029 = vcmp.eq.s32.totalorder %v624, %v2006
        %vm2030 = vcmp.eq.s32.totalorder %v230, %v2007
        %vm2031 = vcmp.eq.s32.totalorder %v624, %v2007
        %vm2032 = vcmp.eq.s32.totalorder %v230, %v2008
        %vm2033 = vcmp.eq.s32.totalorder %v624, %v2008
        %vm2034 = vcmp.eq.s32.totalorder %v230, %v2009
        %vm2035 = vcmp.eq.s32.totalorder %v624, %v2009
        %vm2036 = vcmp.eq.s32.totalorder %v230, %v2010
        %vm2037 = vcmp.eq.s32.totalorder %v624, %v2010
        %vm2038 = vcmp.eq.s32.totalorder %v230, %v2011
        %vm2039 = vcmp.eq.s32.totalorder %v624, %v2011
        %vm2040 = vcmp.eq.s32.totalorder %v230, %v2012
        %vm2041 = vcmp.eq.s32.totalorder %v624, %v2012
        %vm2042 = vcmp.eq.s32.totalorder %v230, %v2013
        %vm2043 = vcmp.eq.s32.totalorder %v624, %v2013
        %vm2044 = vcmp.eq.s32.totalorder %v230, %v2014
        %vm2045 = vcmp.eq.s32.totalorder %v624, %v2014
        %vm2046 = vcmp.eq.s32.totalorder %v230, %v2015
        %vm2047 = vcmp.eq.s32.totalorder %v624, %v2015
        %v2048 = vadd.s32 %v198, 176
        %v2049 = vadd.s32 %v199, 176
        %v2050 = vadd.s32 %v200, 176
        %v2051 = vadd.s32 %v201, 176
        %v2052 = vadd.s32 %v202, 176
        %v2053 = vadd.s32 %v203, 176
        %v2054 = vadd.s32 %v204, 176
        %v2055 = vadd.s32 %v205, 176
        %v2056 = vadd.s32 %v206, 176
        %v2057 = vadd.s32 %v207, 176
        %v2058 = vadd.s32 %v208, 176
        %v2059 = vadd.s32 %v209, 176
        %v2060 = vadd.s32 %v210, 176
        %v2061 = vadd.s32 %v211, 176
        %v2062 = vadd.s32 %v212, 176
        %vm2063 = vcmp.eq.s32.totalorder %v230, %v219
        %vm2064 = vcmp.eq.s32.totalorder %v624, %v219
        %vm2065 = vcmp.eq.s32.totalorder %v230, %v2048
        %vm2066 = vcmp.eq.s32.totalorder %v624, %v2048
        %vm2067 = vcmp.eq.s32.totalorder %v230, %v2049
        %vm2068 = vcmp.eq.s32.totalorder %v624, %v2049
        %vm2069 = vcmp.eq.s32.totalorder %v230, %v2050
        %vm2070 = vcmp.eq.s32.totalorder %v624, %v2050
        %vm2071 = vcmp.eq.s32.totalorder %v230, %v2051
        %vm2072 = vcmp.eq.s32.totalorder %v624, %v2051
        %vm2073 = vcmp.eq.s32.totalorder %v230, %v2052
        %vm2074 = vcmp.eq.s32.totalorder %v624, %v2052
        %vm2075 = vcmp.eq.s32.totalorder %v230, %v2053
        %vm2076 = vcmp.eq.s32.totalorder %v624, %v2053
        %vm2077 = vcmp.eq.s32.totalorder %v230, %v2054
        %vm2078 = vcmp.eq.s32.totalorder %v624, %v2054
        %vm2079 = vcmp.eq.s32.totalorder %v230, %v2055
        %vm2080 = vcmp.eq.s32.totalorder %v624, %v2055
        %vm2081 = vcmp.eq.s32.totalorder %v230, %v2056
        %vm2082 = vcmp.eq.s32.totalorder %v624, %v2056
        %vm2083 = vcmp.eq.s32.totalorder %v230, %v2057
        %vm2084 = vcmp.eq.s32.totalorder %v624, %v2057
        %vm2085 = vcmp.eq.s32.totalorder %v230, %v2058
        %vm2086 = vcmp.eq.s32.totalorder %v624, %v2058
        %vm2087 = vcmp.eq.s32.totalorder %v230, %v2059
        %vm2088 = vcmp.eq.s32.totalorder %v624, %v2059
        %vm2089 = vcmp.eq.s32.totalorder %v230, %v2060
        %vm2090 = vcmp.eq.s32.totalorder %v624, %v2060
        %vm2091 = vcmp.eq.s32.totalorder %v230, %v2061
        %vm2092 = vcmp.eq.s32.totalorder %v624, %v2061
        %vm2093 = vcmp.eq.s32.totalorder %v230, %v2062
        %vm2094 = vcmp.eq.s32.totalorder %v624, %v2062
        %v2095 = vadd.s32 %v198, 192
        %v2096 = vadd.s32 %v199, 192
        %v2097 = vadd.s32 %v200, 192
        %v2098 = vadd.s32 %v201, 192
        %v2099 = vadd.s32 %v202, 192
        %v2100 = vadd.s32 %v203, 192
        %v2101 = vadd.s32 %v204, 192
        %v2102 = vadd.s32 %v205, 192
        %v2103 = vadd.s32 %v206, 192
        %v2104 = vadd.s32 %v207, 192
        %v2105 = vadd.s32 %v208, 192
        %v2106 = vadd.s32 %v209, 192
        %v2107 = vadd.s32 %v210, 192
        %v2108 = vadd.s32 %v211, 192
        %v2109 = vadd.s32 %v212, 192
        %vm2110 = vcmp.eq.s32.totalorder %v230, %v221
        %vm2111 = vcmp.eq.s32.totalorder %v624, %v221
        %vm2112 = vcmp.eq.s32.totalorder %v230, %v2095
        %vm2113 = vcmp.eq.s32.totalorder %v624, %v2095
        %vm2114 = vcmp.eq.s32.totalorder %v230, %v2096
        %vm2115 = vcmp.eq.s32.totalorder %v624, %v2096
        %vm2116 = vcmp.eq.s32.totalorder %v230, %v2097
        %vm2117 = vcmp.eq.s32.totalorder %v624, %v2097
        %vm2118 = vcmp.eq.s32.totalorder %v230, %v2098
        %vm2119 = vcmp.eq.s32.totalorder %v624, %v2098
        %vm2120 = vcmp.eq.s32.totalorder %v230, %v2099
        %vm2121 = vcmp.eq.s32.totalorder %v624, %v2099
        %vm2122 = vcmp.eq.s32.totalorder %v230, %v2100
        %vm2123 = vcmp.eq.s32.totalorder %v624, %v2100
        %vm2124 = vcmp.eq.s32.totalorder %v230, %v2101
        %vm2125 = vcmp.eq.s32.totalorder %v624, %v2101
        %vm2126 = vcmp.eq.s32.totalorder %v230, %v2102
        %vm2127 = vcmp.eq.s32.totalorder %v624, %v2102
        %vm2128 = vcmp.eq.s32.totalorder %v230, %v2103
        %vm2129 = vcmp.eq.s32.totalorder %v624, %v2103
        %vm2130 = vcmp.eq.s32.totalorder %v230, %v2104
        %vm2131 = vcmp.eq.s32.totalorder %v624, %v2104
        %vm2132 = vcmp.eq.s32.totalorder %v230, %v2105
        %vm2133 = vcmp.eq.s32.totalorder %v624, %v2105
        %vm2134 = vcmp.eq.s32.totalorder %v230, %v2106
        %vm2135 = vcmp.eq.s32.totalorder %v624, %v2106
        %vm2136 = vcmp.eq.s32.totalorder %v230, %v2107
        %vm2137 = vcmp.eq.s32.totalorder %v624, %v2107
        %vm2138 = vcmp.eq.s32.totalorder %v230, %v2108
        %vm2139 = vcmp.eq.s32.totalorder %v624, %v2108
        %vm2140 = vcmp.eq.s32.totalorder %v230, %v2109
        %vm2141 = vcmp.eq.s32.totalorder %v624, %v2109
        %v2142 = vadd.s32 %v198, 208
        %v2143 = vadd.s32 %v199, 208
        %v2144 = vadd.s32 %v200, 208
        %v2145 = vadd.s32 %v201, 208
        %v2146 = vadd.s32 %v202, 208
        %v2147 = vadd.s32 %v203, 208
        %v2148 = vadd.s32 %v204, 208
        %v2149 = vadd.s32 %v205, 208
        %v2150 = vadd.s32 %v206, 208
        %v2151 = vadd.s32 %v207, 208
        %v2152 = vadd.s32 %v208, 208
        %v2153 = vadd.s32 %v209, 208
        %v2154 = vadd.s32 %v210, 208
        %v2155 = vadd.s32 %v211, 208
        %v2156 = vadd.s32 %v212, 208
        %vm2157 = vcmp.eq.s32.totalorder %v230, %v223
        %vm2158 = vcmp.eq.s32.totalorder %v624, %v223
        %vm2159 = vcmp.eq.s32.totalorder %v230, %v2142
        %vm2160 = vcmp.eq.s32.totalorder %v624, %v2142
        %vm2161 = vcmp.eq.s32.totalorder %v230, %v2143
        %vm2162 = vcmp.eq.s32.totalorder %v624, %v2143
        %vm2163 = vcmp.eq.s32.totalorder %v230, %v2144
        %vm2164 = vcmp.eq.s32.totalorder %v624, %v2144
        %vm2165 = vcmp.eq.s32.totalorder %v230, %v2145
        %vm2166 = vcmp.eq.s32.totalorder %v624, %v2145
        %vm2167 = vcmp.eq.s32.totalorder %v230, %v2146
        %vm2168 = vcmp.eq.s32.totalorder %v624, %v2146
        %vm2169 = vcmp.eq.s32.totalorder %v230, %v2147
        %vm2170 = vcmp.eq.s32.totalorder %v624, %v2147
        %vm2171 = vcmp.eq.s32.totalorder %v230, %v2148
        %vm2172 = vcmp.eq.s32.totalorder %v624, %v2148
        %vm2173 = vcmp.eq.s32.totalorder %v230, %v2149
        %vm2174 = vcmp.eq.s32.totalorder %v624, %v2149
        %vm2175 = vcmp.eq.s32.totalorder %v230, %v2150
        %vm2176 = vcmp.eq.s32.totalorder %v624, %v2150
        %vm2177 = vcmp.eq.s32.totalorder %v230, %v2151
        %vm2178 = vcmp.eq.s32.totalorder %v624, %v2151
        %vm2179 = vcmp.eq.s32.totalorder %v230, %v2152
        %vm2180 = vcmp.eq.s32.totalorder %v624, %v2152
        %vm2181 = vcmp.eq.s32.totalorder %v230, %v2153
        %vm2182 = vcmp.eq.s32.totalorder %v624, %v2153
        %vm2183 = vcmp.eq.s32.totalorder %v230, %v2154
        %vm2184 = vcmp.eq.s32.totalorder %v624, %v2154
        %vm2185 = vcmp.eq.s32.totalorder %v230, %v2155
        %vm2186 = vcmp.eq.s32.totalorder %v624, %v2155
        %vm2187 = vcmp.eq.s32.totalorder %v230, %v2156
        %vm2188 = vcmp.eq.s32.totalorder %v624, %v2156
        %v2189 = vadd.s32 %v198, 224
        %v2190 = vadd.s32 %v199, 224
        %v2191 = vadd.s32 %v200, 224
        %v2192 = vadd.s32 %v201, 224
        %v2193 = vadd.s32 %v202, 224
        %v2194 = vadd.s32 %v203, 224
        %v2195 = vadd.s32 %v204, 224
        %v2196 = vadd.s32 %v205, 224
        %v2197 = vadd.s32 %v206, 224
        %v2198 = vadd.s32 %v207, 224
        %v2199 = vadd.s32 %v208, 224
        %v2200 = vadd.s32 %v209, 224
        %v2201 = vadd.s32 %v210, 224
        %v2202 = vadd.s32 %v211, 224
        %v2203 = vadd.s32 %v212, 224
        %vm2204 = vcmp.eq.s32.totalorder %v230, %v225
        %vm2205 = vcmp.eq.s32.totalorder %v624, %v225
        %vm2206 = vcmp.eq.s32.totalorder %v230, %v2189
        %vm2207 = vcmp.eq.s32.totalorder %v624, %v2189
        %vm2208 = vcmp.eq.s32.totalorder %v230, %v2190
        %vm2209 = vcmp.eq.s32.totalorder %v624, %v2190
        %vm2210 = vcmp.eq.s32.totalorder %v230, %v2191
        %vm2211 = vcmp.eq.s32.totalorder %v624, %v2191
        %vm2212 = vcmp.eq.s32.totalorder %v230, %v2192
        %vm2213 = vcmp.eq.s32.totalorder %v624, %v2192
        %vm2214 = vcmp.eq.s32.totalorder %v230, %v2193
        %vm2215 = vcmp.eq.s32.totalorder %v624, %v2193
        %vm2216 = vcmp.eq.s32.totalorder %v230, %v2194
        %vm2217 = vcmp.eq.s32.totalorder %v624, %v2194
        %vm2218 = vcmp.eq.s32.totalorder %v230, %v2195
        %vm2219 = vcmp.eq.s32.totalorder %v624, %v2195
        %vm2220 = vcmp.eq.s32.totalorder %v230, %v2196
        %vm2221 = vcmp.eq.s32.totalorder %v624, %v2196
        %vm2222 = vcmp.eq.s32.totalorder %v230, %v2197
        %vm2223 = vcmp.eq.s32.totalorder %v624, %v2197
        %vm2224 = vcmp.eq.s32.totalorder %v230, %v2198
        %vm2225 = vcmp.eq.s32.totalorder %v624, %v2198
        %vm2226 = vcmp.eq.s32.totalorder %v230, %v2199
        %vm2227 = vcmp.eq.s32.totalorder %v624, %v2199
        %vm2228 = vcmp.eq.s32.totalorder %v230, %v2200
        %vm2229 = vcmp.eq.s32.totalorder %v624, %v2200
        %vm2230 = vcmp.eq.s32.totalorder %v230, %v2201
        %vm2231 = vcmp.eq.s32.totalorder %v624, %v2201
        %vm2232 = vcmp.eq.s32.totalorder %v230, %v2202
        %vm2233 = vcmp.eq.s32.totalorder %v624, %v2202
        %vm2234 = vcmp.eq.s32.totalorder %v230, %v2203
        %vm2235 = vcmp.eq.s32.totalorder %v624, %v2203
        %v2236 = vadd.s32 %v198, 240
        %v2237 = vadd.s32 %v199, 240
        %v2238 = vadd.s32 %v200, 240
        %v2239 = vadd.s32 %v201, 240
        %v2240 = vadd.s32 %v202, 240
        %v2241 = vadd.s32 %v203, 240
        %v2242 = vadd.s32 %v204, 240
        %v2243 = vadd.s32 %v205, 240
        %v2244 = vadd.s32 %v206, 240
        %v2245 = vadd.s32 %v207, 240
        %v2246 = vadd.s32 %v208, 240
        %v2247 = vadd.s32 %v209, 240
        %v2248 = vadd.s32 %v210, 240
        %v2249 = vadd.s32 %v211, 240
        %v2250 = vadd.s32 %v212, 240
        %vm2251 = vcmp.eq.s32.totalorder %v230, %v227
        %vm2252 = vcmp.eq.s32.totalorder %v624, %v227
        %vm2253 = vcmp.eq.s32.totalorder %v230, %v2236
        %vm2254 = vcmp.eq.s32.totalorder %v624, %v2236
        %vm2255 = vcmp.eq.s32.totalorder %v230, %v2237
        %vm2256 = vcmp.eq.s32.totalorder %v624, %v2237
        %vm2257 = vcmp.eq.s32.totalorder %v230, %v2238
        %vm2258 = vcmp.eq.s32.totalorder %v624, %v2238
        %vm2259 = vcmp.eq.s32.totalorder %v230, %v2239
        %vm2260 = vcmp.eq.s32.totalorder %v624, %v2239
        %vm2261 = vcmp.eq.s32.totalorder %v230, %v2240
        %vm2262 = vcmp.eq.s32.totalorder %v624, %v2240
        %vm2263 = vcmp.eq.s32.totalorder %v230, %v2241
        %vm2264 = vcmp.eq.s32.totalorder %v624, %v2241
        %vm2265 = vcmp.eq.s32.totalorder %v230, %v2242
        %vm2266 = vcmp.eq.s32.totalorder %v624, %v2242
        %vm2267 = vcmp.eq.s32.totalorder %v230, %v2243
        %vm2268 = vcmp.eq.s32.totalorder %v624, %v2243
        %vm2269 = vcmp.eq.s32.totalorder %v230, %v2244
        %vm2270 = vcmp.eq.s32.totalorder %v624, %v2244
        %vm2271 = vcmp.eq.s32.totalorder %v230, %v2245
        %vm2272 = vcmp.eq.s32.totalorder %v624, %v2245
        %vm2273 = vcmp.eq.s32.totalorder %v230, %v2246
        %vm2274 = vcmp.eq.s32.totalorder %v624, %v2246
        %vm2275 = vcmp.eq.s32.totalorder %v230, %v2247
        %vm2276 = vcmp.eq.s32.totalorder %v624, %v2247
        %vm2277 = vcmp.eq.s32.totalorder %v230, %v2248
        %vm2278 = vcmp.eq.s32.totalorder %v624, %v2248
        %vm2279 = vcmp.eq.s32.totalorder %v230, %v2249
        %vm2280 = vcmp.eq.s32.totalorder %v624, %v2249
        %vm2281 = vcmp.eq.s32.totalorder %v230, %v2250
        %vm2282 = vcmp.eq.s32.totalorder %v624, %v2250
        %vm2283 = vmor %vm1560, %vm1564
        %vm2284 = vmor %vm1561, %vm1565
        %vm2285 = vmor %vm1562, %vm1607
        %vm2286 = vmor %vm1563, %vm1608
        %vm2287 = vmor %vm1564, %vm1609
        %vm2288 = vmor %vm1565, %vm1610
        %vm2289 = vmor %vm1566, %vm1611
        %vm2290 = vmor %vm1567, %vm1612
        %vm2291 = vmor %vm1568, %vm1613
        %vm2292 = vmor %vm1569, %vm1614
        %vm2293 = vmor %vm1570, %vm1615
        %vm2294 = vmor %vm1571, %vm1616
        %vm2295 = vmor %vm1572, %vm1617
        %vm2296 = vmor %vm1573, %vm1618
        %vm2297 = vmor %vm1574, %vm1619
        %vm2298 = vmor %vm1575, %vm1620
        %vm2299 = vmor %vm1576, %vm1621
        %vm2300 = vmor %vm1577, %vm1622
        %vm2301 = vmor %vm1578, %vm1623
        %vm2302 = vmor %vm1579, %vm1624
        %vm2303 = vmor %vm1580, %vm1625
        %vm2304 = vmor %vm1581, %vm1626
        %vm2305 = vmor %vm1582, %vm1627
        %vm2306 = vmor %vm1583, %vm1628
        %vm2307 = vmor %vm1584, %vm1629
        %vm2308 = vmor %vm1585, %vm1630
        %vm2309 = vmor %vm1586, %vm1631
        %vm2310 = vmor %vm1587, %vm1632
        %vm2311 = vmor %vm1588, %vm1633
        %vm2312 = vmor %vm1589, %vm1634
        %vm2313 = vmor %vm1590, %vm1635
        %vm2314 = vmor %vm1591, %vm1636
        %vm2315 = vmor %vm2283, %vm1568
        %vm2316 = vmor %vm2284, %vm1569
        %vm2317 = vmor %vm2285, %vm1652
        %vm2318 = vmor %vm2286, %vm1653
        %vm2319 = vmor %vm2287, %vm1654
        %vm2320 = vmor %vm2288, %vm1655
        %vm2321 = vmor %vm2289, %vm1656
        %vm2322 = vmor %vm2290, %vm1657
        %vm2323 = vmor %vm2291, %vm1658
        %vm2324 = vmor %vm2292, %vm1659
        %vm2325 = vmor %vm2293, %vm1660
        %vm2326 = vmor %vm2294, %vm1661
        %vm2327 = vmor %vm2295, %vm1662
        %vm2328 = vmor %vm2296, %vm1663
        %vm2329 = vmor %vm2297, %vm1664
        %vm2330 = vmor %vm2298, %vm1665
        %vm2331 = vmor %vm2299, %vm1666
        %vm2332 = vmor %vm2300, %vm1667
        %vm2333 = vmor %vm2301, %vm1668
        %vm2334 = vmor %vm2302, %vm1669
        %vm2335 = vmor %vm2303, %vm1670
        %vm2336 = vmor %vm2304, %vm1671
        %vm2337 = vmor %vm2305, %vm1672
        %vm2338 = vmor %vm2306, %vm1673
        %vm2339 = vmor %vm2307, %vm1674
        %vm2340 = vmor %vm2308, %vm1675
        %vm2341 = vmor %vm2309, %vm1676
        %vm2342 = vmor %vm2310, %vm1677
        %vm2343 = vmor %vm2311, %vm1678
        %vm2344 = vmor %vm2312, %vm1679
        %vm2345 = vmor %vm2313, %vm1680
        %vm2346 = vmor %vm2314, %vm1681
        %vm2347 = vmor %vm2315, %vm1572
        %vm2348 = vmor %vm2316, %vm1573
        %vm2349 = vmor %vm2317, %vm1697
        %vm2350 = vmor %vm2318, %vm1698
        %vm2351 = vmor %vm2319, %vm1699
        %vm2352 = vmor %vm2320, %vm1700
        %vm2353 = vmor %vm2321, %vm1701
        %vm2354 = vmor %vm2322, %vm1702
        %vm2355 = vmor %vm2323, %vm1703
        %vm2356 = vmor %vm2324, %vm1704
        %vm2357 = vmor %vm2325, %vm1705
        %vm2358 = vmor %vm2326, %vm1706
        %vm2359 = vmor %vm2327, %vm1707
        %vm2360 = vmor %vm2328, %vm1708
        %vm2361 = vmor %vm2329, %vm1709
        %vm2362 = vmor %vm2330, %vm1710
        %vm2363 = vmor %vm2331, %vm1711
        %vm2364 = vmor %vm2332, %vm1712
        %vm2365 = vmor %vm2333, %vm1713
        %vm2366 = vmor %vm2334, %vm1714
        %vm2367 = vmor %vm2335, %vm1715
        %vm2368 = vmor %vm2336, %vm1716
        %vm2369 = vmor %vm2337, %vm1717
        %vm2370 = vmor %vm2338, %vm1718
        %vm2371 = vmor %vm2339, %vm1719
        %vm2372 = vmor %vm2340, %vm1720
        %vm2373 = vmor %vm2341, %vm1721
        %vm2374 = vmor %vm2342, %vm1722
        %vm2375 = vmor %vm2343, %vm1723
        %vm2376 = vmor %vm2344, %vm1724
        %vm2377 = vmor %vm2345, %vm1725
        %vm2378 = vmor %vm2346, %vm1726
        %vm2379 = vmor %vm2347, %vm1576
        %vm2380 = vmor %vm2348, %vm1577
        %vm2381 = vmor %vm2349, %vm1742
        %vm2382 = vmor %vm2350, %vm1743
        %vm2383 = vmor %vm2351, %vm1744
        %vm2384 = vmor %vm2352, %vm1745
        %vm2385 = vmor %vm2353, %vm1746
        %vm2386 = vmor %vm2354, %vm1747
        %vm2387 = vmor %vm2355, %vm1748
        %vm2388 = vmor %vm2356, %vm1749
        %vm2389 = vmor %vm2357, %vm1750
        %vm2390 = vmor %vm2358, %vm1751
        %vm2391 = vmor %vm2359, %vm1752
        %vm2392 = vmor %vm2360, %vm1753
        %vm2393 = vmor %vm2361, %vm1754
        %vm2394 = vmor %vm2362, %vm1755
        %vm2395 = vmor %vm2363, %vm1756
        %vm2396 = vmor %vm2364, %vm1757
        %vm2397 = vmor %vm2365, %vm1758
        %vm2398 = vmor %vm2366, %vm1759
        %vm2399 = vmor %vm2367, %vm1760
        %vm2400 = vmor %vm2368, %vm1761
        %vm2401 = vmor %vm2369, %vm1762
        %vm2402 = vmor %vm2370, %vm1763
        %vm2403 = vmor %vm2371, %vm1764
        %vm2404 = vmor %vm2372, %vm1765
        %vm2405 = vmor %vm2373, %vm1766
        %vm2406 = vmor %vm2374, %vm1767
        %vm2407 = vmor %vm2375, %vm1768
        %vm2408 = vmor %vm2376, %vm1769
        %vm2409 = vmor %vm2377, %vm1770
        %vm2410 = vmor %vm2378, %vm1771
        %vm2411 = vmor %vm2379, %vm1580
        %vm2412 = vmor %vm2380, %vm1581
        %vm2413 = vmor %vm2381, %vm1787
        %vm2414 = vmor %vm2382, %vm1788
        %vm2415 = vmor %vm2383, %vm1789
        %vm2416 = vmor %vm2384, %vm1790
        %vm2417 = vmor %vm2385, %vm1791
        %vm2418 = vmor %vm2386, %vm1792
        %vm2419 = vmor %vm2387, %vm1793
        %vm2420 = vmor %vm2388, %vm1794
        %vm2421 = vmor %vm2389, %vm1795
        %vm2422 = vmor %vm2390, %vm1796
        %vm2423 = vmor %vm2391, %vm1797
        %vm2424 = vmor %vm2392, %vm1798
        %vm2425 = vmor %vm2393, %vm1799
        %vm2426 = vmor %vm2394, %vm1800
        %vm2427 = vmor %vm2395, %vm1801
        %vm2428 = vmor %vm2396, %vm1802
        %vm2429 = vmor %vm2397, %vm1803
        %vm2430 = vmor %vm2398, %vm1804
        %vm2431 = vmor %vm2399, %vm1805
        %vm2432 = vmor %vm2400, %vm1806
        %vm2433 = vmor %vm2401, %vm1807
        %vm2434 = vmor %vm2402, %vm1808
        %vm2435 = vmor %vm2403, %vm1809
        %vm2436 = vmor %vm2404, %vm1810
        %vm2437 = vmor %vm2405, %vm1811
        %vm2438 = vmor %vm2406, %vm1812
        %vm2439 = vmor %vm2407, %vm1813
        %vm2440 = vmor %vm2408, %vm1814
        %vm2441 = vmor %vm2409, %vm1815
        %vm2442 = vmor %vm2410, %vm1816
        %vm2443 = vmor %vm2411, %vm1584
        %vm2444 = vmor %vm2412, %vm1585
        %vm2445 = vmor %vm2413, %vm1832
        %vm2446 = vmor %vm2414, %vm1833
        %vm2447 = vmor %vm2415, %vm1834
        %vm2448 = vmor %vm2416, %vm1835
        %vm2449 = vmor %vm2417, %vm1836
        %vm2450 = vmor %vm2418, %vm1837
        %vm2451 = vmor %vm2419, %vm1838
        %vm2452 = vmor %vm2420, %vm1839
        %vm2453 = vmor %vm2421, %vm1840
        %vm2454 = vmor %vm2422, %vm1841
        %vm2455 = vmor %vm2423, %vm1842
        %vm2456 = vmor %vm2424, %vm1843
        %vm2457 = vmor %vm2425, %vm1844
        %vm2458 = vmor %vm2426, %vm1845
        %vm2459 = vmor %vm2427, %vm1846
        %vm2460 = vmor %vm2428, %vm1847
        %vm2461 = vmor %vm2429, %vm1848
        %vm2462 = vmor %vm2430, %vm1849
        %vm2463 = vmor %vm2431, %vm1850
        %vm2464 = vmor %vm2432, %vm1851
        %vm2465 = vmor %vm2433, %vm1852
        %vm2466 = vmor %vm2434, %vm1853
        %vm2467 = vmor %vm2435, %vm1854
        %vm2468 = vmor %vm2436, %vm1855
        %vm2469 = vmor %vm2437, %vm1856
        %vm2470 = vmor %vm2438, %vm1857
        %vm2471 = vmor %vm2439, %vm1858
        %vm2472 = vmor %vm2440, %vm1859
        %vm2473 = vmor %vm2441, %vm1860
        %vm2474 = vmor %vm2442, %vm1861
        %vm2475 = vmor %vm2443, %vm1588
        %vm2476 = vmor %vm2444, %vm1589
        %vm2477 = vmor %vm2445, %vm1877
        %vm2478 = vmor %vm2446, %vm1878
        %vm2479 = vmor %vm2447, %vm1879
        %vm2480 = vmor %vm2448, %vm1880
        %vm2481 = vmor %vm2449, %vm1881
        %vm2482 = vmor %vm2450, %vm1882
        %vm2483 = vmor %vm2451, %vm1883
        %vm2484 = vmor %vm2452, %vm1884
        %vm2485 = vmor %vm2453, %vm1885
        %vm2486 = vmor %vm2454, %vm1886
        %vm2487 = vmor %vm2455, %vm1887
        %vm2488 = vmor %vm2456, %vm1888
        %vm2489 = vmor %vm2457, %vm1889
        %vm2490 = vmor %vm2458, %vm1890
        %vm2491 = vmor %vm2459, %vm1891
        %vm2492 = vmor %vm2460, %vm1892
        %vm2493 = vmor %vm2461, %vm1893
        %vm2494 = vmor %vm2462, %vm1894
        %vm2495 = vmor %vm2463, %vm1895
        %vm2496 = vmor %vm2464, %vm1896
        %vm2497 = vmor %vm2465, %vm1897
        %vm2498 = vmor %vm2466, %vm1898
        %vm2499 = vmor %vm2467, %vm1899
        %vm2500 = vmor %vm2468, %vm1900
        %vm2501 = vmor %vm2469, %vm1901
        %vm2502 = vmor %vm2470, %vm1902
        %vm2503 = vmor %vm2471, %vm1903
        %vm2504 = vmor %vm2472, %vm1904
        %vm2505 = vmor %vm2473, %vm1905
        %vm2506 = vmor %vm2474, %vm1906
        %vm2507 = vmor %vm2475, %vm1922
        %vm2508 = vmor %vm2476, %vm1923
        %vm2509 = vmor %vm2477, %vm1924
        %vm2510 = vmor %vm2478, %vm1925
        %vm2511 = vmor %vm2479, %vm1926
        %vm2512 = vmor %vm2480, %vm1927
        %vm2513 = vmor %vm2481, %vm1928
        %vm2514 = vmor %vm2482, %vm1929
        %vm2515 = vmor %vm2483, %vm1930
        %vm2516 = vmor %vm2484, %vm1931
        %vm2517 = vmor %vm2485, %vm1932
        %vm2518 = vmor %vm2486, %vm1933
        %vm2519 = vmor %vm2487, %vm1934
        %vm2520 = vmor %vm2488, %vm1935
        %vm2521 = vmor %vm2489, %vm1936
        %vm2522 = vmor %vm2490, %vm1937
        %vm2523 = vmor %vm2491, %vm1938
        %vm2524 = vmor %vm2492, %vm1939
        %vm2525 = vmor %vm2493, %vm1940
        %vm2526 = vmor %vm2494, %vm1941
        %vm2527 = vmor %vm2495, %vm1942
        %vm2528 = vmor %vm2496, %vm1943
        %vm2529 = vmor %vm2497, %vm1944
        %vm2530 = vmor %vm2498, %vm1945
        %vm2531 = vmor %vm2499, %vm1946
        %vm2532 = vmor %vm2500, %vm1947
        %vm2533 = vmor %vm2501, %vm1948
        %vm2534 = vmor %vm2502, %vm1949
        %vm2535 = vmor %vm2503, %vm1950
        %vm2536 = vmor %vm2504, %vm1951
        %vm2537 = vmor %vm2505, %vm1952
        %vm2538 = vmor %vm2506, %vm1953
        %vm2539 = vmor %vm2507, %vm1969
        %vm2540 = vmor %vm2508, %vm1970
        %vm2541 = vmor %vm2509, %vm1971
        %vm2542 = vmor %vm2510, %vm1972
        %vm2543 = vmor %vm2511, %vm1973
        %vm2544 = vmor %vm2512, %vm1974
        %vm2545 = vmor %vm2513, %vm1975
        %vm2546 = vmor %vm2514, %vm1976
        %vm2547 = vmor %vm2515, %vm1977
        %vm2548 = vmor %vm2516, %vm1978
        %vm2549 = vmor %vm2517, %vm1979
        %vm2550 = vmor %vm2518, %vm1980
        %vm2551 = vmor %vm2519, %vm1981
        %vm2552 = vmor %vm2520, %vm1982
        %vm2553 = vmor %vm2521, %vm1983
        %vm2554 = vmor %vm2522, %vm1984
        %vm2555 = vmor %vm2523, %vm1985
        %vm2556 = vmor %vm2524, %vm1986
        %vm2557 = vmor %vm2525, %vm1987
        %vm2558 = vmor %vm2526, %vm1988
        %vm2559 = vmor %vm2527, %vm1989
        %vm2560 = vmor %vm2528, %vm1990
        %vm2561 = vmor %vm2529, %vm1991
        %vm2562 = vmor %vm2530, %vm1992
        %vm2563 = vmor %vm2531, %vm1993
        %vm2564 = vmor %vm2532, %vm1994
        %vm2565 = vmor %vm2533, %vm1995
        %vm2566 = vmor %vm2534, %vm1996
        %vm2567 = vmor %vm2535, %vm1997
        %vm2568 = vmor %vm2536, %vm1998
        %vm2569 = vmor %vm2537, %vm1999
        %vm2570 = vmor %vm2538, %vm2000
        %vm2571 = vmor %vm2539, %vm2016
        %vm2572 = vmor %vm2540, %vm2017
        %vm2573 = vmor %vm2541, %vm2018
        %vm2574 = vmor %vm2542, %vm2019
        %vm2575 = vmor %vm2543, %vm2020
        %vm2576 = vmor %vm2544, %vm2021
        %vm2577 = vmor %vm2545, %vm2022
        %vm2578 = vmor %vm2546, %vm2023
        %vm2579 = vmor %vm2547, %vm2024
        %vm2580 = vmor %vm2548, %vm2025
        %vm2581 = vmor %vm2549, %vm2026
        %vm2582 = vmor %vm2550, %vm2027
        %vm2583 = vmor %vm2551, %vm2028
        %vm2584 = vmor %vm2552, %vm2029
        %vm2585 = vmor %vm2553, %vm2030
        %vm2586 = vmor %vm2554, %vm2031
        %vm2587 = vmor %vm2555, %vm2032
        %vm2588 = vmor %vm2556, %vm2033
        %vm2589 = vmor %vm2557, %vm2034
        %vm2590 = vmor %vm2558, %vm2035
        %vm2591 = vmor %vm2559, %vm2036
        %vm2592 = vmor %vm2560, %vm2037
        %vm2593 = vmor %vm2561, %vm2038
        %vm2594 = vmor %vm2562, %vm2039
        %vm2595 = vmor %vm2563, %vm2040
        %vm2596 = vmor %vm2564, %vm2041
        %vm2597 = vmor %vm2565, %vm2042
        %vm2598 = vmor %vm2566, %vm2043
        %vm2599 = vmor %vm2567, %vm2044
        %vm2600 = vmor %vm2568, %vm2045
        %vm2601 = vmor %vm2569, %vm2046
        %vm2602 = vmor %vm2570, %vm2047
        %vm2603 = vmor %vm2571, %vm2063
        %vm2604 = vmor %vm2572, %vm2064
        %vm2605 = vmor %vm2573, %vm2065
        %vm2606 = vmor %vm2574, %vm2066
        %vm2607 = vmor %vm2575, %vm2067
        %vm2608 = vmor %vm2576, %vm2068
        %vm2609 = vmor %vm2577, %vm2069
        %vm2610 = vmor %vm2578, %vm2070
        %vm2611 = vmor %vm2579, %vm2071
        %vm2612 = vmor %vm2580, %vm2072
        %vm2613 = vmor %vm2581, %vm2073
        %vm2614 = vmor %vm2582, %vm2074
        %vm2615 = vmor %vm2583, %vm2075
        %vm2616 = vmor %vm2584, %vm2076
        %vm2617 = vmor %vm2585, %vm2077
        %vm2618 = vmor %vm2586, %vm2078
        %vm2619 = vmor %vm2587, %vm2079
        %vm2620 = vmor %vm2588, %vm2080
        %vm2621 = vmor %vm2589, %vm2081
        %vm2622 = vmor %vm2590, %vm2082
        %vm2623 = vmor %vm2591, %vm2083
        %vm2624 = vmor %vm2592, %vm2084
        %vm2625 = vmor %vm2593, %vm2085
        %vm2626 = vmor %vm2594, %vm2086
        %vm2627 = vmor %vm2595, %vm2087
        %vm2628 = vmor %vm2596, %vm2088
        %vm2629 = vmor %vm2597, %vm2089
        %vm2630 = vmor %vm2598, %vm2090
        %vm2631 = vmor %vm2599, %vm2091
        %vm2632 = vmor %vm2600, %vm2092
        %vm2633 = vmor %vm2601, %vm2093
        %vm2634 = vmor %vm2602, %vm2094
        %vm2635 = vmor %vm2603, %vm2110
        %vm2636 = vmor %vm2604, %vm2111
        %vm2637 = vmor %vm2605, %vm2112
        %vm2638 = vmor %vm2606, %vm2113
        %vm2639 = vmor %vm2607, %vm2114
        %vm2640 = vmor %vm2608, %vm2115
        %vm2641 = vmor %vm2609, %vm2116
        %vm2642 = vmor %vm2610, %vm2117
        %vm2643 = vmor %vm2611, %vm2118
        %vm2644 = vmor %vm2612, %vm2119
        %vm2645 = vmor %vm2613, %vm2120
        %vm2646 = vmor %vm2614, %vm2121
        %vm2647 = vmor %vm2615, %vm2122
        %vm2648 = vmor %vm2616, %vm2123
        %vm2649 = vmor %vm2617, %vm2124
        %vm2650 = vmor %vm2618, %vm2125
        %vm2651 = vmor %vm2619, %vm2126
        %vm2652 = vmor %vm2620, %vm2127
        %vm2653 = vmor %vm2621, %vm2128
        %vm2654 = vmor %vm2622, %vm2129
        %vm2655 = vmor %vm2623, %vm2130
        %vm2656 = vmor %vm2624, %vm2131
        %vm2657 = vmor %vm2625, %vm2132
        %vm2658 = vmor %vm2626, %vm2133
        %vm2659 = vmor %vm2627, %vm2134
        %vm2660 = vmor %vm2628, %vm2135
        %vm2661 = vmor %vm2629, %vm2136
        %vm2662 = vmor %vm2630, %vm2137
        %vm2663 = vmor %vm2631, %vm2138
        %vm2664 = vmor %vm2632, %vm2139
        %vm2665 = vmor %vm2633, %vm2140
        %vm2666 = vmor %vm2634, %vm2141
        %vm2667 = vmor %vm2635, %vm2157
        %vm2668 = vmor %vm2636, %vm2158
        %vm2669 = vmor %vm2637, %vm2159
        %vm2670 = vmor %vm2638, %vm2160
        %vm2671 = vmor %vm2639, %vm2161
        %vm2672 = vmor %vm2640, %vm2162
        %vm2673 = vmor %vm2641, %vm2163
        %vm2674 = vmor %vm2642, %vm2164
        %vm2675 = vmor %vm2643, %vm2165
        %vm2676 = vmor %vm2644, %vm2166
        %vm2677 = vmor %vm2645, %vm2167
        %vm2678 = vmor %vm2646, %vm2168
        %vm2679 = vmor %vm2647, %vm2169
        %vm2680 = vmor %vm2648, %vm2170
        %vm2681 = vmor %vm2649, %vm2171
        %vm2682 = vmor %vm2650, %vm2172
        %vm2683 = vmor %vm2651, %vm2173
        %vm2684 = vmor %vm2652, %vm2174
        %vm2685 = vmor %vm2653, %vm2175
        %vm2686 = vmor %vm2654, %vm2176
        %vm2687 = vmor %vm2655, %vm2177
        %vm2688 = vmor %vm2656, %vm2178
        %vm2689 = vmor %vm2657, %vm2179
        %vm2690 = vmor %vm2658, %vm2180
        %vm2691 = vmor %vm2659, %vm2181
        %vm2692 = vmor %vm2660, %vm2182
        %vm2693 = vmor %vm2661, %vm2183
        %vm2694 = vmor %vm2662, %vm2184
        %vm2695 = vmor %vm2663, %vm2185
        %vm2696 = vmor %vm2664, %vm2186
        %vm2697 = vmor %vm2665, %vm2187
        %vm2698 = vmor %vm2666, %vm2188
        %vm2699 = vmor %vm2667, %vm2204
        %vm2700 = vmor %vm2668, %vm2205
        %vm2701 = vmor %vm2669, %vm2206
        %vm2702 = vmor %vm2670, %vm2207
        %vm2703 = vmor %vm2671, %vm2208
        %vm2704 = vmor %vm2672, %vm2209
        %vm2705 = vmor %vm2673, %vm2210
        %vm2706 = vmor %vm2674, %vm2211
        %vm2707 = vmor %vm2675, %vm2212
        %vm2708 = vmor %vm2676, %vm2213
        %vm2709 = vmor %vm2677, %vm2214
        %vm2710 = vmor %vm2678, %vm2215
        %vm2711 = vmor %vm2679, %vm2216
        %vm2712 = vmor %vm2680, %vm2217
        %vm2713 = vmor %vm2681, %vm2218
        %vm2714 = vmor %vm2682, %vm2219
        %vm2715 = vmor %vm2683, %vm2220
        %vm2716 = vmor %vm2684, %vm2221
        %vm2717 = vmor %vm2685, %vm2222
        %vm2718 = vmor %vm2686, %vm2223
        %vm2719 = vmor %vm2687, %vm2224
        %vm2720 = vmor %vm2688, %vm2225
        %vm2721 = vmor %vm2689, %vm2226
        %vm2722 = vmor %vm2690, %vm2227
        %vm2723 = vmor %vm2691, %vm2228
        %vm2724 = vmor %vm2692, %vm2229
        %vm2725 = vmor %vm2693, %vm2230
        %vm2726 = vmor %vm2694, %vm2231
        %vm2727 = vmor %vm2695, %vm2232
        %vm2728 = vmor %vm2696, %vm2233
        %vm2729 = vmor %vm2697, %vm2234
        %vm2730 = vmor %vm2698, %vm2235
        %vm2731 = vmor %vm2699, %vm2251
        %vm2732 = vmor %vm2700, %vm2252
        %vm2733 = vmor %vm2701, %vm2253
        %vm2734 = vmor %vm2702, %vm2254
        %vm2735 = vmor %vm2703, %vm2255
        %vm2736 = vmor %vm2704, %vm2256
        %vm2737 = vmor %vm2705, %vm2257
        %vm2738 = vmor %vm2706, %vm2258
        %vm2739 = vmor %vm2707, %vm2259
        %vm2740 = vmor %vm2708, %vm2260
        %vm2741 = vmor %vm2709, %vm2261
        %vm2742 = vmor %vm2710, %vm2262
        %vm2743 = vmor %vm2711, %vm2263
        %vm2744 = vmor %vm2712, %vm2264
        %vm2745 = vmor %vm2713, %vm2265
        %vm2746 = vmor %vm2714, %vm2266
        %vm2747 = vmor %vm2715, %vm2267
        %vm2748 = vmor %vm2716, %vm2268
        %vm2749 = vmor %vm2717, %vm2269
        %vm2750 = vmor %vm2718, %vm2270
        %vm2751 = vmor %vm2719, %vm2271
        %vm2752 = vmor %vm2720, %vm2272
        %vm2753 = vmor %vm2721, %vm2273
        %vm2754 = vmor %vm2722, %vm2274
        %vm2755 = vmor %vm2723, %vm2275
        %vm2756 = vmor %vm2724, %vm2276
        %vm2757 = vmor %vm2725, %vm2277
        %vm2758 = vmor %vm2726, %vm2278
        %vm2759 = vmor %vm2727, %vm2279
        %vm2760 = vmor %vm2728, %vm2280
        %vm2761 = vmor %vm2729, %vm2281
        %vm2762 = vmor %vm2730, %vm2282
        %v2763 = vsel %vm2731, 1.0, 0.0
        %v2764 = vsel %vm2732, 1.0, 0.0
        %v2765 = vsel %vm2733, 1.0, 0.0
        %v2766 = vsel %vm2734, 1.0, 0.0
        %v2767 = vsel %vm2735, 1.0, 0.0
        %v2768 = vsel %vm2736, 1.0, 0.0
        %v2769 = vsel %vm2737, 1.0, 0.0
        %v2770 = vsel %vm2738, 1.0, 0.0
        %v2771 = vsel %vm2739, 1.0, 0.0
        %v2772 = vsel %vm2740, 1.0, 0.0
        %v2773 = vsel %vm2741, 1.0, 0.0
        %v2774 = vsel %vm2742, 1.0, 0.0
        %v2775 = vsel %vm2743, 1.0, 0.0
        %v2776 = vsel %vm2744, 1.0, 0.0
        %v2777 = vsel %vm2745, 1.0, 0.0
        %v2778 = vsel %vm2746, 1.0, 0.0
        %v2779 = vsel %vm2747, 1.0, 0.0
        %v2780 = vsel %vm2748, 1.0, 0.0
        %v2781 = vsel %vm2749, 1.0, 0.0
        %v2782 = vsel %vm2750, 1.0, 0.0
        %v2783 = vsel %vm2751, 1.0, 0.0
        %v2784 = vsel %vm2752, 1.0, 0.0
        %v2785 = vsel %vm2753, 1.0, 0.0
        %v2786 = vsel %vm2754, 1.0, 0.0
        %v2787 = vsel %vm2755, 1.0, 0.0
        %v2788 = vsel %vm2756, 1.0, 0.0
        %v2789 = vsel %vm2757, 1.0, 0.0
        %v2790 = vsel %vm2758, 1.0, 0.0
        %v2791 = vsel %vm2759, 1.0, 0.0
        %v2792 = vsel %vm2760, 1.0, 0.0
        %v2793 = vsel %vm2761, 1.0, 0.0
        %v2794 = vsel %vm2762, 1.0, 0.0
        %2795 = vmatprep.subr.mxu0 0.0
        %2796 = vmatpush1.msra.mxu0 %v195
        %2797 = vmatprep.subr.mxu0 0.0
        %2798 = vmatpush1.msra.mxu0 %v194
        %2799 = vmatprep.subr.mxu0 0.0
        %2800 = vmatpush1.msra.mxu0 %v193
        %2801 = vmatprep.subr.mxu0 0.0
        %2802 = vmatpush1.msra.mxu0 %v192
        %2803 = vmatprep.subr.mxu0 0.0
        %2804 = vmatpush1.msra.mxu0 %v191
        %2805 = vmatprep.subr.mxu0 0.0
        %2806 = vmatpush1.msra.mxu0 %v190
        %2807 = vmatprep.subr.mxu0 0.0
        %2808 = vmatpush1.msra.mxu0 %v189
        %2809 = vmatprep.subr.mxu0 0.0
        %2810 = vmatpush1.msra.mxu0 %v188
        %2811 = vmatprep.subr.mxu0 0.0
        %2812 = vmatpush1.msra.mxu0 %v187
        %2813 = vmatprep.subr.mxu0 0.0
        %2814 = vmatpush1.msra.mxu0 %v186
        %2815 = vmatprep.subr.mxu0 0.0
        %2816 = vmatpush1.msra.mxu0 %v185
        %2817 = vmatprep.subr.mxu0 0.0
        %2818 = vmatpush1.msra.mxu0 %v184
        %2819 = vmatprep.subr.mxu0 0.0
        %2820 = vmatpush1.msra.mxu0 %v183
        %2821 = vmatprep.subr.mxu0 0.0
        %2822 = vmatpush1.msra.mxu0 %v182
        %2823 = vmatprep.subr.mxu0 0.0
        %2824 = vmatpush1.msra.mxu0 %v181
        %2825 = vmatprep.subr.mxu0 0.0
        %2826 = vmatpush1.msra.mxu0 %v180
        %2827 = vmatprep.subr.mxu0 0.0
        %2828 = vmatpush2.msra.mxu0 0.0
        %2829 = vmatprep.subr.mxu0 0.0
        %2830 = vmatpush2.msra.mxu0 0.0
        %2831 = vmatprep.subr.mxu0 0.0
        %2832 = vmatpush2.msra.mxu0 0.0
        %2833 = vmatprep.subr.mxu0 0.0
        %2834 = vmatpush2.msra.mxu0 0.0
        %2835 = vmatprep.subr.mxu0 0.0
        %2836 = vmatpush2.msra.mxu0 0.0
        %2837 = vmatprep.subr.mxu0 0.0
        %2838 = vmatpush2.msra.mxu0 0.0
        %2839 = vmatprep.subr.mxu0 0.0
        %2840 = vmatpush2.msra.mxu0 0.0
        %2841 = vmatprep.subr.mxu0 0.0
        %2842 = vmatpush2.msra.mxu0 0.0
        %2843 = vmatprep.subr.mxu0 0.0
        %2844 = vmatpush2.msra.mxu0 0.0
        %2845 = vmatprep.subr.mxu0 0.0
        %2846 = vmatpush2.msra.mxu0 0.0
        %2847 = vmatprep.subr.mxu0 0.0
        %2848 = vmatpush2.msra.mxu0 0.0
        %2849 = vmatprep.subr.mxu0 0.0
        %2850 = vmatpush2.msra.mxu0 0.0
        %2851 = vmatprep.subr.mxu0 0.0
        %2852 = vmatpush2.msra.mxu0 0.0
        %2853 = vmatprep.subr.mxu0 0.0
        %2854 = vmatpush2.msra.mxu0 0.0
        %2855 = vmatprep.subr.mxu0 0.0
        %2856 = vmatpush2.msra.mxu0 0.0
        %2857 = vmatprep.subr.mxu0 0.0
        %2858 = vmatpush2.msra.mxu0 0.0
        %2859 = vmatprep.mubr.f32.mxu0 0.0
        %2860 = vmatmul.mubr.f32.gmra.mxu0 %v329
        %v2861 = vpop.f32.mrf.mxu0
        %v2862 = vadd.f32 0.0, %v2861
        %v2863 = vpop.f32.mrf.mxu0
        %2864 = vmatprep.mubr.f32.mxu0 0.0
        %2865 = vmatmul.mubr.f32.gmra.mxu0 %v330
        %v2866 = vpop.f32.mrf.mxu0
        %v2867 = vadd.f32 0.0, %v2866
        %v2868 = vpop.f32.mrf.mxu0
        %2869 = vmatprep.mubr.f32.mxu0 0.0
        %2870 = vmatmul.mubr.f32.gmra.mxu0 %v331
        %v2871 = vpop.f32.mrf.mxu0
        %v2872 = vadd.f32 0.0, %v2871
        %v2873 = vpop.f32.mrf.mxu0
        %2874 = vmatprep.mubr.f32.mxu0 0.0
        %2875 = vmatmul.mubr.f32.gmra.mxu0 %v332
        %v2876 = vpop.f32.mrf.mxu0
        %v2877 = vadd.f32 0.0, %v2876
        %v2878 = vpop.f32.mrf.mxu0
        %2879 = vmatprep.mubr.f32.mxu0 0.0
        %2880 = vmatmul.mubr.f32.gmra.mxu0 %v333
        %v2881 = vpop.f32.mrf.mxu0
        %v2882 = vadd.f32 0.0, %v2881
        %v2883 = vpop.f32.mrf.mxu0
        %2884 = vmatprep.mubr.f32.mxu0 0.0
        %2885 = vmatmul.mubr.f32.gmra.mxu0 %v334
        %v2886 = vpop.f32.mrf.mxu0
        %v2887 = vadd.f32 0.0, %v2886
        %v2888 = vpop.f32.mrf.mxu0
        %2889 = vmatprep.mubr.f32.mxu0 0.0
        %2890 = vmatmul.mubr.f32.gmra.mxu0 %v335
        %v2891 = vpop.f32.mrf.mxu0
        %v2892 = vadd.f32 0.0, %v2891
        %v2893 = vpop.f32.mrf.mxu0
        %2894 = vmatprep.mubr.f32.mxu0 0.0
        %2895 = vmatmul.mubr.f32.gmra.mxu0 %v336
        %v2896 = vpop.f32.mrf.mxu0
        %v2897 = vadd.f32 0.0, %v2896
        %v2898 = vpop.f32.mrf.mxu0
        %2899 = vmatprep.mubr.f32.mxu0 0.0
        %2900 = vmatmul.mubr.f32.gmra.mxu0 %v337
        %v2901 = vpop.f32.mrf.mxu0
        %v2902 = vadd.f32 0.0, %v2901
        %v2903 = vpop.f32.mrf.mxu0
        %2904 = vmatprep.mubr.f32.mxu0 0.0
        %2905 = vmatmul.mubr.f32.gmra.mxu0 %v338
        %v2906 = vpop.f32.mrf.mxu0
        %v2907 = vadd.f32 0.0, %v2906
        %v2908 = vpop.f32.mrf.mxu0
        %2909 = vmatprep.mubr.f32.mxu0 0.0
        %2910 = vmatmul.mubr.f32.gmra.mxu0 %v339
        %v2911 = vpop.f32.mrf.mxu0
        %v2912 = vadd.f32 0.0, %v2911
        %v2913 = vpop.f32.mrf.mxu0
        %2914 = vmatprep.mubr.f32.mxu0 0.0
        %2915 = vmatmul.mubr.f32.gmra.mxu0 %v340
        %v2916 = vpop.f32.mrf.mxu0
        %v2917 = vadd.f32 0.0, %v2916
        %v2918 = vpop.f32.mrf.mxu0
        %2919 = vmatprep.mubr.f32.mxu0 0.0
        %2920 = vmatmul.mubr.f32.gmra.mxu0 %v341
        %v2921 = vpop.f32.mrf.mxu0
        %v2922 = vadd.f32 0.0, %v2921
        %v2923 = vpop.f32.mrf.mxu0
        %2924 = vmatprep.mubr.f32.mxu0 0.0
        %2925 = vmatmul.mubr.f32.gmra.mxu0 %v342
        %v2926 = vpop.f32.mrf.mxu0
        %v2927 = vadd.f32 0.0, %v2926
        %v2928 = vpop.f32.mrf.mxu0
        %2929 = vmatprep.mubr.f32.mxu0 0.0
        %2930 = vmatmul.mubr.f32.gmra.mxu0 %v343
        %v2931 = vpop.f32.mrf.mxu0
        %v2932 = vadd.f32 0.0, %v2931
        %v2933 = vpop.f32.mrf.mxu0
        %2934 = vmatprep.mubr.f32.mxu0 0.0
        %2935 = vmatmul.mubr.f32.gmra.mxu0 %v344
        %v2936 = vpop.f32.mrf.mxu0
        %v2937 = vadd.f32 0.0, %v2936
        %v2938 = vpop.f32.mrf.mxu0
        %2939 = vmatprep.mubr.f32.mxu0 0.0
        %2940 = vmatmul.mubr.f32.gmra.mxu0 %v345
        %v2941 = vpop.f32.mrf.mxu0
        %v2942 = vadd.f32 0.0, %v2941
        %v2943 = vpop.f32.mrf.mxu0
        %2944 = vmatprep.mubr.f32.mxu0 0.0
        %2945 = vmatmul.mubr.f32.gmra.mxu0 %v346
        %v2946 = vpop.f32.mrf.mxu0
        %v2947 = vadd.f32 0.0, %v2946
        %v2948 = vpop.f32.mrf.mxu0
        %2949 = vmatprep.mubr.f32.mxu0 0.0
        %2950 = vmatmul.mubr.f32.gmra.mxu0 %v347
        %v2951 = vpop.f32.mrf.mxu0
        %v2952 = vadd.f32 0.0, %v2951
        %v2953 = vpop.f32.mrf.mxu0
        %2954 = vmatprep.mubr.f32.mxu0 0.0
        %2955 = vmatmul.mubr.f32.gmra.mxu0 %v348
        %v2956 = vpop.f32.mrf.mxu0
        %v2957 = vadd.f32 0.0, %v2956
        %v2958 = vpop.f32.mrf.mxu0
        %2959 = vmatprep.mubr.f32.mxu0 0.0
        %2960 = vmatmul.mubr.f32.gmra.mxu0 %v349
        %v2961 = vpop.f32.mrf.mxu0
        %v2962 = vadd.f32 0.0, %v2961
        %v2963 = vpop.f32.mrf.mxu0
        %2964 = vmatprep.mubr.f32.mxu0 0.0
        %2965 = vmatmul.mubr.f32.gmra.mxu0 %v350
        %v2966 = vpop.f32.mrf.mxu0
        %v2967 = vadd.f32 0.0, %v2966
        %v2968 = vpop.f32.mrf.mxu0
        %2969 = vmatprep.mubr.f32.mxu0 0.0
        %2970 = vmatmul.mubr.f32.gmra.mxu0 %v351
        %v2971 = vpop.f32.mrf.mxu0
        %v2972 = vadd.f32 0.0, %v2971
        %v2973 = vpop.f32.mrf.mxu0
        %2974 = vmatprep.mubr.f32.mxu0 0.0
        %2975 = vmatmul.mubr.f32.gmra.mxu0 %v352
        %v2976 = vpop.f32.mrf.mxu0
        %v2977 = vadd.f32 0.0, %v2976
        %v2978 = vpop.f32.mrf.mxu0
        %2979 = vmatprep.mubr.f32.mxu0 0.0
        %2980 = vmatmul.mubr.f32.gmra.mxu0 %v353
        %v2981 = vpop.f32.mrf.mxu0
        %v2982 = vadd.f32 0.0, %v2981
        %v2983 = vpop.f32.mrf.mxu0
        %2984 = vmatprep.mubr.f32.mxu0 0.0
        %2985 = vmatmul.mubr.f32.gmra.mxu0 %v354
        %v2986 = vpop.f32.mrf.mxu0
        %v2987 = vadd.f32 0.0, %v2986
        %v2988 = vpop.f32.mrf.mxu0
        %2989 = vmatprep.mubr.f32.mxu0 0.0
        %2990 = vmatmul.mubr.f32.gmra.mxu0 %v355
        %v2991 = vpop.f32.mrf.mxu0
        %v2992 = vadd.f32 0.0, %v2991
        %v2993 = vpop.f32.mrf.mxu0
        %2994 = vmatprep.mubr.f32.mxu0 0.0
        %2995 = vmatmul.mubr.f32.gmra.mxu0 %v356
        %v2996 = vpop.f32.mrf.mxu0
        %v2997 = vadd.f32 0.0, %v2996
        %v2998 = vpop.f32.mrf.mxu0
        %2999 = vmatprep.mubr.f32.mxu0 0.0
        %3000 = vmatmul.mubr.f32.gmra.mxu0 %v357
        %v3001 = vpop.f32.mrf.mxu0
        %v3002 = vadd.f32 0.0, %v3001
        %v3003 = vpop.f32.mrf.mxu0
        %3004 = vmatprep.mubr.f32.mxu0 0.0
        %3005 = vmatmul.mubr.f32.gmra.mxu0 %v358
        %v3006 = vpop.f32.mrf.mxu0
        %v3007 = vadd.f32 0.0, %v3006
        %v3008 = vpop.f32.mrf.mxu0
        %3009 = vmatprep.mubr.f32.mxu0 0.0
        %3010 = vmatmul.mubr.f32.gmra.mxu0 %v359
        %v3011 = vpop.f32.mrf.mxu0
        %v3012 = vadd.f32 0.0, %v3011
        %v3013 = vpop.f32.mrf.mxu0
        %3014 = vmatprep.mubr.f32.mxu0 0.0
        %3015 = vmatmul.mubr.f32.gmra.mxu0 %v360
        %v3016 = vpop.f32.mrf.mxu0
        %v3017 = vadd.f32 0.0, %v3016
        %v3018 = vpop.f32.mrf.mxu0
        %3019 = vdwg.mxu0
        %3020 = vmatprep.subr.mxu0 %v1559
        %3021 = vmatpush1.msra.mxu0 %v1558
        %3022 = vmatprep.subr.mxu0 %v1557
        %3023 = vmatpush1.msra.mxu0 %v1556
        %3024 = vmatprep.subr.mxu0 %v1555
        %3025 = vmatpush1.msra.mxu0 %v1554
        %3026 = vmatprep.subr.mxu0 %v1553
        %3027 = vmatpush1.msra.mxu0 %v1552
        %3028 = vmatprep.subr.mxu0 %v1551
        %3029 = vmatpush1.msra.mxu0 %v1550
        %3030 = vmatprep.subr.mxu0 %v1549
        %3031 = vmatpush1.msra.mxu0 %v1548
        %3032 = vmatprep.subr.mxu0 %v1547
        %3033 = vmatpush1.msra.mxu0 %v1546
        %3034 = vmatprep.subr.mxu0 %v1545
        %3035 = vmatpush1.msra.mxu0 %v1544
        %3036 = vmatprep.subr.mxu0 %v1543
        %3037 = vmatpush1.msra.mxu0 %v1542
        %3038 = vmatprep.subr.mxu0 %v1541
        %3039 = vmatpush1.msra.mxu0 %v1540
        %3040 = vmatprep.subr.mxu0 %v1539
        %3041 = vmatpush1.msra.mxu0 %v1538
        %3042 = vmatprep.subr.mxu0 %v1537
        %3043 = vmatpush1.msra.mxu0 %v1536
        %3044 = vmatprep.subr.mxu0 %v1535
        %3045 = vmatpush1.msra.mxu0 %v1534
        %3046 = vmatprep.subr.mxu0 %v1533
        %3047 = vmatpush1.msra.mxu0 %v1532
        %3048 = vmatprep.subr.mxu0 %v1531
        %3049 = vmatpush1.msra.mxu0 %v1530
        %3050 = vmatprep.subr.mxu0 %v1529
        %3051 = vmatpush1.msra.mxu0 %v1528
        %3052 = vmatprep.subr.mxu0 0.0
        %3053 = vmatpush2.msra.mxu0 0.0
        %3054 = vmatprep.subr.mxu0 0.0
        %3055 = vmatpush2.msra.mxu0 0.0
        %3056 = vmatprep.subr.mxu0 0.0
        %3057 = vmatpush2.msra.mxu0 0.0
        %3058 = vmatprep.subr.mxu0 0.0
        %3059 = vmatpush2.msra.mxu0 0.0
        %3060 = vmatprep.subr.mxu0 0.0
        %3061 = vmatpush2.msra.mxu0 0.0
        %3062 = vmatprep.subr.mxu0 0.0
        %3063 = vmatpush2.msra.mxu0 0.0
        %3064 = vmatprep.subr.mxu0 0.0
        %3065 = vmatpush2.msra.mxu0 0.0
        %3066 = vmatprep.subr.mxu0 0.0
        %3067 = vmatpush2.msra.mxu0 0.0
        %3068 = vmatprep.subr.mxu0 0.0
        %3069 = vmatpush2.msra.mxu0 0.0
        %3070 = vmatprep.subr.mxu0 0.0
        %3071 = vmatpush2.msra.mxu0 0.0
        %3072 = vmatprep.subr.mxu0 0.0
        %3073 = vmatpush2.msra.mxu0 0.0
        %3074 = vmatprep.subr.mxu0 0.0
        %3075 = vmatpush2.msra.mxu0 0.0
        %3076 = vmatprep.subr.mxu0 0.0
        %3077 = vmatpush2.msra.mxu0 0.0
        %3078 = vmatprep.subr.mxu0 0.0
        %3079 = vmatpush2.msra.mxu0 0.0
        %3080 = vmatprep.subr.mxu0 0.0
        %3081 = vmatpush2.msra.mxu0 0.0
        %3082 = vmatprep.subr.mxu0 0.0
        %3083 = vmatpush2.msra.mxu0 0.0
        %3084 = vmatprep.mubr.f32.mxu0 0.0
        %3085 = vmatmul.mubr.f32.gmra.mxu0 %v2862
        %v3086 = vpop.f32.mrf.mxu0
        %v3087 = vadd.f32 0.0, %v3086
        %v3088 = vpop.f32.mrf.mxu0
        %v3089 = vadd.f32 0.0, %v3088
        %3090 = vmatprep.mubr.f32.mxu0 0.0
        %3091 = vmatmul.mubr.f32.gmra.mxu0 %v2867
        %v3092 = vpop.f32.mrf.mxu0
        %v3093 = vadd.f32 0.0, %v3092
        %v3094 = vpop.f32.mrf.mxu0
        %v3095 = vadd.f32 0.0, %v3094
        %3096 = vmatprep.mubr.f32.mxu0 0.0
        %3097 = vmatmul.mubr.f32.gmra.mxu0 %v2872
        %v3098 = vpop.f32.mrf.mxu0
        %v3099 = vadd.f32 0.0, %v3098
        %v3100 = vpop.f32.mrf.mxu0
        %v3101 = vadd.f32 0.0, %v3100
        %3102 = vmatprep.mubr.f32.mxu0 0.0
        %3103 = vmatmul.mubr.f32.gmra.mxu0 %v2877
        %v3104 = vpop.f32.mrf.mxu0
        %v3105 = vadd.f32 0.0, %v3104
        %v3106 = vpop.f32.mrf.mxu0
        %v3107 = vadd.f32 0.0, %v3106
        %3108 = vmatprep.mubr.f32.mxu0 0.0
        %3109 = vmatmul.mubr.f32.gmra.mxu0 %v2882
        %v3110 = vpop.f32.mrf.mxu0
        %v3111 = vadd.f32 0.0, %v3110
        %v3112 = vpop.f32.mrf.mxu0
        %v3113 = vadd.f32 0.0, %v3112
        %3114 = vmatprep.mubr.f32.mxu0 0.0
        %3115 = vmatmul.mubr.f32.gmra.mxu0 %v2887
        %v3116 = vpop.f32.mrf.mxu0
        %v3117 = vadd.f32 0.0, %v3116
        %v3118 = vpop.f32.mrf.mxu0
        %v3119 = vadd.f32 0.0, %v3118
        %3120 = vmatprep.mubr.f32.mxu0 0.0
        %3121 = vmatmul.mubr.f32.gmra.mxu0 %v2892
        %v3122 = vpop.f32.mrf.mxu0
        %v3123 = vadd.f32 0.0, %v3122
        %v3124 = vpop.f32.mrf.mxu0
        %v3125 = vadd.f32 0.0, %v3124
        %3126 = vmatprep.mubr.f32.mxu0 0.0
        %3127 = vmatmul.mubr.f32.gmra.mxu0 %v2897
        %v3128 = vpop.f32.mrf.mxu0
        %v3129 = vadd.f32 0.0, %v3128
        %v3130 = vpop.f32.mrf.mxu0
        %v3131 = vadd.f32 0.0, %v3130
        %3132 = vmatprep.mubr.f32.mxu0 0.0
        %3133 = vmatmul.mubr.f32.gmra.mxu0 %v2902
        %v3134 = vpop.f32.mrf.mxu0
        %v3135 = vadd.f32 0.0, %v3134
        %v3136 = vpop.f32.mrf.mxu0
        %v3137 = vadd.f32 0.0, %v3136
        %3138 = vmatprep.mubr.f32.mxu0 0.0
        %3139 = vmatmul.mubr.f32.gmra.mxu0 %v2907
        %v3140 = vpop.f32.mrf.mxu0
        %v3141 = vadd.f32 0.0, %v3140
        %v3142 = vpop.f32.mrf.mxu0
        %v3143 = vadd.f32 0.0, %v3142
        %3144 = vmatprep.mubr.f32.mxu0 0.0
        %3145 = vmatmul.mubr.f32.gmra.mxu0 %v2912
        %v3146 = vpop.f32.mrf.mxu0
        %v3147 = vadd.f32 0.0, %v3146
        %v3148 = vpop.f32.mrf.mxu0
        %v3149 = vadd.f32 0.0, %v3148
        %3150 = vmatprep.mubr.f32.mxu0 0.0
        %3151 = vmatmul.mubr.f32.gmra.mxu0 %v2917
        %v3152 = vpop.f32.mrf.mxu0
        %v3153 = vadd.f32 0.0, %v3152
        %v3154 = vpop.f32.mrf.mxu0
        %v3155 = vadd.f32 0.0, %v3154
        %3156 = vmatprep.mubr.f32.mxu0 0.0
        %3157 = vmatmul.mubr.f32.gmra.mxu0 %v2922
        %v3158 = vpop.f32.mrf.mxu0
        %v3159 = vadd.f32 0.0, %v3158
        %v3160 = vpop.f32.mrf.mxu0
        %v3161 = vadd.f32 0.0, %v3160
        %3162 = vmatprep.mubr.f32.mxu0 0.0
        %3163 = vmatmul.mubr.f32.gmra.mxu0 %v2927
        %v3164 = vpop.f32.mrf.mxu0
        %v3165 = vadd.f32 0.0, %v3164
        %v3166 = vpop.f32.mrf.mxu0
        %v3167 = vadd.f32 0.0, %v3166
        %3168 = vmatprep.mubr.f32.mxu0 0.0
        %3169 = vmatmul.mubr.f32.gmra.mxu0 %v2932
        %v3170 = vpop.f32.mrf.mxu0
        %v3171 = vadd.f32 0.0, %v3170
        %v3172 = vpop.f32.mrf.mxu0
        %v3173 = vadd.f32 0.0, %v3172
        %3174 = vmatprep.mubr.f32.mxu0 0.0
        %3175 = vmatmul.mubr.f32.gmra.mxu0 %v2937
        %v3176 = vpop.f32.mrf.mxu0
        %v3177 = vadd.f32 0.0, %v3176
        %v3178 = vpop.f32.mrf.mxu0
        %v3179 = vadd.f32 0.0, %v3178
        %3180 = vmatprep.mubr.f32.mxu0 0.0
        %3181 = vmatmul.mubr.f32.gmra.mxu0 %v2942
        %v3182 = vpop.f32.mrf.mxu0
        %v3183 = vadd.f32 0.0, %v3182
        %v3184 = vpop.f32.mrf.mxu0
        %v3185 = vadd.f32 0.0, %v3184
        %3186 = vmatprep.mubr.f32.mxu0 0.0
        %3187 = vmatmul.mubr.f32.gmra.mxu0 %v2947
        %v3188 = vpop.f32.mrf.mxu0
        %v3189 = vadd.f32 0.0, %v3188
        %v3190 = vpop.f32.mrf.mxu0
        %v3191 = vadd.f32 0.0, %v3190
        %3192 = vmatprep.mubr.f32.mxu0 0.0
        %3193 = vmatmul.mubr.f32.gmra.mxu0 %v2952
        %v3194 = vpop.f32.mrf.mxu0
        %v3195 = vadd.f32 0.0, %v3194
        %v3196 = vpop.f32.mrf.mxu0
        %v3197 = vadd.f32 0.0, %v3196
        %3198 = vmatprep.mubr.f32.mxu0 0.0
        %3199 = vmatmul.mubr.f32.gmra.mxu0 %v2957
        %v3200 = vpop.f32.mrf.mxu0
        %v3201 = vadd.f32 0.0, %v3200
        %v3202 = vpop.f32.mrf.mxu0
        %v3203 = vadd.f32 0.0, %v3202
        %3204 = vmatprep.mubr.f32.mxu0 0.0
        %3205 = vmatmul.mubr.f32.gmra.mxu0 %v2962
        %v3206 = vpop.f32.mrf.mxu0
        %v3207 = vadd.f32 0.0, %v3206
        %v3208 = vpop.f32.mrf.mxu0
        %v3209 = vadd.f32 0.0, %v3208
        %3210 = vmatprep.mubr.f32.mxu0 0.0
        %3211 = vmatmul.mubr.f32.gmra.mxu0 %v2967
        %v3212 = vpop.f32.mrf.mxu0
        %v3213 = vadd.f32 0.0, %v3212
        %v3214 = vpop.f32.mrf.mxu0
        %v3215 = vadd.f32 0.0, %v3214
        %3216 = vmatprep.mubr.f32.mxu0 0.0
        %3217 = vmatmul.mubr.f32.gmra.mxu0 %v2972
        %v3218 = vpop.f32.mrf.mxu0
        %v3219 = vadd.f32 0.0, %v3218
        %v3220 = vpop.f32.mrf.mxu0
        %v3221 = vadd.f32 0.0, %v3220
        %3222 = vmatprep.mubr.f32.mxu0 0.0
        %3223 = vmatmul.mubr.f32.gmra.mxu0 %v2977
        %v3224 = vpop.f32.mrf.mxu0
        %v3225 = vadd.f32 0.0, %v3224
        %v3226 = vpop.f32.mrf.mxu0
        %v3227 = vadd.f32 0.0, %v3226
        %3228 = vmatprep.mubr.f32.mxu0 0.0
        %3229 = vmatmul.mubr.f32.gmra.mxu0 %v2982
        %v3230 = vpop.f32.mrf.mxu0
        %v3231 = vadd.f32 0.0, %v3230
        %v3232 = vpop.f32.mrf.mxu0
        %v3233 = vadd.f32 0.0, %v3232
        %3234 = vmatprep.mubr.f32.mxu0 0.0
        %3235 = vmatmul.mubr.f32.gmra.mxu0 %v2987
        %v3236 = vpop.f32.mrf.mxu0
        %v3237 = vadd.f32 0.0, %v3236
        %v3238 = vpop.f32.mrf.mxu0
        %v3239 = vadd.f32 0.0, %v3238
        %3240 = vmatprep.mubr.f32.mxu0 0.0
        %3241 = vmatmul.mubr.f32.gmra.mxu0 %v2992
        %v3242 = vpop.f32.mrf.mxu0
        %v3243 = vadd.f32 0.0, %v3242
        %v3244 = vpop.f32.mrf.mxu0
        %v3245 = vadd.f32 0.0, %v3244
        %3246 = vmatprep.mubr.f32.mxu0 0.0
        %3247 = vmatmul.mubr.f32.gmra.mxu0 %v2997
        %v3248 = vpop.f32.mrf.mxu0
        %v3249 = vadd.f32 0.0, %v3248
        %v3250 = vpop.f32.mrf.mxu0
        %v3251 = vadd.f32 0.0, %v3250
        %3252 = vmatprep.mubr.f32.mxu0 0.0
        %3253 = vmatmul.mubr.f32.gmra.mxu0 %v3002
        %v3254 = vpop.f32.mrf.mxu0
        %v3255 = vadd.f32 0.0, %v3254
        %v3256 = vpop.f32.mrf.mxu0
        %v3257 = vadd.f32 0.0, %v3256
        %3258 = vmatprep.mubr.f32.mxu0 0.0
        %3259 = vmatmul.mubr.f32.gmra.mxu0 %v3007
        %v3260 = vpop.f32.mrf.mxu0
        %v3261 = vadd.f32 0.0, %v3260
        %v3262 = vpop.f32.mrf.mxu0
        %v3263 = vadd.f32 0.0, %v3262
        %3264 = vmatprep.mubr.f32.mxu0 0.0
        %3265 = vmatmul.mubr.f32.gmra.mxu0 %v3012
        %v3266 = vpop.f32.mrf.mxu0
        %v3267 = vadd.f32 0.0, %v3266
        %v3268 = vpop.f32.mrf.mxu0
        %v3269 = vadd.f32 0.0, %v3268
        %3270 = vmatprep.mubr.f32.mxu0 0.0
        %3271 = vmatmul.mubr.f32.gmra.mxu0 %v3017
        %v3272 = vpop.f32.mrf.mxu0
        %v3273 = vadd.f32 0.0, %v3272
        %v3274 = vpop.f32.mrf.mxu0
        %v3275 = vadd.f32 0.0, %v3274
        %3276 = vdwg.mxu0
        %3277 = vmatprep.subr.mxu0 0.0
        %3278 = vmatpush1.msra.mxu0 %v195
        %3279 = vmatprep.subr.mxu0 0.0
        %3280 = vmatpush1.msra.mxu0 %v194
        %3281 = vmatprep.subr.mxu0 0.0
        %3282 = vmatpush1.msra.mxu0 %v193
        %3283 = vmatprep.subr.mxu0 0.0
        %3284 = vmatpush1.msra.mxu0 %v192
        %3285 = vmatprep.subr.mxu0 0.0
        %3286 = vmatpush1.msra.mxu0 %v191
        %3287 = vmatprep.subr.mxu0 0.0
        %3288 = vmatpush1.msra.mxu0 %v190
        %3289 = vmatprep.subr.mxu0 0.0
        %3290 = vmatpush1.msra.mxu0 %v189
        %3291 = vmatprep.subr.mxu0 0.0
        %3292 = vmatpush1.msra.mxu0 %v188
        %3293 = vmatprep.subr.mxu0 0.0
        %3294 = vmatpush1.msra.mxu0 %v187
        %3295 = vmatprep.subr.mxu0 0.0
        %3296 = vmatpush1.msra.mxu0 %v186
        %3297 = vmatprep.subr.mxu0 0.0
        %3298 = vmatpush1.msra.mxu0 %v185
        %3299 = vmatprep.subr.mxu0 0.0
        %3300 = vmatpush1.msra.mxu0 %v184
        %3301 = vmatprep.subr.mxu0 0.0
        %3302 = vmatpush1.msra.mxu0 %v183
        %3303 = vmatprep.subr.mxu0 0.0
        %3304 = vmatpush1.msra.mxu0 %v182
        %3305 = vmatprep.subr.mxu0 0.0
        %3306 = vmatpush1.msra.mxu0 %v181
        %3307 = vmatprep.subr.mxu0 0.0
        %3308 = vmatpush1.msra.mxu0 %v180
        %3309 = vmatprep.subr.mxu0 0.0
        %3310 = vmatpush2.msra.mxu0 0.0
        %3311 = vmatprep.subr.mxu0 0.0
        %3312 = vmatpush2.msra.mxu0 0.0
        %3313 = vmatprep.subr.mxu0 0.0
        %3314 = vmatpush2.msra.mxu0 0.0
        %3315 = vmatprep.subr.mxu0 0.0
        %3316 = vmatpush2.msra.mxu0 0.0
        %3317 = vmatprep.subr.mxu0 0.0
        %3318 = vmatpush2.msra.mxu0 0.0
        %3319 = vmatprep.subr.mxu0 0.0
        %3320 = vmatpush2.msra.mxu0 0.0
        %3321 = vmatprep.subr.mxu0 0.0
        %3322 = vmatpush2.msra.mxu0 0.0
        %3323 = vmatprep.subr.mxu0 0.0
        %3324 = vmatpush2.msra.mxu0 0.0
        %3325 = vmatprep.subr.mxu0 0.0
        %3326 = vmatpush2.msra.mxu0 0.0
        %3327 = vmatprep.subr.mxu0 0.0
        %3328 = vmatpush2.msra.mxu0 0.0
        %3329 = vmatprep.subr.mxu0 0.0
        %3330 = vmatpush2.msra.mxu0 0.0
        %3331 = vmatprep.subr.mxu0 0.0
        %3332 = vmatpush2.msra.mxu0 0.0
        %3333 = vmatprep.subr.mxu0 0.0
        %3334 = vmatpush2.msra.mxu0 0.0
        %3335 = vmatprep.subr.mxu0 0.0
        %3336 = vmatpush2.msra.mxu0 0.0
        %3337 = vmatprep.subr.mxu0 0.0
        %3338 = vmatpush2.msra.mxu0 0.0
        %3339 = vmatprep.subr.mxu0 0.0
        %3340 = vmatpush2.msra.mxu0 0.0
        %3341 = vmatprep.mubr.f32.mxu0 0.0
        %3342 = vmatmul.mubr.f32.gmra.mxu0 %v1368
        %v3343 = vpop.f32.mrf.mxu0
        %v3344 = vadd.f32 0.0, %v3343
        %v3345 = vpop.f32.mrf.mxu0
        %3346 = vmatprep.mubr.f32.mxu0 0.0
        %3347 = vmatmul.mubr.f32.gmra.mxu0 %v1369
        %v3348 = vpop.f32.mrf.mxu0
        %v3349 = vadd.f32 0.0, %v3348
        %v3350 = vpop.f32.mrf.mxu0
        %3351 = vmatprep.mubr.f32.mxu0 0.0
        %3352 = vmatmul.mubr.f32.gmra.mxu0 %v1370
        %v3353 = vpop.f32.mrf.mxu0
        %v3354 = vadd.f32 0.0, %v3353
        %v3355 = vpop.f32.mrf.mxu0
        %3356 = vmatprep.mubr.f32.mxu0 0.0
        %3357 = vmatmul.mubr.f32.gmra.mxu0 %v1371
        %v3358 = vpop.f32.mrf.mxu0
        %v3359 = vadd.f32 0.0, %v3358
        %v3360 = vpop.f32.mrf.mxu0
        %3361 = vmatprep.mubr.f32.mxu0 0.0
        %3362 = vmatmul.mubr.f32.gmra.mxu0 %v1372
        %v3363 = vpop.f32.mrf.mxu0
        %v3364 = vadd.f32 0.0, %v3363
        %v3365 = vpop.f32.mrf.mxu0
        %3366 = vmatprep.mubr.f32.mxu0 0.0
        %3367 = vmatmul.mubr.f32.gmra.mxu0 %v1373
        %v3368 = vpop.f32.mrf.mxu0
        %v3369 = vadd.f32 0.0, %v3368
        %v3370 = vpop.f32.mrf.mxu0
        %3371 = vmatprep.mubr.f32.mxu0 0.0
        %3372 = vmatmul.mubr.f32.gmra.mxu0 %v1374
        %v3373 = vpop.f32.mrf.mxu0
        %v3374 = vadd.f32 0.0, %v3373
        %v3375 = vpop.f32.mrf.mxu0
        %3376 = vmatprep.mubr.f32.mxu0 0.0
        %3377 = vmatmul.mubr.f32.gmra.mxu0 %v1375
        %v3378 = vpop.f32.mrf.mxu0
        %v3379 = vadd.f32 0.0, %v3378
        %v3380 = vpop.f32.mrf.mxu0
        %3381 = vmatprep.mubr.f32.mxu0 0.0
        %3382 = vmatmul.mubr.f32.gmra.mxu0 %v1376
        %v3383 = vpop.f32.mrf.mxu0
        %v3384 = vadd.f32 0.0, %v3383
        %v3385 = vpop.f32.mrf.mxu0
        %3386 = vmatprep.mubr.f32.mxu0 0.0
        %3387 = vmatmul.mubr.f32.gmra.mxu0 %v1377
        %v3388 = vpop.f32.mrf.mxu0
        %v3389 = vadd.f32 0.0, %v3388
        %v3390 = vpop.f32.mrf.mxu0
        %3391 = vmatprep.mubr.f32.mxu0 0.0
        %3392 = vmatmul.mubr.f32.gmra.mxu0 %v1378
        %v3393 = vpop.f32.mrf.mxu0
        %v3394 = vadd.f32 0.0, %v3393
        %v3395 = vpop.f32.mrf.mxu0
        %3396 = vmatprep.mubr.f32.mxu0 0.0
        %3397 = vmatmul.mubr.f32.gmra.mxu0 %v1379
        %v3398 = vpop.f32.mrf.mxu0
        %v3399 = vadd.f32 0.0, %v3398
        %v3400 = vpop.f32.mrf.mxu0
        %3401 = vmatprep.mubr.f32.mxu0 0.0
        %3402 = vmatmul.mubr.f32.gmra.mxu0 %v1380
        %v3403 = vpop.f32.mrf.mxu0
        %v3404 = vadd.f32 0.0, %v3403
        %v3405 = vpop.f32.mrf.mxu0
        %3406 = vmatprep.mubr.f32.mxu0 0.0
        %3407 = vmatmul.mubr.f32.gmra.mxu0 %v1381
        %v3408 = vpop.f32.mrf.mxu0
        %v3409 = vadd.f32 0.0, %v3408
        %v3410 = vpop.f32.mrf.mxu0
        %3411 = vmatprep.mubr.f32.mxu0 0.0
        %3412 = vmatmul.mubr.f32.gmra.mxu0 %v1382
        %v3413 = vpop.f32.mrf.mxu0
        %v3414 = vadd.f32 0.0, %v3413
        %v3415 = vpop.f32.mrf.mxu0
        %3416 = vmatprep.mubr.f32.mxu0 0.0
        %3417 = vmatmul.mubr.f32.gmra.mxu0 %v1383
        %v3418 = vpop.f32.mrf.mxu0
        %v3419 = vadd.f32 0.0, %v3418
        %v3420 = vpop.f32.mrf.mxu0
        %3421 = vmatprep.mubr.f32.mxu0 0.0
        %3422 = vmatmul.mubr.f32.gmra.mxu0 %v1384
        %v3423 = vpop.f32.mrf.mxu0
        %v3424 = vadd.f32 0.0, %v3423
        %v3425 = vpop.f32.mrf.mxu0
        %3426 = vmatprep.mubr.f32.mxu0 0.0
        %3427 = vmatmul.mubr.f32.gmra.mxu0 %v1385
        %v3428 = vpop.f32.mrf.mxu0
        %v3429 = vadd.f32 0.0, %v3428
        %v3430 = vpop.f32.mrf.mxu0
        %3431 = vmatprep.mubr.f32.mxu0 0.0
        %3432 = vmatmul.mubr.f32.gmra.mxu0 %v1386
        %v3433 = vpop.f32.mrf.mxu0
        %v3434 = vadd.f32 0.0, %v3433
        %v3435 = vpop.f32.mrf.mxu0
        %3436 = vmatprep.mubr.f32.mxu0 0.0
        %3437 = vmatmul.mubr.f32.gmra.mxu0 %v1387
        %v3438 = vpop.f32.mrf.mxu0
        %v3439 = vadd.f32 0.0, %v3438
        %v3440 = vpop.f32.mrf.mxu0
        %3441 = vmatprep.mubr.f32.mxu0 0.0
        %3442 = vmatmul.mubr.f32.gmra.mxu0 %v1388
        %v3443 = vpop.f32.mrf.mxu0
        %v3444 = vadd.f32 0.0, %v3443
        %v3445 = vpop.f32.mrf.mxu0
        %3446 = vmatprep.mubr.f32.mxu0 0.0
        %3447 = vmatmul.mubr.f32.gmra.mxu0 %v1389
        %v3448 = vpop.f32.mrf.mxu0
        %v3449 = vadd.f32 0.0, %v3448
        %v3450 = vpop.f32.mrf.mxu0
        %3451 = vmatprep.mubr.f32.mxu0 0.0
        %3452 = vmatmul.mubr.f32.gmra.mxu0 %v1390
        %v3453 = vpop.f32.mrf.mxu0
        %v3454 = vadd.f32 0.0, %v3453
        %v3455 = vpop.f32.mrf.mxu0
        %3456 = vmatprep.mubr.f32.mxu0 0.0
        %3457 = vmatmul.mubr.f32.gmra.mxu0 %v1391
        %v3458 = vpop.f32.mrf.mxu0
        %v3459 = vadd.f32 0.0, %v3458
        %v3460 = vpop.f32.mrf.mxu0
        %3461 = vmatprep.mubr.f32.mxu0 0.0
        %3462 = vmatmul.mubr.f32.gmra.mxu0 %v1392
        %v3463 = vpop.f32.mrf.mxu0
        %v3464 = vadd.f32 0.0, %v3463
        %v3465 = vpop.f32.mrf.mxu0
        %3466 = vmatprep.mubr.f32.mxu0 0.0
        %3467 = vmatmul.mubr.f32.gmra.mxu0 %v1393
        %v3468 = vpop.f32.mrf.mxu0
        %v3469 = vadd.f32 0.0, %v3468
        %v3470 = vpop.f32.mrf.mxu0
        %3471 = vmatprep.mubr.f32.mxu0 0.0
        %3472 = vmatmul.mubr.f32.gmra.mxu0 %v1394
        %v3473 = vpop.f32.mrf.mxu0
        %v3474 = vadd.f32 0.0, %v3473
        %v3475 = vpop.f32.mrf.mxu0
        %3476 = vmatprep.mubr.f32.mxu0 0.0
        %3477 = vmatmul.mubr.f32.gmra.mxu0 %v1395
        %v3478 = vpop.f32.mrf.mxu0
        %v3479 = vadd.f32 0.0, %v3478
        %v3480 = vpop.f32.mrf.mxu0
        %3481 = vmatprep.mubr.f32.mxu0 0.0
        %3482 = vmatmul.mubr.f32.gmra.mxu0 %v1396
        %v3483 = vpop.f32.mrf.mxu0
        %v3484 = vadd.f32 0.0, %v3483
        %v3485 = vpop.f32.mrf.mxu0
        %3486 = vmatprep.mubr.f32.mxu0 0.0
        %3487 = vmatmul.mubr.f32.gmra.mxu0 %v1397
        %v3488 = vpop.f32.mrf.mxu0
        %v3489 = vadd.f32 0.0, %v3488
        %v3490 = vpop.f32.mrf.mxu0
        %3491 = vmatprep.mubr.f32.mxu0 0.0
        %3492 = vmatmul.mubr.f32.gmra.mxu0 %v1398
        %v3493 = vpop.f32.mrf.mxu0
        %v3494 = vadd.f32 0.0, %v3493
        %v3495 = vpop.f32.mrf.mxu0
        %3496 = vmatprep.mubr.f32.mxu0 0.0
        %3497 = vmatmul.mubr.f32.gmra.mxu0 %v1399
        %v3498 = vpop.f32.mrf.mxu0
        %v3499 = vadd.f32 0.0, %v3498
        %v3500 = vpop.f32.mrf.mxu0
        %3501 = vdwg.mxu0
        %3502 = vmatprep.subr.mxu0 %v2794
        %3503 = vmatpush1.msra.mxu0 %v2793
        %3504 = vmatprep.subr.mxu0 %v2792
        %3505 = vmatpush1.msra.mxu0 %v2791
        %3506 = vmatprep.subr.mxu0 %v2790
        %3507 = vmatpush1.msra.mxu0 %v2789
        %3508 = vmatprep.subr.mxu0 %v2788
        %3509 = vmatpush1.msra.mxu0 %v2787
        %3510 = vmatprep.subr.mxu0 %v2786
        %3511 = vmatpush1.msra.mxu0 %v2785
        %3512 = vmatprep.subr.mxu0 %v2784
        %3513 = vmatpush1.msra.mxu0 %v2783
        %3514 = vmatprep.subr.mxu0 %v2782
        %3515 = vmatpush1.msra.mxu0 %v2781
        %3516 = vmatprep.subr.mxu0 %v2780
        %3517 = vmatpush1.msra.mxu0 %v2779
        %3518 = vmatprep.subr.mxu0 %v2778
        %3519 = vmatpush1.msra.mxu0 %v2777
        %3520 = vmatprep.subr.mxu0 %v2776
        %3521 = vmatpush1.msra.mxu0 %v2775
        %3522 = vmatprep.subr.mxu0 %v2774
        %3523 = vmatpush1.msra.mxu0 %v2773
        %3524 = vmatprep.subr.mxu0 %v2772
        %3525 = vmatpush1.msra.mxu0 %v2771
        %3526 = vmatprep.subr.mxu0 %v2770
        %3527 = vmatpush1.msra.mxu0 %v2769
        %3528 = vmatprep.subr.mxu0 %v2768
        %3529 = vmatpush1.msra.mxu0 %v2767
        %3530 = vmatprep.subr.mxu0 %v2766
        %3531 = vmatpush1.msra.mxu0 %v2765
        %3532 = vmatprep.subr.mxu0 %v2764
        %3533 = vmatpush1.msra.mxu0 %v2763
        %3534 = vmatprep.subr.mxu0 0.0
        %3535 = vmatpush2.msra.mxu0 0.0
        %3536 = vmatprep.subr.mxu0 0.0
        %3537 = vmatpush2.msra.mxu0 0.0
        %3538 = vmatprep.subr.mxu0 0.0
        %3539 = vmatpush2.msra.mxu0 0.0
        %3540 = vmatprep.subr.mxu0 0.0
        %3541 = vmatpush2.msra.mxu0 0.0
        %3542 = vmatprep.subr.mxu0 0.0
        %3543 = vmatpush2.msra.mxu0 0.0
        %3544 = vmatprep.subr.mxu0 0.0
        %3545 = vmatpush2.msra.mxu0 0.0
        %3546 = vmatprep.subr.mxu0 0.0
        %3547 = vmatpush2.msra.mxu0 0.0
        %3548 = vmatprep.subr.mxu0 0.0
        %3549 = vmatpush2.msra.mxu0 0.0
        %3550 = vmatprep.subr.mxu0 0.0
        %3551 = vmatpush2.msra.mxu0 0.0
        %3552 = vmatprep.subr.mxu0 0.0
        %3553 = vmatpush2.msra.mxu0 0.0
        %3554 = vmatprep.subr.mxu0 0.0
        %3555 = vmatpush2.msra.mxu0 0.0
        %3556 = vmatprep.subr.mxu0 0.0
        %3557 = vmatpush2.msra.mxu0 0.0
        %3558 = vmatprep.subr.mxu0 0.0
        %3559 = vmatpush2.msra.mxu0 0.0
        %3560 = vmatprep.subr.mxu0 0.0
        %3561 = vmatpush2.msra.mxu0 0.0
        %3562 = vmatprep.subr.mxu0 0.0
        %3563 = vmatpush2.msra.mxu0 0.0
        %3564 = vmatprep.subr.mxu0 0.0
        %3565 = vmatpush2.msra.mxu0 0.0
        %3566 = vmatprep.mubr.f32.mxu0 0.0
        %3567 = vmatmul.mubr.f32.gmra.mxu0 %v3344
        %v3568 = vpop.f32.mrf.mxu0
        %v3569 = vadd.f32 0.0, %v3568
        %v3570 = vpop.f32.mrf.mxu0
        %v3571 = vadd.f32 0.0, %v3570
        %3572 = vmatprep.mubr.f32.mxu0 0.0
        %3573 = vmatmul.mubr.f32.gmra.mxu0 %v3349
        %v3574 = vpop.f32.mrf.mxu0
        %v3575 = vadd.f32 0.0, %v3574
        %v3576 = vpop.f32.mrf.mxu0
        %v3577 = vadd.f32 0.0, %v3576
        %3578 = vmatprep.mubr.f32.mxu0 0.0
        %3579 = vmatmul.mubr.f32.gmra.mxu0 %v3354
        %v3580 = vpop.f32.mrf.mxu0
        %v3581 = vadd.f32 0.0, %v3580
        %v3582 = vpop.f32.mrf.mxu0
        %v3583 = vadd.f32 0.0, %v3582
        %3584 = vmatprep.mubr.f32.mxu0 0.0
        %3585 = vmatmul.mubr.f32.gmra.mxu0 %v3359
        %v3586 = vpop.f32.mrf.mxu0
        %v3587 = vadd.f32 0.0, %v3586
        %v3588 = vpop.f32.mrf.mxu0
        %v3589 = vadd.f32 0.0, %v3588
        %3590 = vmatprep.mubr.f32.mxu0 0.0
        %3591 = vmatmul.mubr.f32.gmra.mxu0 %v3364
        %v3592 = vpop.f32.mrf.mxu0
        %v3593 = vadd.f32 0.0, %v3592
        %v3594 = vpop.f32.mrf.mxu0
        %v3595 = vadd.f32 0.0, %v3594
        %3596 = vmatprep.mubr.f32.mxu0 0.0
        %3597 = vmatmul.mubr.f32.gmra.mxu0 %v3369
        %v3598 = vpop.f32.mrf.mxu0
        %v3599 = vadd.f32 0.0, %v3598
        %v3600 = vpop.f32.mrf.mxu0
        %v3601 = vadd.f32 0.0, %v3600
        %3602 = vmatprep.mubr.f32.mxu0 0.0
        %3603 = vmatmul.mubr.f32.gmra.mxu0 %v3374
        %v3604 = vpop.f32.mrf.mxu0
        %v3605 = vadd.f32 0.0, %v3604
        %v3606 = vpop.f32.mrf.mxu0
        %v3607 = vadd.f32 0.0, %v3606
        %3608 = vmatprep.mubr.f32.mxu0 0.0
        %3609 = vmatmul.mubr.f32.gmra.mxu0 %v3379
        %v3610 = vpop.f32.mrf.mxu0
        %v3611 = vadd.f32 0.0, %v3610
        %v3612 = vpop.f32.mrf.mxu0
        %v3613 = vadd.f32 0.0, %v3612
        %3614 = vmatprep.mubr.f32.mxu0 0.0
        %3615 = vmatmul.mubr.f32.gmra.mxu0 %v3384
        %v3616 = vpop.f32.mrf.mxu0
        %v3617 = vadd.f32 0.0, %v3616
        %v3618 = vpop.f32.mrf.mxu0
        %v3619 = vadd.f32 0.0, %v3618
        %3620 = vmatprep.mubr.f32.mxu0 0.0
        %3621 = vmatmul.mubr.f32.gmra.mxu0 %v3389
        %v3622 = vpop.f32.mrf.mxu0
        %v3623 = vadd.f32 0.0, %v3622
        %v3624 = vpop.f32.mrf.mxu0
        %v3625 = vadd.f32 0.0, %v3624
        %3626 = vmatprep.mubr.f32.mxu0 0.0
        %3627 = vmatmul.mubr.f32.gmra.mxu0 %v3394
        %v3628 = vpop.f32.mrf.mxu0
        %v3629 = vadd.f32 0.0, %v3628
        %v3630 = vpop.f32.mrf.mxu0
        %v3631 = vadd.f32 0.0, %v3630
        %3632 = vmatprep.mubr.f32.mxu0 0.0
        %3633 = vmatmul.mubr.f32.gmra.mxu0 %v3399
        %v3634 = vpop.f32.mrf.mxu0
        %v3635 = vadd.f32 0.0, %v3634
        %v3636 = vpop.f32.mrf.mxu0
        %v3637 = vadd.f32 0.0, %v3636
        %3638 = vmatprep.mubr.f32.mxu0 0.0
        %3639 = vmatmul.mubr.f32.gmra.mxu0 %v3404
        %v3640 = vpop.f32.mrf.mxu0
        %v3641 = vadd.f32 0.0, %v3640
        %v3642 = vpop.f32.mrf.mxu0
        %v3643 = vadd.f32 0.0, %v3642
        %3644 = vmatprep.mubr.f32.mxu0 0.0
        %3645 = vmatmul.mubr.f32.gmra.mxu0 %v3409
        %v3646 = vpop.f32.mrf.mxu0
        %v3647 = vadd.f32 0.0, %v3646
        %v3648 = vpop.f32.mrf.mxu0
        %v3649 = vadd.f32 0.0, %v3648
        %3650 = vmatprep.mubr.f32.mxu0 0.0
        %3651 = vmatmul.mubr.f32.gmra.mxu0 %v3414
        %v3652 = vpop.f32.mrf.mxu0
        %v3653 = vadd.f32 0.0, %v3652
        %v3654 = vpop.f32.mrf.mxu0
        %v3655 = vadd.f32 0.0, %v3654
        %3656 = vmatprep.mubr.f32.mxu0 0.0
        %3657 = vmatmul.mubr.f32.gmra.mxu0 %v3419
        %v3658 = vpop.f32.mrf.mxu0
        %v3659 = vadd.f32 0.0, %v3658
        %v3660 = vpop.f32.mrf.mxu0
        %v3661 = vadd.f32 0.0, %v3660
        %3662 = vmatprep.mubr.f32.mxu0 0.0
        %3663 = vmatmul.mubr.f32.gmra.mxu0 %v3424
        %v3664 = vpop.f32.mrf.mxu0
        %v3665 = vadd.f32 0.0, %v3664
        %v3666 = vpop.f32.mrf.mxu0
        %v3667 = vadd.f32 0.0, %v3666
        %3668 = vmatprep.mubr.f32.mxu0 0.0
        %3669 = vmatmul.mubr.f32.gmra.mxu0 %v3429
        %v3670 = vpop.f32.mrf.mxu0
        %v3671 = vadd.f32 0.0, %v3670
        %v3672 = vpop.f32.mrf.mxu0
        %v3673 = vadd.f32 0.0, %v3672
        %3674 = vmatprep.mubr.f32.mxu0 0.0
        %3675 = vmatmul.mubr.f32.gmra.mxu0 %v3434
        %v3676 = vpop.f32.mrf.mxu0
        %v3677 = vadd.f32 0.0, %v3676
        %v3678 = vpop.f32.mrf.mxu0
        %v3679 = vadd.f32 0.0, %v3678
        %3680 = vmatprep.mubr.f32.mxu0 0.0
        %3681 = vmatmul.mubr.f32.gmra.mxu0 %v3439
        %v3682 = vpop.f32.mrf.mxu0
        %v3683 = vadd.f32 0.0, %v3682
        %v3684 = vpop.f32.mrf.mxu0
        %v3685 = vadd.f32 0.0, %v3684
        %3686 = vmatprep.mubr.f32.mxu0 0.0
        %3687 = vmatmul.mubr.f32.gmra.mxu0 %v3444
        %v3688 = vpop.f32.mrf.mxu0
        %v3689 = vadd.f32 0.0, %v3688
        %v3690 = vpop.f32.mrf.mxu0
        %v3691 = vadd.f32 0.0, %v3690
        %3692 = vmatprep.mubr.f32.mxu0 0.0
        %3693 = vmatmul.mubr.f32.gmra.mxu0 %v3449
        %v3694 = vpop.f32.mrf.mxu0
        %v3695 = vadd.f32 0.0, %v3694
        %v3696 = vpop.f32.mrf.mxu0
        %v3697 = vadd.f32 0.0, %v3696
        %3698 = vmatprep.mubr.f32.mxu0 0.0
        %3699 = vmatmul.mubr.f32.gmra.mxu0 %v3454
        %v3700 = vpop.f32.mrf.mxu0
        %v3701 = vadd.f32 0.0, %v3700
        %v3702 = vpop.f32.mrf.mxu0
        %v3703 = vadd.f32 0.0, %v3702
        %3704 = vmatprep.mubr.f32.mxu0 0.0
        %3705 = vmatmul.mubr.f32.gmra.mxu0 %v3459
        %v3706 = vpop.f32.mrf.mxu0
        %v3707 = vadd.f32 0.0, %v3706
        %v3708 = vpop.f32.mrf.mxu0
        %v3709 = vadd.f32 0.0, %v3708
        %3710 = vmatprep.mubr.f32.mxu0 0.0
        %3711 = vmatmul.mubr.f32.gmra.mxu0 %v3464
        %v3712 = vpop.f32.mrf.mxu0
        %v3713 = vadd.f32 0.0, %v3712
        %v3714 = vpop.f32.mrf.mxu0
        %v3715 = vadd.f32 0.0, %v3714
        %3716 = vmatprep.mubr.f32.mxu0 0.0
        %3717 = vmatmul.mubr.f32.gmra.mxu0 %v3469
        %v3718 = vpop.f32.mrf.mxu0
        %v3719 = vadd.f32 0.0, %v3718
        %v3720 = vpop.f32.mrf.mxu0
        %v3721 = vadd.f32 0.0, %v3720
        %3722 = vmatprep.mubr.f32.mxu0 0.0
        %3723 = vmatmul.mubr.f32.gmra.mxu0 %v3474
        %v3724 = vpop.f32.mrf.mxu0
        %v3725 = vadd.f32 0.0, %v3724
        %v3726 = vpop.f32.mrf.mxu0
        %v3727 = vadd.f32 0.0, %v3726
        %3728 = vmatprep.mubr.f32.mxu0 0.0
        %3729 = vmatmul.mubr.f32.gmra.mxu0 %v3479
        %v3730 = vpop.f32.mrf.mxu0
        %v3731 = vadd.f32 0.0, %v3730
        %v3732 = vpop.f32.mrf.mxu0
        %v3733 = vadd.f32 0.0, %v3732
        %3734 = vmatprep.mubr.f32.mxu0 0.0
        %3735 = vmatmul.mubr.f32.gmra.mxu0 %v3484
        %v3736 = vpop.f32.mrf.mxu0
        %v3737 = vadd.f32 0.0, %v3736
        %v3738 = vpop.f32.mrf.mxu0
        %v3739 = vadd.f32 0.0, %v3738
        %3740 = vmatprep.mubr.f32.mxu0 0.0
        %3741 = vmatmul.mubr.f32.gmra.mxu0 %v3489
        %v3742 = vpop.f32.mrf.mxu0
        %v3743 = vadd.f32 0.0, %v3742
        %v3744 = vpop.f32.mrf.mxu0
        %v3745 = vadd.f32 0.0, %v3744
        %3746 = vmatprep.mubr.f32.mxu0 0.0
        %3747 = vmatmul.mubr.f32.gmra.mxu0 %v3494
        %v3748 = vpop.f32.mrf.mxu0
        %v3749 = vadd.f32 0.0, %v3748
        %v3750 = vpop.f32.mrf.mxu0
        %v3751 = vadd.f32 0.0, %v3750
        %3752 = vmatprep.mubr.f32.mxu0 0.0
        %3753 = vmatmul.mubr.f32.gmra.mxu0 %v3499
        %v3754 = vpop.f32.mrf.mxu0
        %v3755 = vadd.f32 0.0, %v3754
        %v3756 = vpop.f32.mrf.mxu0
        %v3757 = vadd.f32 0.0, %v3756
        %3758 = vdwg.mxu0
        %v3759 = vmul.f32 %v3087, %v3569
        %v3760 = vmul.f32 %v3089, %v3571
        %v3761 = vmul.f32 %v3093, %v3575
        %v3762 = vmul.f32 %v3095, %v3577
        %v3763 = vmul.f32 %v3099, %v3581
        %v3764 = vmul.f32 %v3101, %v3583
        %v3765 = vmul.f32 %v3105, %v3587
        %v3766 = vmul.f32 %v3107, %v3589
        %v3767 = vmul.f32 %v3111, %v3593
        %v3768 = vmul.f32 %v3113, %v3595
        %v3769 = vmul.f32 %v3117, %v3599
        %v3770 = vmul.f32 %v3119, %v3601
        %v3771 = vmul.f32 %v3123, %v3605
        %v3772 = vmul.f32 %v3125, %v3607
        %v3773 = vmul.f32 %v3129, %v3611
        %v3774 = vmul.f32 %v3131, %v3613
        %v3775 = vmul.f32 %v3135, %v3617
        %v3776 = vmul.f32 %v3137, %v3619
        %v3777 = vmul.f32 %v3141, %v3623
        %v3778 = vmul.f32 %v3143, %v3625
        %v3779 = vmul.f32 %v3147, %v3629
        %v3780 = vmul.f32 %v3149, %v3631
        %v3781 = vmul.f32 %v3153, %v3635
        %v3782 = vmul.f32 %v3155, %v3637
        %v3783 = vmul.f32 %v3159, %v3641
        %v3784 = vmul.f32 %v3161, %v3643
        %v3785 = vmul.f32 %v3165, %v3647
        %v3786 = vmul.f32 %v3167, %v3649
        %v3787 = vmul.f32 %v3171, %v3653
        %v3788 = vmul.f32 %v3173, %v3655
        %v3789 = vmul.f32 %v3177, %v3659
        %v3790 = vmul.f32 %v3179, %v3661
        %v3791 = vmul.f32 %v3183, %v3665
        %v3792 = vmul.f32 %v3185, %v3667
        %v3793 = vmul.f32 %v3189, %v3671
        %v3794 = vmul.f32 %v3191, %v3673
        %v3795 = vmul.f32 %v3195, %v3677
        %v3796 = vmul.f32 %v3197, %v3679
        %v3797 = vmul.f32 %v3201, %v3683
        %v3798 = vmul.f32 %v3203, %v3685
        %v3799 = vmul.f32 %v3207, %v3689
        %v3800 = vmul.f32 %v3209, %v3691
        %v3801 = vmul.f32 %v3213, %v3695
        %v3802 = vmul.f32 %v3215, %v3697
        %v3803 = vmul.f32 %v3219, %v3701
        %v3804 = vmul.f32 %v3221, %v3703
        %v3805 = vmul.f32 %v3225, %v3707
        %v3806 = vmul.f32 %v3227, %v3709
        %v3807 = vmul.f32 %v3231, %v3713
        %v3808 = vmul.f32 %v3233, %v3715
        %v3809 = vmul.f32 %v3237, %v3719
        %v3810 = vmul.f32 %v3239, %v3721
        %v3811 = vmul.f32 %v3243, %v3725
        %v3812 = vmul.f32 %v3245, %v3727
        %v3813 = vmul.f32 %v3249, %v3731
        %v3814 = vmul.f32 %v3251, %v3733
        %v3815 = vmul.f32 %v3255, %v3737
        %v3816 = vmul.f32 %v3257, %v3739
        %v3817 = vmul.f32 %v3261, %v3743
        %v3818 = vmul.f32 %v3263, %v3745
        %v3819 = vmul.f32 %v3267, %v3749
        %v3820 = vmul.f32 %v3269, %v3751
        %v3821 = vmul.f32 %v3273, %v3755
        %v3822 = vmul.f32 %v3275, %v3757
        %v3823 = vld [vmem:[%s157] sm:$0xff]
        %v3824 = vld [vmem:[%s157 + $0x8] sm:$0xff]
        %v3825 = vld [vmem:[%s157 + $0x10] sm:$0xff]
        %v3826 = vld [vmem:[%s157 + $0x18] sm:$0xff]
        %v3827 = vld [vmem:[%s157 + $0x20] sm:$0xff]
        %v3828 = vld [vmem:[%s157 + $0x28] sm:$0xff]
        %v3829 = vld [vmem:[%s157 + $0x30] sm:$0xff]
        %v3830 = vld [vmem:[%s157 + $0x38] sm:$0xff]
        %3831 = vmatprep.subr.mxu0 %v3790
        %3832 = vmatpush1.msra.mxu0 %v3789
        %3833 = vmatprep.subr.mxu0 %v3788
        %3834 = vmatpush1.msra.mxu0 %v3787
        %3835 = vmatprep.subr.mxu0 %v3786
        %3836 = vmatpush1.msra.mxu0 %v3785
        %3837 = vmatprep.subr.mxu0 %v3784
        %3838 = vmatpush1.msra.mxu0 %v3783
        %3839 = vmatprep.subr.mxu0 %v3782
        %3840 = vmatpush1.msra.mxu0 %v3781
        %3841 = vmatprep.subr.mxu0 %v3780
        %3842 = vmatpush1.msra.mxu0 %v3779
        %3843 = vmatprep.subr.mxu0 %v3778
        %3844 = vmatpush1.msra.mxu0 %v3777
        %3845 = vmatprep.subr.mxu0 %v3776
        %3846 = vmatpush1.msra.mxu0 %v3775
        %3847 = vmatprep.subr.mxu0 %v3774
        %3848 = vmatpush1.msra.mxu0 %v3773
        %3849 = vmatprep.subr.mxu0 %v3772
        %3850 = vmatpush1.msra.mxu0 %v3771
        %3851 = vmatprep.subr.mxu0 %v3770
        %3852 = vmatpush1.msra.mxu0 %v3769
        %3853 = vmatprep.subr.mxu0 %v3768
        %3854 = vmatpush1.msra.mxu0 %v3767
        %3855 = vmatprep.subr.mxu0 %v3766
        %3856 = vmatpush1.msra.mxu0 %v3765
        %3857 = vmatprep.subr.mxu0 %v3764
        %3858 = vmatpush1.msra.mxu0 %v3763
        %3859 = vmatprep.subr.mxu0 %v3762
        %3860 = vmatpush1.msra.mxu0 %v3761
        %3861 = vmatprep.subr.mxu0 %v3760
        %3862 = vmatpush1.msra.mxu0 %v3759
        %3863 = vmatprep.subr.mxu0 %v3822
        %3864 = vmatpush2.msra.mxu0 %v3821
        %3865 = vmatprep.subr.mxu0 %v3820
        %3866 = vmatpush2.msra.mxu0 %v3819
        %3867 = vmatprep.subr.mxu0 %v3818
        %3868 = vmatpush2.msra.mxu0 %v3817
        %3869 = vmatprep.subr.mxu0 %v3816
        %3870 = vmatpush2.msra.mxu0 %v3815
        %3871 = vmatprep.subr.mxu0 %v3814
        %3872 = vmatpush2.msra.mxu0 %v3813
        %3873 = vmatprep.subr.mxu0 %v3812
        %3874 = vmatpush2.msra.mxu0 %v3811
        %3875 = vmatprep.subr.mxu0 %v3810
        %3876 = vmatpush2.msra.mxu0 %v3809
        %3877 = vmatprep.subr.mxu0 %v3808
        %3878 = vmatpush2.msra.mxu0 %v3807
        %3879 = vmatprep.subr.mxu0 %v3806
        %3880 = vmatpush2.msra.mxu0 %v3805
        %3881 = vmatprep.subr.mxu0 %v3804
        %3882 = vmatpush2.msra.mxu0 %v3803
        %3883 = vmatprep.subr.mxu0 %v3802
        %3884 = vmatpush2.msra.mxu0 %v3801
        %3885 = vmatprep.subr.mxu0 %v3800
        %3886 = vmatpush2.msra.mxu0 %v3799
        %3887 = vmatprep.subr.mxu0 %v3798
        %3888 = vmatpush2.msra.mxu0 %v3797
        %3889 = vmatprep.subr.mxu0 %v3796
        %3890 = vmatpush2.msra.mxu0 %v3795
        %3891 = vmatprep.subr.mxu0 %v3794
        %3892 = vmatpush2.msra.mxu0 %v3793
        %3893 = vmatprep.subr.mxu0 %v3792
        %3894 = vmatpush2.msra.mxu0 %v3791
        %3895 = vmatprep.mubr.f32.mxu0 %v3824
        %3896 = vmatmul.mubr.f32.gmra.mxu0 %v3823
        %v3897 = vpop.f32.mrf.mxu0
        %v3898 = vadd.f32 0.0, %v3897
        %v3899 = vpop.f32.mrf.mxu0
        %v3900 = vadd.f32 0.0, %v3899
        %3901 = vmatprep.mubr.f32.mxu0 %v3826
        %3902 = vmatmul.mubr.f32.gmra.mxu0 %v3825
        %v3903 = vpop.f32.mrf.mxu0
        %v3904 = vadd.f32 0.0, %v3903
        %v3905 = vpop.f32.mrf.mxu0
        %v3906 = vadd.f32 0.0, %v3905
        %3907 = vmatprep.mubr.f32.mxu0 %v3828
        %3908 = vmatmul.mubr.f32.gmra.mxu0 %v3827
        %v3909 = vpop.f32.mrf.mxu0
        %v3910 = vadd.f32 0.0, %v3909
        %v3911 = vpop.f32.mrf.mxu0
        %v3912 = vadd.f32 0.0, %v3911
        %3913 = vmatprep.mubr.f32.mxu0 %v3830
        %3914 = vmatmul.mubr.f32.gmra.mxu0 %v3829
        %v3915 = vpop.f32.mrf.mxu0
        %v3916 = vadd.f32 0.0, %v3915
        %v3917 = vpop.f32.mrf.mxu0
        %v3918 = vadd.f32 0.0, %v3917
        %3919 = vdwg.mxu0
        %3920 = vst [vmem:[%s177] sm:$0xff] %v3898
        %3921 = vst [vmem:[%s177 + $0x8] sm:$0xff] %v3900
        %3922 = vst [vmem:[%s177 + $0x10] sm:$0xff] %v3904
        %3923 = vst [vmem:[%s177 + $0x18] sm:$0xff] %v3906
        %3924 = vst [vmem:[%s177 + $0x20] sm:$0xff] %v3910
        %3925 = vst [vmem:[%s177 + $0x28] sm:$0xff] %v3912
        %3926 = vst [vmem:[%s177 + $0x30] sm:$0xff] %v3916
        %3927 = vst [vmem:[%s177 + $0x38] sm:$0xff] %v3918
        %s3928 = sand.u32 %s75, 1
        %s3929 = scalar_lea.sflag [#allocation4], %s3928
        %s3930 = sand.u32 %s75, 1
        %s3931 = smul.addr %s3930, 64
        %s3932 = scalar_lea.vmem [#allocation7], %s3931
        // Predicated region
        $region37: #{tpu_custom_call.1} parent=27 // pred_check
          %p3933 = pneg %p85
        $region38: #{tpu_custom_call.1} parent=27 // pred_check_branch
          %3935 = sbr.rel (%p3933) target = $region40
        $region39: #{tpu_custom_call.1} parent=27 // pred_region
          %s3936 = smul.u32 4, %s20
          %s3938 = ssub.s32 1024, 1024
          %3939 = vsyncadd %s3929, %s3938
          %s3940 = smul.addr %s3936, 2
          %s3941 = smul.addr %s3940, 128
          %s3942 = scalar_lea.hbm %s2, %s3941
          %s3943 = sshll.u32 %s3932, 4
          %s3944 = int_to_ptr.vmem [resolvable:$true] %s3943
          %3949 = dma.vmem_to_hbm [thread:$0]  %s3944, 1024, %s3942, %s3929, 256, 256, 16
        $region40: #{tpu_custom_call.1} parent=27 // pred_fallthru
          _
      $region28: #{tpu_custom_call.1} parent=5 // pred_fallthru
        _
      %p3950 = scmp.le.s32.totalorder 2, %s15
      // Predicated region
      $region41: #{tpu_custom_call.1} parent=5 // pred_check
        %p3951 = pneg %p3950
      $region42: #{tpu_custom_call.1} parent=5 // pred_check_branch
        %3953 = sbr.rel (%p3951) target = $region44
      $region43: #{tpu_custom_call.1} parent=5 // pred_region
        %s3954 = ssub.s32 %s15, 2
        // Predicated region
        $region45: #{tpu_custom_call.1} parent=43 // pred_check
          %p3955 = pneg %p91
        $region46: #{tpu_custom_call.1} parent=43 // pred_check_branch
          %3957 = sbr.rel (%p3955) target = $region48
        $region47: #{tpu_custom_call.1} parent=43 // pred_region
          %s3958 = sand.u32 %s76, 1
          %s3959 = scalar_lea.sflag [#allocation4], %s3958
          %s3960 = sand.u32 %s76, 1
          %s3961 = smul.addr %s3960, 64
          %s3962 = scalar_lea.vmem [#allocation7], %s3961
          %3963 = dma.done %s3959, 1024
        $region48: #{tpu_custom_call.1} parent=43 // pred_fallthru
          _
      $region44: #{tpu_custom_call.1} parent=5 // pred_fallthru
        _
    $region6: #{tpu_custom_call.1} parent=1 // loop_footer
      %s19 = sadd.s32 1, %s15
    $region7: #{tpu_custom_call.1} parent=1 // loop_footer_branch
      %14 = sbr.rel target = $region3
    $region8: #{tpu_custom_call.1} parent=1 // loop_exit
      _
    %3964 = vsyncpa [#allocation3], 1
    %s3965 = scalar_lea.sflag [#allocation3], 1
    %3966 = vsyncpa %s3965, 1
    %3967 = vsyncpa [#allocation6], 1
    %s3968 = scalar_lea.sflag [#allocation6], 1
    %3969 = vsyncpa %s3968, 1
    %3970 = vsyncpa [#allocation4], 1
    %s3971 = scalar_lea.sflag [#allocation4], 1
    %3972 = vsyncpa %s3971, 1

</llo_original>
